<compile_context>
chip_gen: v7x
topology: tpu7x:2x2x1
jax: 0.10.0
libtpu: 0.0.40
codegen_flags: <defaults>
</compile_context>

<pallas_src>
import math
import functools

import jax
import jax.numpy as jnp
from jax import lax
from jax.experimental import pallas as pl
from jax.experimental.pallas import tpu as pltpu


def _round_up(x, m):
    return ((x + m - 1) // m) * m


def _pick_time_chunk(S, Bp, Gp, Hp, max_t=16, budget_bytes=48 << 20):
    """Largest time chunk <= max_t whose double-buffered VMEM footprint fits."""
    T = max(1, min(max_t, S))

    def est(t):
        return (2 * 2 * t * Bp * Gp * 2      # xp slabs (bf16, 2 dirs, 2 bufs)
                + 2 * 2 * t * Bp * Hp * 4    # output slabs (f32, 2 dirs, 2 bufs)
                + 2 * 2 * Hp * Gp * 2        # resident W_hh (bf16, 2 dirs)
                + 4 * Bp * Hp * 4)           # h/c scratch

    while T > 1 and est(T) > budget_bytes:
        T //= 2
    return T


# ----------------------------------------------------------------------------
# Pallas kernel: fused bidirectional LSTM recurrence over one time chunk.
# Input projections (x @ W_ih + b) are precomputed; the kernel only does the
# recurrent h @ W_hh matmul (bf16 MXU, f32 accumulate) + gate nonlinearities.
# h/c state for both directions lives in VMEM scratch across grid steps.
# ----------------------------------------------------------------------------
def _bilstm_chunk_kernel(H, xpf_ref, xpb_ref, whhf_ref, whhb_ref,
                         of_ref, ob_ref,
                         hf_scr, cf_scr, hb_scr, cb_scr):
    g = pl.program_id(0)
    T, Bp, Gp = xpf_ref.shape
    Hp = hf_scr.shape[1]

    @pl.when(g == 0)
    def _():
        hf_scr[...] = jnp.zeros_like(hf_scr)
        cf_scr[...] = jnp.zeros_like(cf_scr)
        hb_scr[...] = jnp.zeros_like(hb_scr)
        cb_scr[...] = jnp.zeros_like(cb_scr)

    # Lane mask selecting the candidate ('g') gate columns [2H, 3H) of the
    # packed gate vector.  Hoisted out of the unrolled loop (1 vreg).
    col = lax.broadcasted_iota(jnp.int32, (Bp, Gp), 1)
    g_mask = (col >= 2 * H) & (col < 3 * H)
    zpad = jnp.zeros((Bp, Hp - H), jnp.float32) if Hp != H else None

    def cell(xp, h, c, whh_ref):
        # gates = (x @ W_ih + b)  [precomputed, bf16 in HBM]  +  h @ W_hh
        # W_hh is read from its resident VMEM tile at every dot rather than
        # being held live across the unrolled loop (lower vreg pressure).
        gates = xp.astype(jnp.float32) + jnp.dot(
            h.astype(jnp.bfloat16), whh_ref[...],
            preferred_element_type=jnp.float32)
        # One tanh over the packed gate vector: sigmoid(x) = 0.5*(tanh(x/2)+1)
        # for the i/f/o gates, plain tanh for the candidate gate.
        t = jnp.tanh(jnp.where(g_mask, gates, 0.5 * gates))
        act = jnp.where(g_mask, t, 0.5 * (t + 1.0))
        i_g = act[:, 0 * H:1 * H]
        f_g = act[:, 1 * H:2 * H]
        g_g = act[:, 2 * H:3 * H]
        o_g = act[:, 3 * H:4 * H]
        c_new = f_g * c + i_g * g_g
        h_new = o_g * jnp.tanh(c_new)
        if zpad is not None:                 # keep state/output Hp-wide (zeros)
            h_new = jnp.concatenate([h_new, zpad], axis=1)
        return h_new, c_new

    h_f, c_f = hf_scr[...], cf_scr[...]
    h_b, c_b = hb_scr[...], cb_scr[...]

    # Fully-unrolled static inner time loop (T is a small static chunk size);
    # the two independent direction chains are interleaved for ILP.
    for i in range(T):
        h_f, c_f = cell(xpf_ref[i], h_f, c_f, whhf_ref)
        of_ref[i] = h_f

        j = T - 1 - i                         # backward chain runs time-reversed
        h_b, c_b = cell(xpb_ref[j], h_b, c_b, whhb_ref)
        ob_ref[j] = h_b

    hf_scr[...] = h_f
    cf_scr[...] = c_f
    hb_scr[...] = h_b
    cb_scr[...] = c_b


def bilstm_layer(xpf, xpb, whhf, whhb, *, hidden_size, time_chunk):
    """Fused bidirectional LSTM recurrence.

    xpf, xpb : (S_pad, Bp, Gp) bf16 precomputed input projections (bias incl.,
               zero rows for time padding).
    whhf/b   : (Hp, Gp) bf16 recurrent weights (transposed, packed-gate cols).
    Returns (h_fwd, h_bwd), each (S_pad, Bp, Hp) f32; columns [H:Hp) are zero.
    """
    S_pad, Bp, Gp = xpf.shape
    Hp = whhf.shape[0]
    H = hidden_size
    T = time_chunk
    G = S_pad // T

    # Explicit VMEM budget from actual tile sizes (double-buffered slabs +
    # resident weights + scratch), capped for v7x's 64 MiB physical VMEM.
    vmem_bytes = (2 * 2 * T * Bp * Gp * xpf.dtype.itemsize
                  + 2 * 2 * T * Bp * Hp * 4
                  + 2 * 2 * Hp * Gp * whhf.dtype.itemsize
                  + 4 * Bp * Hp * 4)
    vmem_limit = int(min(max(2 * vmem_bytes, 8 << 20), 64 << 20))

    fwd_map = lambda g: (g, 0, 0)
    bwd_map = lambda g, G=G: (G - 1 - g, 0, 0)
    const2 = lambda g: (0, 0)

    return pl.pallas_call(
        functools.partial(_bilstm_chunk_kernel, H),
        out_shape=(jax.ShapeDtypeStruct((S_pad, Bp, Hp), jnp.float32),
                   jax.ShapeDtypeStruct((S_pad, Bp, Hp), jnp.float32)),
        grid=(G,),
        in_specs=[
            pl.BlockSpec((T, Bp, Gp), fwd_map),
            pl.BlockSpec((T, Bp, Gp), bwd_map),
            pl.BlockSpec((Hp, Gp), const2),
            pl.BlockSpec((Hp, Gp), const2),
        ],
        out_specs=(
            pl.BlockSpec((T, Bp, Hp), fwd_map),
            pl.BlockSpec((T, Bp, Hp), bwd_map),
        ),
        scratch_shapes=[
            pltpu.VMEM((Bp, Hp), jnp.float32),   # h fwd
            pltpu.VMEM((Bp, H), jnp.float32),    # c fwd
            pltpu.VMEM((Bp, Hp), jnp.float32),   # h bwd
            pltpu.VMEM((Bp, H), jnp.float32),    # c bwd
        ],
        compiler_params=pltpu.CompilerParams(
            dimension_semantics=("arbitrary",),
            vmem_limit_bytes=vmem_limit),
    )(xpf, xpb, whhf, whhb)


# ----------------------------------------------------------------------------
# Parameter construction (deterministic, PyTorch-LSTM-like uniform init).
# Weights are stored both in padded kernel layout and unpadded reference layout.
# ----------------------------------------------------------------------------
def init_rnn_encoder_params(key, input_size, hidden_size, num_layers,
                            aux_size=0):
    H = hidden_size
    Hp = _round_up(H, 128)          # padded state / hidden-output width
    Gp = _round_up(4 * H, 128)      # packed gate width (gates contiguous)
    bound = 1.0 / math.sqrt(H)

    def pad_rows_for_kernel(w_t, row_blocks):
        # w_t: (in_sz, 4H); hidden-source row blocks are padded H -> Hp so that
        # the Hp-padded hidden activations can be used directly as matmul K.
        parts, off = [], 0
        for width, is_hidden in row_blocks:
            blk = w_t[off:off + width]
            if is_hidden and Hp != H:
                blk = jnp.pad(blk, ((0, Hp - H), (0, 0)))
            parts.append(blk)
            off += width
        return jnp.concatenate(parts, axis=0)

    layers = []
    for i in range(num_layers):
        in_sz = input_size + 2 * H * i + (aux_size if i == 0 else 0)
        if i == 0:
            row_blocks = [(input_size, False)]
            if aux_size:
                row_blocks.append((aux_size, False))
        else:
            row_blocks = [(input_size, False)] + [(H, True)] * (2 * i)

        dirs = {}
        for direction in ("fwd", "bwd"):
            key, k1, k2, k3, k4 = jax.random.split(key, 5)
            w_ih = jax.random.uniform(k1, (4 * H, in_sz), jnp.float32,
                                      -bound, bound)
            w_hh = jax.random.uniform(k2, (4 * H, H), jnp.float32,
                                      -bound, bound)
            b_ih = jax.random.uniform(k3, (4 * H,), jnp.float32, -bound, bound)
            b_hh = jax.random.uniform(k4, (4 * H,), jnp.float32, -bound, bound)

            wih_k = pad_rows_for_kernel(w_ih.T, row_blocks)        # (rows_pad, 4H)
            wih_k = jnp.pad(wih_k, ((0, 0), (0, Gp - 4 * H)))      # (rows_pad, Gp)
            whh_k = jnp.pad(w_hh.T, ((0, Hp - H), (0, Gp - 4 * H))
                            ).astype(jnp.bfloat16)                 # (Hp, Gp) bf16
            bias_k = jnp.pad(b_ih + b_hh, (0, Gp - 4 * H))         # (Gp,)

            dirs[direction] = {
                "wih_k": wih_k, "whh_k": whh_k, "bias_k": bias_k,
                # unpadded copies for the pure-JAX reference
                "wih_t_ref": w_ih.T, "whh_t_ref": w_hh.T,
                "bias_ref": (b_ih + b_hh)[None, :],
            }

        # Fused projection weight/bias: fwd columns [0:Gp), bwd columns [Gp:2Gp)
        w_fused = jnp.concatenate([dirs["fwd"]["wih_k"], dirs["bwd"]["wih_k"]],
                                  axis=1)
        b_fused = jnp.concatenate([dirs["fwd"]["bias_k"], dirs["bwd"]["bias_k"]])
        layers.append({"fwd": dirs["fwd"], "bwd": dirs["bwd"],
                       "w_fused": w_fused, "b_fused": b_fused})

    return {"layers": layers, "hidden_size": H, "hidden_pad": Hp,
            "gate_pad": Gp, "input_size": input_size, "aux_size": aux_size}


# ----------------------------------------------------------------------------
# Forward pass mirroring RNNEncoder.forward
# ----------------------------------------------------------------------------
def _project_fused(srcs, w_fused, b_fused):
    """sum_j srcs[j] @ rows_j(w_fused) + b_fused, without materializing the
    concatenation of the hidden tensors.  The fused weight packs fwd and bwd
    input weights side by side, so each source is read from HBM once per layer.
    DEFAULT matmul precision (single bf16 MXU pass, f32 accumulate)."""
    S, Bp, _ = srcs[0].shape
    acc, off = None, 0
    for s in srcs:
        d = s.shape[-1]
        p = jnp.dot(s.reshape(S * Bp, d), w_fused[off:off + d])
        acc = p if acc is None else acc + p
        off += d
    acc = acc + b_fused[None, :]
    return acc.reshape(S, Bp, -1)


def rnn_encoder_forward(params, x, x_mask=None, aux_input=None):
    # TODO(synk): x_mask accepted but unused, exactly like the reference forward
    # (no packed sequences); dropout (my_dropout_p) is identity (eval / p=0).
    del x_mask
    H, Hp, Gp = params["hidden_size"], params["hidden_pad"], params["gate_pad"]
    B, S, _ = x.shape
    Bp = max(8, _round_up(B, 8))          # fill the sublane dimension
    T = _pick_time_chunk(S, Bp, Gp, Hp)
    S_pad = _round_up(S, T)

    # Padded batch rows see only the bias -> they accumulate nonzero h/c state;
    # harmless because batch rows never mix and padding is sliced off at the end.
    x_tm = jnp.transpose(x, (1, 0, 2))    # (S, B, D0)
    x_tm = jnp.pad(x_tm, ((0, 0), (0, Bp - B), (0, 0)))
    aux_tm = None
    if aux_input is not None:
        aux_tm = jnp.pad(jnp.transpose(aux_input, (1, 0, 2)),
                         ((0, 0), (0, Bp - B), (0, 0)))

    hidden_srcs = []                      # Hp-padded hidden outputs, per layer
    for li, layer in enumerate(params["layers"]):
        if li == 0:
            srcs = [x_tm] + ([aux_tm] if aux_tm is not None else [])
        else:
            srcs = [x_tm] + hidden_srcs   # aux only feeds layer 0 (spec)

        xp = _project_fused(srcs, layer["w_fused"], layer["b_fused"])
        xpf = xp[..., :Gp].astype(jnp.bfloat16)   # bf16 slabs halve HBM traffic
        xpb = xp[..., Gp:].astype(jnp.bfloat16)
        if S_pad != S:
            # Zero (bias-free) rows keep the LSTM state exactly (0,0) through
            # padded timesteps, so the backward chain - which consumes the
            # padded rows first - is unaffected; forward pads are discarded.
            tp = ((0, S_pad - S), (0, 0), (0, 0))
            xpf = jnp.pad(xpf, tp)
            xpb = jnp.pad(xpb, tp)

        hf, hb = bilstm_layer(xpf, xpb,
                              layer["fwd"]["whh_k"], layer["bwd"]["whh_k"],
                              hidden_size=H, time_chunk=T)
        hidden_srcs.extend([hf[:S], hb[:S]])   # keep Hp-padded between layers

    # Slice to H and drop batch padding only once, at the very end.
    out = jnp.concatenate([h[:, :B, :H] for h in hidden_srcs], axis=-1)
    return jnp.transpose(out, (1, 0, 2))       # (B, S, 2*H*num_layers)


# ----------------------------------------------------------------------------
# Pure-JAX reference (lax.scan, unpadded f32 weights) for a correctness check
# ----------------------------------------------------------------------------
def _lstm_dir_ref(x_tm, wih_t, whh_t, bias, reverse):
    S, B, _ = x_tm.shape
    H = whh_t.shape[0]
    xs = x_tm[::-1] if reverse else x_tm

    def step(carry, x_t):
        h, c = carry
        g = (jnp.dot(x_t, wih_t, precision=lax.Precision.HIGHEST)
             + jnp.dot(h, whh_t, precision=lax.Precision.HIGHEST) + bias)
        i_g = jax.nn.sigmoid(g[:, 0 * H:1 * H])
        f_g = jax.nn.sigmoid(g[:, 1 * H:2 * H])
        g_g = jnp.tanh(g[:, 2 * H:3 * H])
        o_g = jax.nn.sigmoid(g[:, 3 * H:4 * H])
        c_new = f_g * c + i_g * g_g
        h_new = o_g * jnp.tanh(c_new)
        return (h_new, c_new), h_new

    init = (jnp.zeros((B, H), jnp.float32), jnp.zeros((B, H), jnp.float32))
    _, hs = lax.scan(step, init, xs)
    return hs[::-1] if reverse else hs


def rnn_encoder_forward_ref(params, x, aux_input=None):
    x_tm = jnp.transpose(x, (1, 0, 2))
    aux_tm = (jnp.transpose(aux_input, (1, 0, 2))
              if aux_input is not None else None)
    hiddens = [x_tm]
    for i, layer in enumerate(params["layers"]):
        rnn_input = jnp.concatenate(hiddens, axis=2)
        if i == 0 and aux_tm is not None:
            rnn_input = jnp.concatenate([rnn_input, aux_tm], axis=2)
        h_fwd = _lstm_dir_ref(rnn_input, layer["fwd"]["wih_t_ref"],
                              layer["fwd"]["whh_t_ref"],
                              layer["fwd"]["bias_ref"], reverse=False)
        h_bwd = _lstm_dir_ref(rnn_input, layer["bwd"]["wih_t_ref"],
                              layer["bwd"]["whh_t_ref"],
                              layer["bwd"]["bias_ref"], reverse=True)
        hiddens.append(jnp.concatenate([h_fwd, h_bwd], axis=2))
    outs = [jnp.transpose(h, (1, 0, 2)) for h in hiddens[1:]]
    return jnp.concatenate(outs, axis=-1)


if __name__ == "__main__":
    B, S = 2, 8
    input_size, hidden_size, num_layers = 16, 32, 2

    key = jax.random.PRNGKey(0)
    key, kx = jax.random.split(key)
    x = jax.random.normal(kx, (B, S, input_size), jnp.float32)
    x_mask = jnp.zeros((B, S), jnp.bool_)

    params = init_rnn_encoder_params(key, input_size, hidden_size, num_layers)

    fwd = jax.jit(functools.partial(rnn_encoder_forward, params))
    out = jax.block_until_ready(fwd(x, x_mask))
    assert out.shape == (B, S, 2 * hidden_size * num_layers), out.shape

    ref = jax.block_until_ready(rnn_encoder_forward_ref(params, x))
    max_err = float(jnp.max(jnp.abs(out - ref)))
    # bf16 projections / bf16 W_hh / bf16 xp slabs vs. an f32 HIGHEST-precision
    # reference: allow a bf16-scale tolerance (structural bugs give >> 0.1).
    assert max_err < 7.5e-2, max_err

    print("KERNEL_OK")
</pallas_src>

<mosaic_0001>
module attributes {stable_mosaic.version = 11 : i64} {
  func.func @_bilstm_chunk_kernel(%arg0: i32, %arg1: memref<8x8x128xbf16, #tpu.memory_space<vmem>>, %arg2: memref<8x8x128xbf16, #tpu.memory_space<vmem>>, %arg3: memref<128x128xbf16, #tpu.memory_space<vmem>>, %arg4: memref<128x128xbf16, #tpu.memory_space<vmem>>, %arg5: memref<8x8x128xf32, #tpu.memory_space<vmem>>, %arg6: memref<8x8x128xf32, #tpu.memory_space<vmem>>, %arg7: memref<8x128xf32, #tpu.memory_space<vmem>>, %arg8: memref<8x32xf32, #tpu.memory_space<vmem>>, %arg9: memref<8x128xf32, #tpu.memory_space<vmem>>, %arg10: memref<8x32xf32, #tpu.memory_space<vmem>>) attributes {dimension_semantics = [#tpu.dimension_semantics<arbitrary>], iteration_bounds = array<i64: 1>, scalar_prefetch = 0 : i64, scratch_operands = 4 : i64, tpu.core_type = #tpu.core_type<tc>, window_params = [{transform_indices = @transform_0, window_bounds = array<i64: 8, 8, 128>}, {transform_indices = @transform_1, window_bounds = array<i64: 8, 8, 128>}, {pipeline_mode = #tpu.pipeline_mode<synchronous>, transform_indices = @transform_2, window_bounds = array<i64: 128, 128>}, {pipeline_mode = #tpu.pipeline_mode<synchronous>, transform_indices = @transform_3, window_bounds = array<i64: 128, 128>}, {transform_indices = @transform_4, window_bounds = array<i64: 8, 8, 128>}, {transform_indices = @transform_5, window_bounds = array<i64: 8, 8, 128>}]} {
    %c0_i32 = arith.constant 0 : i32
    %0 = arith.cmpi eq, %arg0, %c0_i32 : i32
    %1 = arith.extui %0 : i1 to i32
    %c0_i32_0 = arith.constant 0 : i32
    %2 = arith.cmpi ne, %1, %c0_i32_0 : i32
    scf.if %2 {
      %cst_201 = arith.constant 0.000000e+00 : f32
      %482 = vector.broadcast %cst_201 : f32 to vector<8x128xf32>
      %c0_202 = arith.constant 0 : index
      %c0_203 = arith.constant 0 : index
      %483 = vector.load %arg7[%c0_202, %c0_203] : memref<8x128xf32, #tpu.memory_space<vmem>>, vector<8x128xf32>
      tpu.vector_store %arg7[%c0_202, %c0_203], %482 {strides = array<i32>} : memref<8x128xf32, #tpu.memory_space<vmem>>, vector<8x128xf32>,
      %cst_204 = arith.constant 0.000000e+00 : f32
      %484 = vector.broadcast %cst_204 : f32 to vector<8x32xf32>
      %c0_205 = arith.constant 0 : index
      %c0_206 = arith.constant 0 : index
      %485 = vector.load %arg8[%c0_205, %c0_206] : memref<8x32xf32, #tpu.memory_space<vmem>>, vector<8x32xf32>
      tpu.vector_store %arg8[%c0_205, %c0_206], %484 {strides = array<i32>} : memref<8x32xf32, #tpu.memory_space<vmem>>, vector<8x32xf32>,
      %cst_207 = arith.constant 0.000000e+00 : f32
      %486 = vector.broadcast %cst_207 : f32 to vector<8x128xf32>
      %c0_208 = arith.constant 0 : index
      %c0_209 = arith.constant 0 : index
      %487 = vector.load %arg9[%c0_208, %c0_209] : memref<8x128xf32, #tpu.memory_space<vmem>>, vector<8x128xf32>
      tpu.vector_store %arg9[%c0_208, %c0_209], %486 {strides = array<i32>} : memref<8x128xf32, #tpu.memory_space<vmem>>, vector<8x128xf32>,
      %cst_210 = arith.constant 0.000000e+00 : f32
      %488 = vector.broadcast %cst_210 : f32 to vector<8x32xf32>
      %c0_211 = arith.constant 0 : index
      %c0_212 = arith.constant 0 : index
      %489 = vector.load %arg10[%c0_211, %c0_212] : memref<8x32xf32, #tpu.memory_space<vmem>>, vector<8x32xf32>
      tpu.vector_store %arg10[%c0_211, %c0_212], %488 {strides = array<i32>} : memref<8x32xf32, #tpu.memory_space<vmem>>, vector<8x32xf32>,
    } else {
    }
    %3 = tpu.iota {dimensions = array<i32: 1>} : vector<8x128xi32>
    %c64_i32 = arith.constant 64 : i32
    %4 = vector.broadcast %c64_i32 : i32 to vector<8x128xi32>
    %5 = arith.cmpi sge, %3, %4 : vector<8x128xi32>
    %c96_i32 = arith.constant 96 : i32
    %6 = vector.broadcast %c96_i32 : i32 to vector<8x128xi32>
    %7 = arith.cmpi slt, %3, %6 : vector<8x128xi32>
    %8 = arith.andi %5, %7 : vector<8x128xi1>
    %cst = arith.constant 0.000000e+00 : f32
    %9 = vector.broadcast %cst : f32 to vector<8x96xf32>
    %c0 = arith.constant 0 : index
    %c0_1 = arith.constant 0 : index
    %10 = vector.load %arg7[%c0, %c0_1] : memref<8x128xf32, #tpu.memory_space<vmem>>, vector<8x128xf32>
    %c0_2 = arith.constant 0 : index
    %c0_3 = arith.constant 0 : index
    %11 = vector.load %arg8[%c0_2, %c0_3] : memref<8x32xf32, #tpu.memory_space<vmem>>, vector<8x32xf32>
    %c0_4 = arith.constant 0 : index
    %c0_5 = arith.constant 0 : index
    %12 = vector.load %arg9[%c0_4, %c0_5] : memref<8x128xf32, #tpu.memory_space<vmem>>, vector<8x128xf32>
    %c0_6 = arith.constant 0 : index
    %c0_7 = arith.constant 0 : index
    %13 = vector.load %arg10[%c0_6, %c0_7] : memref<8x32xf32, #tpu.memory_space<vmem>>, vector<8x32xf32>
    %c0_8 = arith.constant 0 : index
    %c0_9 = arith.constant 0 : index
    %c0_10 = arith.constant 0 : index
    %14 = vector.load %arg1[%c0_8, %c0_9, %c0_10] : memref<8x8x128xbf16, #tpu.memory_space<vmem>>, vector<1x8x128xbf16>
    %15 = vector.shape_cast %14 : vector<1x8x128xbf16> to vector<8x128xbf16>
    %16 = arith.extf %15 : vector<8x128xbf16> to vector<8x128xf32>
    %17 = arith.truncf %10 : vector<8x128xf32> to vector<8x128xbf16>
    %c0_11 = arith.constant 0 : index
    %c0_12 = arith.constant 0 : index
    %18 = vector.load %arg3[%c0_11, %c0_12] : memref<128x128xbf16, #tpu.memory_space<vmem>>, vector<128x128xbf16>
    %cst_13 = arith.constant dense<0.000000e+00> : vector<8x128xf32>
    %19 = tpu.matmul %17, %18, %cst_13 {dimension_numbers = #tpu.dot_dimension_numbers<[1], [0], [0], [1], [0, 0, 1, 1], [], []>} : vector<8x128xbf16>, vector<128x128xbf16>, vector<8x128xf32> -> vector<8x128xf32>
    %20 = arith.addf %16, %19 : vector<8x128xf32>
    %cst_14 = arith.constant 5.000000e-01 : f32
    %21 = vector.broadcast %cst_14 : f32 to vector<8x128xf32>
    %22 = arith.mulf %21, %20 : vector<8x128xf32>
    %23 = arith.select %8, %20, %22 : vector<8x128xi1>, vector<8x128xf32>
    %24 = math.tanh %23 : vector<8x128xf32>
    %cst_15 = arith.constant 1.000000e+00 : f32
    %25 = vector.broadcast %cst_15 : f32 to vector<8x128xf32>
    %26 = arith.addf %24, %25 : vector<8x128xf32>
    %cst_16 = arith.constant 5.000000e-01 : f32
    %27 = vector.broadcast %cst_16 : f32 to vector<8x128xf32>
    %28 = arith.mulf %27, %26 : vector<8x128xf32>
    %29 = arith.select %8, %24, %28 : vector<8x128xi1>, vector<8x128xf32>
    %30 = vector.extract_strided_slice %29 {offsets = [0, 0], sizes = [8, 32], strides = [1, 1]} : vector<8x128xf32> to vector<8x32xf32>
    %31 = vector.extract_strided_slice %29 {offsets = [0, 32], sizes = [8, 32], strides = [1, 1]} : vector<8x128xf32> to vector<8x32xf32>
    %32 = vector.extract_strided_slice %29 {offsets = [0, 64], sizes = [8, 32], strides = [1, 1]} : vector<8x128xf32> to vector<8x32xf32>
    %33 = vector.extract_strided_slice %29 {offsets = [0, 96], sizes = [8, 32], strides = [1, 1]} : vector<8x128xf32> to vector<8x32xf32>
    %34 = arith.mulf %31, %11 : vector<8x32xf32>
    %35 = arith.mulf %30, %32 : vector<8x32xf32>
    %36 = arith.addf %34, %35 : vector<8x32xf32>
    %37 = math.tanh %36 : vector<8x32xf32>
    %38 = arith.mulf %33, %37 : vector<8x32xf32>
    %39 = tpu.concatenate %38, %9 in 1 : vector<8x32xf32>, vector<8x96xf32> -> vector<8x128xf32>
    %c0_17 = arith.constant 0 : index
    %c0_18 = arith.constant 0 : index
    %c0_19 = arith.constant 0 : index
    %40 = vector.load %arg5[%c0_17, %c0_18, %c0_19] : memref<8x8x128xf32, #tpu.memory_space<vmem>>, vector<1x8x128xf32>
    %41 = vector.shape_cast %40 : vector<1x8x128xf32> to vector<8x128xf32>
    %42 = vector.shape_cast %39 : vector<8x128xf32> to vector<1x8x128xf32>
    tpu.vector_store %arg5[%c0_17, %c0_18, %c0_19], %42 {strides = array<i32>} : memref<8x8x128xf32, #tpu.memory_space<vmem>>, vector<1x8x128xf32>,
    %c7 = arith.constant 7 : index
    %c0_20 = arith.constant 0 : index
    %c0_21 = arith.constant 0 : index
    %43 = vector.load %arg2[%c7, %c0_20, %c0_21] : memref<8x8x128xbf16, #tpu.memory_space<vmem>>, vector<1x8x128xbf16>
    %44 = vector.shape_cast %43 : vector<1x8x128xbf16> to vector<8x128xbf16>
    %45 = arith.extf %44 : vector<8x128xbf16> to vector<8x128xf32>
    %46 = arith.truncf %12 : vector<8x128xf32> to vector<8x128xbf16>
    %c0_22 = arith.constant 0 : index
    %c0_23 = arith.constant 0 : index
    %47 = vector.load %arg4[%c0_22, %c0_23] : memref<128x128xbf16, #tpu.memory_space<vmem>>, vector<128x128xbf16>
    %cst_24 = arith.constant dense<0.000000e+00> : vector<8x128xf32>
    %48 = tpu.matmul %46, %47, %cst_24 {dimension_numbers = #tpu.dot_dimension_numbers<[1], [0], [0], [1], [0, 0, 1, 1], [], []>} : vector<8x128xbf16>, vector<128x128xbf16>, vector<8x128xf32> -> vector<8x128xf32>
    %49 = arith.addf %45, %48 : vector<8x128xf32>
    %cst_25 = arith.constant 5.000000e-01 : f32
    %50 = vector.broadcast %cst_25 : f32 to vector<8x128xf32>
    %51 = arith.mulf %50, %49 : vector<8x128xf32>
    %52 = arith.select %8, %49, %51 : vector<8x128xi1>, vector<8x128xf32>
    %53 = math.tanh %52 : vector<8x128xf32>
    %cst_26 = arith.constant 1.000000e+00 : f32
    %54 = vector.broadcast %cst_26 : f32 to vector<8x128xf32>
    %55 = arith.addf %53, %54 : vector<8x128xf32>
    %cst_27 = arith.constant 5.000000e-01 : f32
    %56 = vector.broadcast %cst_27 : f32 to vector<8x128xf32>
    %57 = arith.mulf %56, %55 : vector<8x128xf32>
    %58 = arith.select %8, %53, %57 : vector<8x128xi1>, vector<8x128xf32>
    %59 = vector.extract_strided_slice %58 {offsets = [0, 0], sizes = [8, 32], strides = [1, 1]} : vector<8x128xf32> to vector<8x32xf32>
    %60 = vector.extract_strided_slice %58 {offsets = [0, 32], sizes = [8, 32], strides = [1, 1]} : vector<8x128xf32> to vector<8x32xf32>
    %61 = vector.extract_strided_slice %58 {offsets = [0, 64], sizes = [8, 32], strides = [1, 1]} : vector<8x128xf32> to vector<8x32xf32>
    %62 = vector.extract_strided_slice %58 {offsets = [0, 96], sizes = [8, 32], strides = [1, 1]} : vector<8x128xf32> to vector<8x32xf32>
    %63 = arith.mulf %60, %13 : vector<8x32xf32>
    %64 = arith.mulf %59, %61 : vector<8x32xf32>
    %65 = arith.addf %63, %64 : vector<8x32xf32>
    %66 = math.tanh %65 : vector<8x32xf32>
    %67 = arith.mulf %62, %66 : vector<8x32xf32>
    %68 = tpu.concatenate %67, %9 in 1 : vector<8x32xf32>, vector<8x96xf32> -> vector<8x128xf32>
    %c7_28 = arith.constant 7 : index
    %c0_29 = arith.constant 0 : index
    %c0_30 = arith.constant 0 : index
    %69 = vector.load %arg6[%c7_28, %c0_29, %c0_30] : memref<8x8x128xf32, #tpu.memory_space<vmem>>, vector<1x8x128xf32>
    %70 = vector.shape_cast %69 : vector<1x8x128xf32> to vector<8x128xf32>
    %71 = vector.shape_cast %68 : vector<8x128xf32> to vector<1x8x128xf32>
    tpu.vector_store %arg6[%c7_28, %c0_29, %c0_30], %71 {strides = array<i32>} : memref<8x8x128xf32, #tpu.memory_space<vmem>>, vector<1x8x128xf32>,
    %c1 = arith.constant 1 : index
    %c0_31 = arith.constant 0 : index
    %c0_32 = arith.constant 0 : index
    %72 = vector.load %arg1[%c1, %c0_31, %c0_32] : memref<8x8x128xbf16, #tpu.memory_space<vmem>>, vector<1x8x128xbf16>
    %73 = vector.shape_cast %72 : vector<1x8x128xbf16> to vector<8x128xbf16>
    %74 = arith.extf %73 : vector<8x128xbf16> to vector<8x128xf32>
    %75 = arith.truncf %39 : vector<8x128xf32> to vector<8x128xbf16>
    %c0_33 = arith.constant 0 : index
    %c0_34 = arith.constant 0 : index
    %76 = vector.load %arg3[%c0_33, %c0_34] : memref<128x128xbf16, #tpu.memory_space<vmem>>, vector<128x128xbf16>
    %cst_35 = arith.constant dense<0.000000e+00> : vector<8x128xf32>
    %77 = tpu.matmul %75, %76, %cst_35 {dimension_numbers = #tpu.dot_dimension_numbers<[1], [0], [0], [1], [0, 0, 1, 1], [], []>} : vector<8x128xbf16>, vector<128x128xbf16>, vector<8x128xf32> -> vector<8x128xf32>
    %78 = arith.addf %74, %77 : vector<8x128xf32>
    %cst_36 = arith.constant 5.000000e-01 : f32
    %79 = vector.broadcast %cst_36 : f32 to vector<8x128xf32>
    %80 = arith.mulf %79, %78 : vector<8x128xf32>
    %81 = arith.select %8, %78, %80 : vector<8x128xi1>, vector<8x128xf32>
    %82 = math.tanh %81 : vector<8x128xf32>
    %cst_37 = arith.constant 1.000000e+00 : f32
    %83 = vector.broadcast %cst_37 : f32 to vector<8x128xf32>
    %84 = arith.addf %82, %83 : vector<8x128xf32>
    %cst_38 = arith.constant 5.000000e-01 : f32
    %85 = vector.broadcast %cst_38 : f32 to vector<8x128xf32>
    %86 = arith.mulf %85, %84 : vector<8x128xf32>
    %87 = arith.select %8, %82, %86 : vector<8x128xi1>, vector<8x128xf32>
    %88 = vector.extract_strided_slice %87 {offsets = [0, 0], sizes = [8, 32], strides = [1, 1]} : vector<8x128xf32> to vector<8x32xf32>
    %89 = vector.extract_strided_slice %87 {offsets = [0, 32], sizes = [8, 32], strides = [1, 1]} : vector<8x128xf32> to vector<8x32xf32>
    %90 = vector.extract_strided_slice %87 {offsets = [0, 64], sizes = [8, 32], strides = [1, 1]} : vector<8x128xf32> to vector<8x32xf32>
    %91 = vector.extract_strided_slice %87 {offsets = [0, 96], sizes = [8, 32], strides = [1, 1]} : vector<8x128xf32> to vector<8x32xf32>
    %92 = arith.mulf %89, %36 : vector<8x32xf32>
    %93 = arith.mulf %88, %90 : vector<8x32xf32>
    %94 = arith.addf %92, %93 : vector<8x32xf32>
    %95 = math.tanh %94 : vector<8x32xf32>
    %96 = arith.mulf %91, %95 : vector<8x32xf32>
    %97 = tpu.concatenate %96, %9 in 1 : vector<8x32xf32>, vector<8x96xf32> -> vector<8x128xf32>
    %c1_39 = arith.constant 1 : index
    %c0_40 = arith.constant 0 : index
    %c0_41 = arith.constant 0 : index
    %98 = vector.load %arg5[%c1_39, %c0_40, %c0_41] : memref<8x8x128xf32, #tpu.memory_space<vmem>>, vector<1x8x128xf32>
    %99 = vector.shape_cast %98 : vector<1x8x128xf32> to vector<8x128xf32>
    %100 = vector.shape_cast %97 : vector<8x128xf32> to vector<1x8x128xf32>
    tpu.vector_store %arg5[%c1_39, %c0_40, %c0_41], %100 {strides = array<i32>} : memref<8x8x128xf32, #tpu.memory_space<vmem>>, vector<1x8x128xf32>,
    %c6 = arith.constant 6 : index
    %c0_42 = arith.constant 0 : index
    %c0_43 = arith.constant 0 : index
    %101 = vector.load %arg2[%c6, %c0_42, %c0_43] : memref<8x8x128xbf16, #tpu.memory_space<vmem>>, vector<1x8x128xbf16>
    %102 = vector.shape_cast %101 : vector<1x8x128xbf16> to vector<8x128xbf16>
    %103 = arith.extf %102 : vector<8x128xbf16> to vector<8x128xf32>
    %104 = arith.truncf %68 : vector<8x128xf32> to vector<8x128xbf16>
    %c0_44 = arith.constant 0 : index
    %c0_45 = arith.constant 0 : index
    %105 = vector.load %arg4[%c0_44, %c0_45] : memref<128x128xbf16, #tpu.memory_space<vmem>>, vector<128x128xbf16>
    %cst_46 = arith.constant dense<0.000000e+00> : vector<8x128xf32>
    %106 = tpu.matmul %104, %105, %cst_46 {dimension_numbers = #tpu.dot_dimension_numbers<[1], [0], [0], [1], [0, 0, 1, 1], [], []>} : vector<8x128xbf16>, vector<128x128xbf16>, vector<8x128xf32> -> vector<8x128xf32>
    %107 = arith.addf %103, %106 : vector<8x128xf32>
    %cst_47 = arith.constant 5.000000e-01 : f32
    %108 = vector.broadcast %cst_47 : f32 to vector<8x128xf32>
    %109 = arith.mulf %108, %107 : vector<8x128xf32>
    %110 = arith.select %8, %107, %109 : vector<8x128xi1>, vector<8x128xf32>
    %111 = math.tanh %110 : vector<8x128xf32>
    %cst_48 = arith.constant 1.000000e+00 : f32
    %112 = vector.broadcast %cst_48 : f32 to vector<8x128xf32>
    %113 = arith.addf %111, %112 : vector<8x128xf32>
    %cst_49 = arith.constant 5.000000e-01 : f32
    %114 = vector.broadcast %cst_49 : f32 to vector<8x128xf32>
    %115 = arith.mulf %114, %113 : vector<8x128xf32>
    %116 = arith.select %8, %111, %115 : vector<8x128xi1>, vector<8x128xf32>
    %117 = vector.extract_strided_slice %116 {offsets = [0, 0], sizes = [8, 32], strides = [1, 1]} : vector<8x128xf32> to vector<8x32xf32>
    %118 = vector.extract_strided_slice %116 {offsets = [0, 32], sizes = [8, 32], strides = [1, 1]} : vector<8x128xf32> to vector<8x32xf32>
    %119 = vector.extract_strided_slice %116 {offsets = [0, 64], sizes = [8, 32], strides = [1, 1]} : vector<8x128xf32> to vector<8x32xf32>
    %120 = vector.extract_strided_slice %116 {offsets = [0, 96], sizes = [8, 32], strides = [1, 1]} : vector<8x128xf32> to vector<8x32xf32>
    %121 = arith.mulf %118, %65 : vector<8x32xf32>
    %122 = arith.mulf %117, %119 : vector<8x32xf32>
    %123 = arith.addf %121, %122 : vector<8x32xf32>
    %124 = math.tanh %123 : vector<8x32xf32>
    %125 = arith.mulf %120, %124 : vector<8x32xf32>
    %126 = tpu.concatenate %125, %9 in 1 : vector<8x32xf32>, vector<8x96xf32> -> vector<8x128xf32>
    %c6_50 = arith.constant 6 : index
    %c0_51 = arith.constant 0 : index
    %c0_52 = arith.constant 0 : index
    %127 = vector.load %arg6[%c6_50, %c0_51, %c0_52] : memref<8x8x128xf32, #tpu.memory_space<vmem>>, vector<1x8x128xf32>
    %128 = vector.shape_cast %127 : vector<1x8x128xf32> to vector<8x128xf32>
    %129 = vector.shape_cast %126 : vector<8x128xf32> to vector<1x8x128xf32>
    tpu.vector_store %arg6[%c6_50, %c0_51, %c0_52], %129 {strides = array<i32>} : memref<8x8x128xf32, #tpu.memory_space<vmem>>, vector<1x8x128xf32>,
    %c2 = arith.constant 2 : index
    %c0_53 = arith.constant 0 : index
    %c0_54 = arith.constant 0 : index
    %130 = vector.load %arg1[%c2, %c0_53, %c0_54] : memref<8x8x128xbf16, #tpu.memory_space<vmem>>, vector<1x8x128xbf16>
    %131 = vector.shape_cast %130 : vector<1x8x128xbf16> to vector<8x128xbf16>
    %132 = arith.extf %131 : vector<8x128xbf16> to vector<8x128xf32>
    %133 = arith.truncf %97 : vector<8x128xf32> to vector<8x128xbf16>
    %c0_55 = arith.constant 0 : index
    %c0_56 = arith.constant 0 : index
    %134 = vector.load %arg3[%c0_55, %c0_56] : memref<128x128xbf16, #tpu.memory_space<vmem>>, vector<128x128xbf16>
    %cst_57 = arith.constant dense<0.000000e+00> : vector<8x128xf32>
    %135 = tpu.matmul %133, %134, %cst_57 {dimension_numbers = #tpu.dot_dimension_numbers<[1], [0], [0], [1], [0, 0, 1, 1], [], []>} : vector<8x128xbf16>, vector<128x128xbf16>, vector<8x128xf32> -> vector<8x128xf32>
    %136 = arith.addf %132, %135 : vector<8x128xf32>
    %cst_58 = arith.constant 5.000000e-01 : f32
    %137 = vector.broadcast %cst_58 : f32 to vector<8x128xf32>
    %138 = arith.mulf %137, %136 : vector<8x128xf32>
    %139 = arith.select %8, %136, %138 : vector<8x128xi1>, vector<8x128xf32>
    %140 = math.tanh %139 : vector<8x128xf32>
    %cst_59 = arith.constant 1.000000e+00 : f32
    %141 = vector.broadcast %cst_59 : f32 to vector<8x128xf32>
    %142 = arith.addf %140, %141 : vector<8x128xf32>
    %cst_60 = arith.constant 5.000000e-01 : f32
    %143 = vector.broadcast %cst_60 : f32 to vector<8x128xf32>
    %144 = arith.mulf %143, %142 : vector<8x128xf32>
    %145 = arith.select %8, %140, %144 : vector<8x128xi1>, vector<8x128xf32>
    %146 = vector.extract_strided_slice %145 {offsets = [0, 0], sizes = [8, 32], strides = [1, 1]} : vector<8x128xf32> to vector<8x32xf32>
    %147 = vector.extract_strided_slice %145 {offsets = [0, 32], sizes = [8, 32], strides = [1, 1]} : vector<8x128xf32> to vector<8x32xf32>
    %148 = vector.extract_strided_slice %145 {offsets = [0, 64], sizes = [8, 32], strides = [1, 1]} : vector<8x128xf32> to vector<8x32xf32>
    %149 = vector.extract_strided_slice %145 {offsets = [0, 96], sizes = [8, 32], strides = [1, 1]} : vector<8x128xf32> to vector<8x32xf32>
    %150 = arith.mulf %147, %94 : vector<8x32xf32>
    %151 = arith.mulf %146, %148 : vector<8x32xf32>
    %152 = arith.addf %150, %151 : vector<8x32xf32>
    %153 = math.tanh %152 : vector<8x32xf32>
    %154 = arith.mulf %149, %153 : vector<8x32xf32>
    %155 = tpu.concatenate %154, %9 in 1 : vector<8x32xf32>, vector<8x96xf32> -> vector<8x128xf32>
    %c2_61 = arith.constant 2 : index
    %c0_62 = arith.constant 0 : index
    %c0_63 = arith.constant 0 : index
    %156 = vector.load %arg5[%c2_61, %c0_62, %c0_63] : memref<8x8x128xf32, #tpu.memory_space<vmem>>, vector<1x8x128xf32>
    %157 = vector.shape_cast %156 : vector<1x8x128xf32> to vector<8x128xf32>
    %158 = vector.shape_cast %155 : vector<8x128xf32> to vector<1x8x128xf32>
    tpu.vector_store %arg5[%c2_61, %c0_62, %c0_63], %158 {strides = array<i32>} : memref<8x8x128xf32, #tpu.memory_space<vmem>>, vector<1x8x128xf32>,
    %c5 = arith.constant 5 : index
    %c0_64 = arith.constant 0 : index
    %c0_65 = arith.constant 0 : index
    %159 = vector.load %arg2[%c5, %c0_64, %c0_65] : memref<8x8x128xbf16, #tpu.memory_space<vmem>>, vector<1x8x128xbf16>
    %160 = vector.shape_cast %159 : vector<1x8x128xbf16> to vector<8x128xbf16>
    %161 = arith.extf %160 : vector<8x128xbf16> to vector<8x128xf32>
    %162 = arith.truncf %126 : vector<8x128xf32> to vector<8x128xbf16>
    %c0_66 = arith.constant 0 : index
    %c0_67 = arith.constant 0 : index
    %163 = vector.load %arg4[%c0_66, %c0_67] : memref<128x128xbf16, #tpu.memory_space<vmem>>, vector<128x128xbf16>
    %cst_68 = arith.constant dense<0.000000e+00> : vector<8x128xf32>
    %164 = tpu.matmul %162, %163, %cst_68 {dimension_numbers = #tpu.dot_dimension_numbers<[1], [0], [0], [1], [0, 0, 1, 1], [], []>} : vector<8x128xbf16>, vector<128x128xbf16>, vector<8x128xf32> -> vector<8x128xf32>
    %165 = arith.addf %161, %164 : vector<8x128xf32>
    %cst_69 = arith.constant 5.000000e-01 : f32
    %166 = vector.broadcast %cst_69 : f32 to vector<8x128xf32>
    %167 = arith.mulf %166, %165 : vector<8x128xf32>
    %168 = arith.select %8, %165, %167 : vector<8x128xi1>, vector<8x128xf32>
    %169 = math.tanh %168 : vector<8x128xf32>
    %cst_70 = arith.constant 1.000000e+00 : f32
    %170 = vector.broadcast %cst_70 : f32 to vector<8x128xf32>
    %171 = arith.addf %169, %170 : vector<8x128xf32>
    %cst_71 = arith.constant 5.000000e-01 : f32
    %172 = vector.broadcast %cst_71 : f32 to vector<8x128xf32>
    %173 = arith.mulf %172, %171 : vector<8x128xf32>
    %174 = arith.select %8, %169, %173 : vector<8x128xi1>, vector<8x128xf32>
    %175 = vector.extract_strided_slice %174 {offsets = [0, 0], sizes = [8, 32], strides = [1, 1]} : vector<8x128xf32> to vector<8x32xf32>
    %176 = vector.extract_strided_slice %174 {offsets = [0, 32], sizes = [8, 32], strides = [1, 1]} : vector<8x128xf32> to vector<8x32xf32>
    %177 = vector.extract_strided_slice %174 {offsets = [0, 64], sizes = [8, 32], strides = [1, 1]} : vector<8x128xf32> to vector<8x32xf32>
    %178 = vector.extract_strided_slice %174 {offsets = [0, 96], sizes = [8, 32], strides = [1, 1]} : vector<8x128xf32> to vector<8x32xf32>
    %179 = arith.mulf %176, %123 : vector<8x32xf32>
    %180 = arith.mulf %175, %177 : vector<8x32xf32>
    %181 = arith.addf %179, %180 : vector<8x32xf32>
    %182 = math.tanh %181 : vector<8x32xf32>
    %183 = arith.mulf %178, %182 : vector<8x32xf32>
    %184 = tpu.concatenate %183, %9 in 1 : vector<8x32xf32>, vector<8x96xf32> -> vector<8x128xf32>
    %c5_72 = arith.constant 5 : index
    %c0_73 = arith.constant 0 : index
    %c0_74 = arith.constant 0 : index
    %185 = vector.load %arg6[%c5_72, %c0_73, %c0_74] : memref<8x8x128xf32, #tpu.memory_space<vmem>>, vector<1x8x128xf32>
    %186 = vector.shape_cast %185 : vector<1x8x128xf32> to vector<8x128xf32>
    %187 = vector.shape_cast %184 : vector<8x128xf32> to vector<1x8x128xf32>
    tpu.vector_store %arg6[%c5_72, %c0_73, %c0_74], %187 {strides = array<i32>} : memref<8x8x128xf32, #tpu.memory_space<vmem>>, vector<1x8x128xf32>,
    %c3 = arith.constant 3 : index
    %c0_75 = arith.constant 0 : index
    %c0_76 = arith.constant 0 : index
    %188 = vector.load %arg1[%c3, %c0_75, %c0_76] : memref<8x8x128xbf16, #tpu.memory_space<vmem>>, vector<1x8x128xbf16>
    %189 = vector.shape_cast %188 : vector<1x8x128xbf16> to vector<8x128xbf16>
    %190 = arith.extf %189 : vector<8x128xbf16> to vector<8x128xf32>
    %191 = arith.truncf %155 : vector<8x128xf32> to vector<8x128xbf16>
    %c0_77 = arith.constant 0 : index
    %c0_78 = arith.constant 0 : index
    %192 = vector.load %arg3[%c0_77, %c0_78] : memref<128x128xbf16, #tpu.memory_space<vmem>>, vector<128x128xbf16>
    %cst_79 = arith.constant dense<0.000000e+00> : vector<8x128xf32>
    %193 = tpu.matmul %191, %192, %cst_79 {dimension_numbers = #tpu.dot_dimension_numbers<[1], [0], [0], [1], [0, 0, 1, 1], [], []>} : vector<8x128xbf16>, vector<128x128xbf16>, vector<8x128xf32> -> vector<8x128xf32>
    %194 = arith.addf %190, %193 : vector<8x128xf32>
    %cst_80 = arith.constant 5.000000e-01 : f32
    %195 = vector.broadcast %cst_80 : f32 to vector<8x128xf32>
    %196 = arith.mulf %195, %194 : vector<8x128xf32>
    %197 = arith.select %8, %194, %196 : vector<8x128xi1>, vector<8x128xf32>
    %198 = math.tanh %197 : vector<8x128xf32>
    %cst_81 = arith.constant 1.000000e+00 : f32
    %199 = vector.broadcast %cst_81 : f32 to vector<8x128xf32>
    %200 = arith.addf %198, %199 : vector<8x128xf32>
    %cst_82 = arith.constant 5.000000e-01 : f32
    %201 = vector.broadcast %cst_82 : f32 to vector<8x128xf32>
    %202 = arith.mulf %201, %200 : vector<8x128xf32>
    %203 = arith.select %8, %198, %202 : vector<8x128xi1>, vector<8x128xf32>
    %204 = vector.extract_strided_slice %203 {offsets = [0, 0], sizes = [8, 32], strides = [1, 1]} : vector<8x128xf32> to vector<8x32xf32>
    %205 = vector.extract_strided_slice %203 {offsets = [0, 32], sizes = [8, 32], strides = [1, 1]} : vector<8x128xf32> to vector<8x32xf32>
    %206 = vector.extract_strided_slice %203 {offsets = [0, 64], sizes = [8, 32], strides = [1, 1]} : vector<8x128xf32> to vector<8x32xf32>
    %207 = vector.extract_strided_slice %203 {offsets = [0, 96], sizes = [8, 32], strides = [1, 1]} : vector<8x128xf32> to vector<8x32xf32>
    %208 = arith.mulf %205, %152 : vector<8x32xf32>
    %209 = arith.mulf %204, %206 : vector<8x32xf32>
    %210 = arith.addf %208, %209 : vector<8x32xf32>
    %211 = math.tanh %210 : vector<8x32xf32>
    %212 = arith.mulf %207, %211 : vector<8x32xf32>
    %213 = tpu.concatenate %212, %9 in 1 : vector<8x32xf32>, vector<8x96xf32> -> vector<8x128xf32>
    %c3_83 = arith.constant 3 : index
    %c0_84 = arith.constant 0 : index
    %c0_85 = arith.constant 0 : index
    %214 = vector.load %arg5[%c3_83, %c0_84, %c0_85] : memref<8x8x128xf32, #tpu.memory_space<vmem>>, vector<1x8x128xf32>
    %215 = vector.shape_cast %214 : vector<1x8x128xf32> to vector<8x128xf32>
    %216 = vector.shape_cast %213 : vector<8x128xf32> to vector<1x8x128xf32>
    tpu.vector_store %arg5[%c3_83, %c0_84, %c0_85], %216 {strides = array<i32>} : memref<8x8x128xf32, #tpu.memory_space<vmem>>, vector<1x8x128xf32>,
    %c4 = arith.constant 4 : index
    %c0_86 = arith.constant 0 : index
    %c0_87 = arith.constant 0 : index
    %217 = vector.load %arg2[%c4, %c0_86, %c0_87] : memref<8x8x128xbf16, #tpu.memory_space<vmem>>, vector<1x8x128xbf16>
    %218 = vector.shape_cast %217 : vector<1x8x128xbf16> to vector<8x128xbf16>
    %219 = arith.extf %218 : vector<8x128xbf16> to vector<8x128xf32>
    %220 = arith.truncf %184 : vector<8x128xf32> to vector<8x128xbf16>
    %c0_88 = arith.constant 0 : index
    %c0_89 = arith.constant 0 : index
    %221 = vector.load %arg4[%c0_88, %c0_89] : memref<128x128xbf16, #tpu.memory_space<vmem>>, vector<128x128xbf16>
    %cst_90 = arith.constant dense<0.000000e+00> : vector<8x128xf32>
    %222 = tpu.matmul %220, %221, %cst_90 {dimension_numbers = #tpu.dot_dimension_numbers<[1], [0], [0], [1], [0, 0, 1, 1], [], []>} : vector<8x128xbf16>, vector<128x128xbf16>, vector<8x128xf32> -> vector<8x128xf32>
    %223 = arith.addf %219, %222 : vector<8x128xf32>
    %cst_91 = arith.constant 5.000000e-01 : f32
    %224 = vector.broadcast %cst_91 : f32 to vector<8x128xf32>
    %225 = arith.mulf %224, %223 : vector<8x128xf32>
    %226 = arith.select %8, %223, %225 : vector<8x128xi1>, vector<8x128xf32>
    %227 = math.tanh %226 : vector<8x128xf32>
    %cst_92 = arith.constant 1.000000e+00 : f32
    %228 = vector.broadcast %cst_92 : f32 to vector<8x128xf32>
    %229 = arith.addf %227, %228 : vector<8x128xf32>
    %cst_93 = arith.constant 5.000000e-01 : f32
    %230 = vector.broadcast %cst_93 : f32 to vector<8x128xf32>
    %231 = arith.mulf %230, %229 : vector<8x128xf32>
    %232 = arith.select %8, %227, %231 : vector<8x128xi1>, vector<8x128xf32>
    %233 = vector.extract_strided_slice %232 {offsets = [0, 0], sizes = [8, 32], strides = [1, 1]} : vector<8x128xf32> to vector<8x32xf32>
    %234 = vector.extract_strided_slice %232 {offsets = [0, 32], sizes = [8, 32], strides = [1, 1]} : vector<8x128xf32> to vector<8x32xf32>
    %235 = vector.extract_strided_slice %232 {offsets = [0, 64], sizes = [8, 32], strides = [1, 1]} : vector<8x128xf32> to vector<8x32xf32>
    %236 = vector.extract_strided_slice %232 {offsets = [0, 96], sizes = [8, 32], strides = [1, 1]} : vector<8x128xf32> to vector<8x32xf32>
    %237 = arith.mulf %234, %181 : vector<8x32xf32>
    %238 = arith.mulf %233, %235 : vector<8x32xf32>
    %239 = arith.addf %237, %238 : vector<8x32xf32>
    %240 = math.tanh %239 : vector<8x32xf32>
    %241 = arith.mulf %236, %240 : vector<8x32xf32>
    %242 = tpu.concatenate %241, %9 in 1 : vector<8x32xf32>, vector<8x96xf32> -> vector<8x128xf32>
    %c4_94 = arith.constant 4 : index
    %c0_95 = arith.constant 0 : index
    %c0_96 = arith.constant 0 : index
    %243 = vector.load %arg6[%c4_94, %c0_95, %c0_96] : memref<8x8x128xf32, #tpu.memory_space<vmem>>, vector<1x8x128xf32>
    %244 = vector.shape_cast %243 : vector<1x8x128xf32> to vector<8x128xf32>
    %245 = vector.shape_cast %242 : vector<8x128xf32> to vector<1x8x128xf32>
    tpu.vector_store %arg6[%c4_94, %c0_95, %c0_96], %245 {strides = array<i32>} : memref<8x8x128xf32, #tpu.memory_space<vmem>>, vector<1x8x128xf32>,
    %c4_97 = arith.constant 4 : index
    %c0_98 = arith.constant 0 : index
    %c0_99 = arith.constant 0 : index
    %246 = vector.load %arg1[%c4_97, %c0_98, %c0_99] : memref<8x8x128xbf16, #tpu.memory_space<vmem>>, vector<1x8x128xbf16>
    %247 = vector.shape_cast %246 : vector<1x8x128xbf16> to vector<8x128xbf16>
    %248 = arith.extf %247 : vector<8x128xbf16> to vector<8x128xf32>
    %249 = arith.truncf %213 : vector<8x128xf32> to vector<8x128xbf16>
    %c0_100 = arith.constant 0 : index
    %c0_101 = arith.constant 0 : index
    %250 = vector.load %arg3[%c0_100, %c0_101] : memref<128x128xbf16, #tpu.memory_space<vmem>>, vector<128x128xbf16>
    %cst_102 = arith.constant dense<0.000000e+00> : vector<8x128xf32>
    %251 = tpu.matmul %249, %250, %cst_102 {dimension_numbers = #tpu.dot_dimension_numbers<[1], [0], [0], [1], [0, 0, 1, 1], [], []>} : vector<8x128xbf16>, vector<128x128xbf16>, vector<8x128xf32> -> vector<8x128xf32>
    %252 = arith.addf %248, %251 : vector<8x128xf32>
    %cst_103 = arith.constant 5.000000e-01 : f32
    %253 = vector.broadcast %cst_103 : f32 to vector<8x128xf32>
    %254 = arith.mulf %253, %252 : vector<8x128xf32>
    %255 = arith.select %8, %252, %254 : vector<8x128xi1>, vector<8x128xf32>
    %256 = math.tanh %255 : vector<8x128xf32>
    %cst_104 = arith.constant 1.000000e+00 : f32
    %257 = vector.broadcast %cst_104 : f32 to vector<8x128xf32>
    %258 = arith.addf %256, %257 : vector<8x128xf32>
    %cst_105 = arith.constant 5.000000e-01 : f32
    %259 = vector.broadcast %cst_105 : f32 to vector<8x128xf32>
    %260 = arith.mulf %259, %258 : vector<8x128xf32>
    %261 = arith.select %8, %256, %260 : vector<8x128xi1>, vector<8x128xf32>
    %262 = vector.extract_strided_slice %261 {offsets = [0, 0], sizes = [8, 32], strides = [1, 1]} : vector<8x128xf32> to vector<8x32xf32>
    %263 = vector.extract_strided_slice %261 {offsets = [0, 32], sizes = [8, 32], strides = [1, 1]} : vector<8x128xf32> to vector<8x32xf32>
    %264 = vector.extract_strided_slice %261 {offsets = [0, 64], sizes = [8, 32], strides = [1, 1]} : vector<8x128xf32> to vector<8x32xf32>
    %265 = vector.extract_strided_slice %261 {offsets = [0, 96], sizes = [8, 32], strides = [1, 1]} : vector<8x128xf32> to vector<8x32xf32>
    %266 = arith.mulf %263, %210 : vector<8x32xf32>
    %267 = arith.mulf %262, %264 : vector<8x32xf32>
    %268 = arith.addf %266, %267 : vector<8x32xf32>
    %269 = math.tanh %268 : vector<8x32xf32>
    %270 = arith.mulf %265, %269 : vector<8x32xf32>
    %271 = tpu.concatenate %270, %9 in 1 : vector<8x32xf32>, vector<8x96xf32> -> vector<8x128xf32>
    %c4_106 = arith.constant 4 : index
    %c0_107 = arith.constant 0 : index
    %c0_108 = arith.constant 0 : index
    %272 = vector.load %arg5[%c4_106, %c0_107, %c0_108] : memref<8x8x128xf32, #tpu.memory_space<vmem>>, vector<1x8x128xf32>
    %273 = vector.shape_cast %272 : vector<1x8x128xf32> to vector<8x128xf32>
    %274 = vector.shape_cast %271 : vector<8x128xf32> to vector<1x8x128xf32>
    tpu.vector_store %arg5[%c4_106, %c0_107, %c0_108], %274 {strides = array<i32>} : memref<8x8x128xf32, #tpu.memory_space<vmem>>, vector<1x8x128xf32>,
    %c3_109 = arith.constant 3 : index
    %c0_110 = arith.constant 0 : index
    %c0_111 = arith.constant 0 : index
    %275 = vector.load %arg2[%c3_109, %c0_110, %c0_111] : memref<8x8x128xbf16, #tpu.memory_space<vmem>>, vector<1x8x128xbf16>
    %276 = vector.shape_cast %275 : vector<1x8x128xbf16> to vector<8x128xbf16>
    %277 = arith.extf %276 : vector<8x128xbf16> to vector<8x128xf32>
    %278 = arith.truncf %242 : vector<8x128xf32> to vector<8x128xbf16>
    %c0_112 = arith.constant 0 : index
    %c0_113 = arith.constant 0 : index
    %279 = vector.load %arg4[%c0_112, %c0_113] : memref<128x128xbf16, #tpu.memory_space<vmem>>, vector<128x128xbf16>
    %cst_114 = arith.constant dense<0.000000e+00> : vector<8x128xf32>
    %280 = tpu.matmul %278, %279, %cst_114 {dimension_numbers = #tpu.dot_dimension_numbers<[1], [0], [0], [1], [0, 0, 1, 1], [], []>} : vector<8x128xbf16>, vector<128x128xbf16>, vector<8x128xf32> -> vector<8x128xf32>
    %281 = arith.addf %277, %280 : vector<8x128xf32>
    %cst_115 = arith.constant 5.000000e-01 : f32
    %282 = vector.broadcast %cst_115 : f32 to vector<8x128xf32>
    %283 = arith.mulf %282, %281 : vector<8x128xf32>
    %284 = arith.select %8, %281, %283 : vector<8x128xi1>, vector<8x128xf32>
    %285 = math.tanh %284 : vector<8x128xf32>
    %cst_116 = arith.constant 1.000000e+00 : f32
    %286 = vector.broadcast %cst_116 : f32 to vector<8x128xf32>
    %287 = arith.addf %285, %286 : vector<8x128xf32>
    %cst_117 = arith.constant 5.000000e-01 : f32
    %288 = vector.broadcast %cst_117 : f32 to vector<8x128xf32>
    %289 = arith.mulf %288, %287 : vector<8x128xf32>
    %290 = arith.select %8, %285, %289 : vector<8x128xi1>, vector<8x128xf32>
    %291 = vector.extract_strided_slice %290 {offsets = [0, 0], sizes = [8, 32], strides = [1, 1]} : vector<8x128xf32> to vector<8x32xf32>
    %292 = vector.extract_strided_slice %290 {offsets = [0, 32], sizes = [8, 32], strides = [1, 1]} : vector<8x128xf32> to vector<8x32xf32>
    %293 = vector.extract_strided_slice %290 {offsets = [0, 64], sizes = [8, 32], strides = [1, 1]} : vector<8x128xf32> to vector<8x32xf32>
    %294 = vector.extract_strided_slice %290 {offsets = [0, 96], sizes = [8, 32], strides = [1, 1]} : vector<8x128xf32> to vector<8x32xf32>
    %295 = arith.mulf %292, %239 : vector<8x32xf32>
    %296 = arith.mulf %291, %293 : vector<8x32xf32>
    %297 = arith.addf %295, %296 : vector<8x32xf32>
    %298 = math.tanh %297 : vector<8x32xf32>
    %299 = arith.mulf %294, %298 : vector<8x32xf32>
    %300 = tpu.concatenate %299, %9 in 1 : vector<8x32xf32>, vector<8x96xf32> -> vector<8x128xf32>
    %c3_118 = arith.constant 3 : index
    %c0_119 = arith.constant 0 : index
    %c0_120 = arith.constant 0 : index
    %301 = vector.load %arg6[%c3_118, %c0_119, %c0_120] : memref<8x8x128xf32, #tpu.memory_space<vmem>>, vector<1x8x128xf32>
    %302 = vector.shape_cast %301 : vector<1x8x128xf32> to vector<8x128xf32>
    %303 = vector.shape_cast %300 : vector<8x128xf32> to vector<1x8x128xf32>
    tpu.vector_store %arg6[%c3_118, %c0_119, %c0_120], %303 {strides = array<i32>} : memref<8x8x128xf32, #tpu.memory_space<vmem>>, vector<1x8x128xf32>,
    %c5_121 = arith.constant 5 : index
    %c0_122 = arith.constant 0 : index
    %c0_123 = arith.constant 0 : index
    %304 = vector.load %arg1[%c5_121, %c0_122, %c0_123] : memref<8x8x128xbf16, #tpu.memory_space<vmem>>, vector<1x8x128xbf16>
    %305 = vector.shape_cast %304 : vector<1x8x128xbf16> to vector<8x128xbf16>
    %306 = arith.extf %305 : vector<8x128xbf16> to vector<8x128xf32>
    %307 = arith.truncf %271 : vector<8x128xf32> to vector<8x128xbf16>
    %c0_124 = arith.constant 0 : index
    %c0_125 = arith.constant 0 : index
    %308 = vector.load %arg3[%c0_124, %c0_125] : memref<128x128xbf16, #tpu.memory_space<vmem>>, vector<128x128xbf16>
    %cst_126 = arith.constant dense<0.000000e+00> : vector<8x128xf32>
    %309 = tpu.matmul %307, %308, %cst_126 {dimension_numbers = #tpu.dot_dimension_numbers<[1], [0], [0], [1], [0, 0, 1, 1], [], []>} : vector<8x128xbf16>, vector<128x128xbf16>, vector<8x128xf32> -> vector<8x128xf32>
    %310 = arith.addf %306, %309 : vector<8x128xf32>
    %cst_127 = arith.constant 5.000000e-01 : f32
    %311 = vector.broadcast %cst_127 : f32 to vector<8x128xf32>
    %312 = arith.mulf %311, %310 : vector<8x128xf32>
    %313 = arith.select %8, %310, %312 : vector<8x128xi1>, vector<8x128xf32>
    %314 = math.tanh %313 : vector<8x128xf32>
    %cst_128 = arith.constant 1.000000e+00 : f32
    %315 = vector.broadcast %cst_128 : f32 to vector<8x128xf32>
    %316 = arith.addf %314, %315 : vector<8x128xf32>
    %cst_129 = arith.constant 5.000000e-01 : f32
    %317 = vector.broadcast %cst_129 : f32 to vector<8x128xf32>
    %318 = arith.mulf %317, %316 : vector<8x128xf32>
    %319 = arith.select %8, %314, %318 : vector<8x128xi1>, vector<8x128xf32>
    %320 = vector.extract_strided_slice %319 {offsets = [0, 0], sizes = [8, 32], strides = [1, 1]} : vector<8x128xf32> to vector<8x32xf32>
    %321 = vector.extract_strided_slice %319 {offsets = [0, 32], sizes = [8, 32], strides = [1, 1]} : vector<8x128xf32> to vector<8x32xf32>
    %322 = vector.extract_strided_slice %319 {offsets = [0, 64], sizes = [8, 32], strides = [1, 1]} : vector<8x128xf32> to vector<8x32xf32>
    %323 = vector.extract_strided_slice %319 {offsets = [0, 96], sizes = [8, 32], strides = [1, 1]} : vector<8x128xf32> to vector<8x32xf32>
    %324 = arith.mulf %321, %268 : vector<8x32xf32>
    %325 = arith.mulf %320, %322 : vector<8x32xf32>
    %326 = arith.addf %324, %325 : vector<8x32xf32>
    %327 = math.tanh %326 : vector<8x32xf32>
    %328 = arith.mulf %323, %327 : vector<8x32xf32>
    %329 = tpu.concatenate %328, %9 in 1 : vector<8x32xf32>, vector<8x96xf32> -> vector<8x128xf32>
    %c5_130 = arith.constant 5 : index
    %c0_131 = arith.constant 0 : index
    %c0_132 = arith.constant 0 : index
    %330 = vector.load %arg5[%c5_130, %c0_131, %c0_132] : memref<8x8x128xf32, #tpu.memory_space<vmem>>, vector<1x8x128xf32>
    %331 = vector.shape_cast %330 : vector<1x8x128xf32> to vector<8x128xf32>
    %332 = vector.shape_cast %329 : vector<8x128xf32> to vector<1x8x128xf32>
    tpu.vector_store %arg5[%c5_130, %c0_131, %c0_132], %332 {strides = array<i32>} : memref<8x8x128xf32, #tpu.memory_space<vmem>>, vector<1x8x128xf32>,
    %c2_133 = arith.constant 2 : index
    %c0_134 = arith.constant 0 : index
    %c0_135 = arith.constant 0 : index
    %333 = vector.load %arg2[%c2_133, %c0_134, %c0_135] : memref<8x8x128xbf16, #tpu.memory_space<vmem>>, vector<1x8x128xbf16>
    %334 = vector.shape_cast %333 : vector<1x8x128xbf16> to vector<8x128xbf16>
    %335 = arith.extf %334 : vector<8x128xbf16> to vector<8x128xf32>
    %336 = arith.truncf %300 : vector<8x128xf32> to vector<8x128xbf16>
    %c0_136 = arith.constant 0 : index
    %c0_137 = arith.constant 0 : index
    %337 = vector.load %arg4[%c0_136, %c0_137] : memref<128x128xbf16, #tpu.memory_space<vmem>>, vector<128x128xbf16>
    %cst_138 = arith.constant dense<0.000000e+00> : vector<8x128xf32>
    %338 = tpu.matmul %336, %337, %cst_138 {dimension_numbers = #tpu.dot_dimension_numbers<[1], [0], [0], [1], [0, 0, 1, 1], [], []>} : vector<8x128xbf16>, vector<128x128xbf16>, vector<8x128xf32> -> vector<8x128xf32>
    %339 = arith.addf %335, %338 : vector<8x128xf32>
    %cst_139 = arith.constant 5.000000e-01 : f32
    %340 = vector.broadcast %cst_139 : f32 to vector<8x128xf32>
    %341 = arith.mulf %340, %339 : vector<8x128xf32>
    %342 = arith.select %8, %339, %341 : vector<8x128xi1>, vector<8x128xf32>
    %343 = math.tanh %342 : vector<8x128xf32>
    %cst_140 = arith.constant 1.000000e+00 : f32
    %344 = vector.broadcast %cst_140 : f32 to vector<8x128xf32>
    %345 = arith.addf %343, %344 : vector<8x128xf32>
    %cst_141 = arith.constant 5.000000e-01 : f32
    %346 = vector.broadcast %cst_141 : f32 to vector<8x128xf32>
    %347 = arith.mulf %346, %345 : vector<8x128xf32>
    %348 = arith.select %8, %343, %347 : vector<8x128xi1>, vector<8x128xf32>
    %349 = vector.extract_strided_slice %348 {offsets = [0, 0], sizes = [8, 32], strides = [1, 1]} : vector<8x128xf32> to vector<8x32xf32>
    %350 = vector.extract_strided_slice %348 {offsets = [0, 32], sizes = [8, 32], strides = [1, 1]} : vector<8x128xf32> to vector<8x32xf32>
    %351 = vector.extract_strided_slice %348 {offsets = [0, 64], sizes = [8, 32], strides = [1, 1]} : vector<8x128xf32> to vector<8x32xf32>
    %352 = vector.extract_strided_slice %348 {offsets = [0, 96], sizes = [8, 32], strides = [1, 1]} : vector<8x128xf32> to vector<8x32xf32>
    %353 = arith.mulf %350, %297 : vector<8x32xf32>
    %354 = arith.mulf %349, %351 : vector<8x32xf32>
    %355 = arith.addf %353, %354 : vector<8x32xf32>
    %356 = math.tanh %355 : vector<8x32xf32>
    %357 = arith.mulf %352, %356 : vector<8x32xf32>
    %358 = tpu.concatenate %357, %9 in 1 : vector<8x32xf32>, vector<8x96xf32> -> vector<8x128xf32>
    %c2_142 = arith.constant 2 : index
    %c0_143 = arith.constant 0 : index
    %c0_144 = arith.constant 0 : index
    %359 = vector.load %arg6[%c2_142, %c0_143, %c0_144] : memref<8x8x128xf32, #tpu.memory_space<vmem>>, vector<1x8x128xf32>
    %360 = vector.shape_cast %359 : vector<1x8x128xf32> to vector<8x128xf32>
    %361 = vector.shape_cast %358 : vector<8x128xf32> to vector<1x8x128xf32>
    tpu.vector_store %arg6[%c2_142, %c0_143, %c0_144], %361 {strides = array<i32>} : memref<8x8x128xf32, #tpu.memory_space<vmem>>, vector<1x8x128xf32>,
    %c6_145 = arith.constant 6 : index
    %c0_146 = arith.constant 0 : index
    %c0_147 = arith.constant 0 : index
    %362 = vector.load %arg1[%c6_145, %c0_146, %c0_147] : memref<8x8x128xbf16, #tpu.memory_space<vmem>>, vector<1x8x128xbf16>
    %363 = vector.shape_cast %362 : vector<1x8x128xbf16> to vector<8x128xbf16>
    %364 = arith.extf %363 : vector<8x128xbf16> to vector<8x128xf32>
    %365 = arith.truncf %329 : vector<8x128xf32> to vector<8x128xbf16>
    %c0_148 = arith.constant 0 : index
    %c0_149 = arith.constant 0 : index
    %366 = vector.load %arg3[%c0_148, %c0_149] : memref<128x128xbf16, #tpu.memory_space<vmem>>, vector<128x128xbf16>
    %cst_150 = arith.constant dense<0.000000e+00> : vector<8x128xf32>
    %367 = tpu.matmul %365, %366, %cst_150 {dimension_numbers = #tpu.dot_dimension_numbers<[1], [0], [0], [1], [0, 0, 1, 1], [], []>} : vector<8x128xbf16>, vector<128x128xbf16>, vector<8x128xf32> -> vector<8x128xf32>
    %368 = arith.addf %364, %367 : vector<8x128xf32>
    %cst_151 = arith.constant 5.000000e-01 : f32
    %369 = vector.broadcast %cst_151 : f32 to vector<8x128xf32>
    %370 = arith.mulf %369, %368 : vector<8x128xf32>
    %371 = arith.select %8, %368, %370 : vector<8x128xi1>, vector<8x128xf32>
    %372 = math.tanh %371 : vector<8x128xf32>
    %cst_152 = arith.constant 1.000000e+00 : f32
    %373 = vector.broadcast %cst_152 : f32 to vector<8x128xf32>
    %374 = arith.addf %372, %373 : vector<8x128xf32>
    %cst_153 = arith.constant 5.000000e-01 : f32
    %375 = vector.broadcast %cst_153 : f32 to vector<8x128xf32>
    %376 = arith.mulf %375, %374 : vector<8x128xf32>
    %377 = arith.select %8, %372, %376 : vector<8x128xi1>, vector<8x128xf32>
    %378 = vector.extract_strided_slice %377 {offsets = [0, 0], sizes = [8, 32], strides = [1, 1]} : vector<8x128xf32> to vector<8x32xf32>
    %379 = vector.extract_strided_slice %377 {offsets = [0, 32], sizes = [8, 32], strides = [1, 1]} : vector<8x128xf32> to vector<8x32xf32>
    %380 = vector.extract_strided_slice %377 {offsets = [0, 64], sizes = [8, 32], strides = [1, 1]} : vector<8x128xf32> to vector<8x32xf32>
    %381 = vector.extract_strided_slice %377 {offsets = [0, 96], sizes = [8, 32], strides = [1, 1]} : vector<8x128xf32> to vector<8x32xf32>
    %382 = arith.mulf %379, %326 : vector<8x32xf32>
    %383 = arith.mulf %378, %380 : vector<8x32xf32>
    %384 = arith.addf %382, %383 : vector<8x32xf32>
    %385 = math.tanh %384 : vector<8x32xf32>
    %386 = arith.mulf %381, %385 : vector<8x32xf32>
    %387 = tpu.concatenate %386, %9 in 1 : vector<8x32xf32>, vector<8x96xf32> -> vector<8x128xf32>
    %c6_154 = arith.constant 6 : index
    %c0_155 = arith.constant 0 : index
    %c0_156 = arith.constant 0 : index
    %388 = vector.load %arg5[%c6_154, %c0_155, %c0_156] : memref<8x8x128xf32, #tpu.memory_space<vmem>>, vector<1x8x128xf32>
    %389 = vector.shape_cast %388 : vector<1x8x128xf32> to vector<8x128xf32>
    %390 = vector.shape_cast %387 : vector<8x128xf32> to vector<1x8x128xf32>
    tpu.vector_store %arg5[%c6_154, %c0_155, %c0_156], %390 {strides = array<i32>} : memref<8x8x128xf32, #tpu.memory_space<vmem>>, vector<1x8x128xf32>,
    %c1_157 = arith.constant 1 : index
    %c0_158 = arith.constant 0 : index
    %c0_159 = arith.constant 0 : index
    %391 = vector.load %arg2[%c1_157, %c0_158, %c0_159] : memref<8x8x128xbf16, #tpu.memory_space<vmem>>, vector<1x8x128xbf16>
    %392 = vector.shape_cast %391 : vector<1x8x128xbf16> to vector<8x128xbf16>
    %393 = arith.extf %392 : vector<8x128xbf16> to vector<8x128xf32>
    %394 = arith.truncf %358 : vector<8x128xf32> to vector<8x128xbf16>
    %c0_160 = arith.constant 0 : index
    %c0_161 = arith.constant 0 : index
    %395 = vector.load %arg4[%c0_160, %c0_161] : memref<128x128xbf16, #tpu.memory_space<vmem>>, vector<128x128xbf16>
    %cst_162 = arith.constant dense<0.000000e+00> : vector<8x128xf32>
    %396 = tpu.matmul %394, %395, %cst_162 {dimension_numbers = #tpu.dot_dimension_numbers<[1], [0], [0], [1], [0, 0, 1, 1], [], []>} : vector<8x128xbf16>, vector<128x128xbf16>, vector<8x128xf32> -> vector<8x128xf32>
    %397 = arith.addf %393, %396 : vector<8x128xf32>
    %cst_163 = arith.constant 5.000000e-01 : f32
    %398 = vector.broadcast %cst_163 : f32 to vector<8x128xf32>
    %399 = arith.mulf %398, %397 : vector<8x128xf32>
    %400 = arith.select %8, %397, %399 : vector<8x128xi1>, vector<8x128xf32>
    %401 = math.tanh %400 : vector<8x128xf32>
    %cst_164 = arith.constant 1.000000e+00 : f32
    %402 = vector.broadcast %cst_164 : f32 to vector<8x128xf32>
    %403 = arith.addf %401, %402 : vector<8x128xf32>
    %cst_165 = arith.constant 5.000000e-01 : f32
    %404 = vector.broadcast %cst_165 : f32 to vector<8x128xf32>
    %405 = arith.mulf %404, %403 : vector<8x128xf32>
    %406 = arith.select %8, %401, %405 : vector<8x128xi1>, vector<8x128xf32>
    %407 = vector.extract_strided_slice %406 {offsets = [0, 0], sizes = [8, 32], strides = [1, 1]} : vector<8x128xf32> to vector<8x32xf32>
    %408 = vector.extract_strided_slice %406 {offsets = [0, 32], sizes = [8, 32], strides = [1, 1]} : vector<8x128xf32> to vector<8x32xf32>
    %409 = vector.extract_strided_slice %406 {offsets = [0, 64], sizes = [8, 32], strides = [1, 1]} : vector<8x128xf32> to vector<8x32xf32>
    %410 = vector.extract_strided_slice %406 {offsets = [0, 96], sizes = [8, 32], strides = [1, 1]} : vector<8x128xf32> to vector<8x32xf32>
    %411 = arith.mulf %408, %355 : vector<8x32xf32>
    %412 = arith.mulf %407, %409 : vector<8x32xf32>
    %413 = arith.addf %411, %412 : vector<8x32xf32>
    %414 = math.tanh %413 : vector<8x32xf32>
    %415 = arith.mulf %410, %414 : vector<8x32xf32>
    %416 = tpu.concatenate %415, %9 in 1 : vector<8x32xf32>, vector<8x96xf32> -> vector<8x128xf32>
    %c1_166 = arith.constant 1 : index
    %c0_167 = arith.constant 0 : index
    %c0_168 = arith.constant 0 : index
    %417 = vector.load %arg6[%c1_166, %c0_167, %c0_168] : memref<8x8x128xf32, #tpu.memory_space<vmem>>, vector<1x8x128xf32>
    %418 = vector.shape_cast %417 : vector<1x8x128xf32> to vector<8x128xf32>
    %419 = vector.shape_cast %416 : vector<8x128xf32> to vector<1x8x128xf32>
    tpu.vector_store %arg6[%c1_166, %c0_167, %c0_168], %419 {strides = array<i32>} : memref<8x8x128xf32, #tpu.memory_space<vmem>>, vector<1x8x128xf32>,
    %c7_169 = arith.constant 7 : index
    %c0_170 = arith.constant 0 : index
    %c0_171 = arith.constant 0 : index
    %420 = vector.load %arg1[%c7_169, %c0_170, %c0_171] : memref<8x8x128xbf16, #tpu.memory_space<vmem>>, vector<1x8x128xbf16>
    %421 = vector.shape_cast %420 : vector<1x8x128xbf16> to vector<8x128xbf16>
    %422 = arith.extf %421 : vector<8x128xbf16> to vector<8x128xf32>
    %423 = arith.truncf %387 : vector<8x128xf32> to vector<8x128xbf16>
    %c0_172 = arith.constant 0 : index
    %c0_173 = arith.constant 0 : index
    %424 = vector.load %arg3[%c0_172, %c0_173] : memref<128x128xbf16, #tpu.memory_space<vmem>>, vector<128x128xbf16>
    %cst_174 = arith.constant dense<0.000000e+00> : vector<8x128xf32>
    %425 = tpu.matmul %423, %424, %cst_174 {dimension_numbers = #tpu.dot_dimension_numbers<[1], [0], [0], [1], [0, 0, 1, 1], [], []>} : vector<8x128xbf16>, vector<128x128xbf16>, vector<8x128xf32> -> vector<8x128xf32>
    %426 = arith.addf %422, %425 : vector<8x128xf32>
    %cst_175 = arith.constant 5.000000e-01 : f32
    %427 = vector.broadcast %cst_175 : f32 to vector<8x128xf32>
    %428 = arith.mulf %427, %426 : vector<8x128xf32>
    %429 = arith.select %8, %426, %428 : vector<8x128xi1>, vector<8x128xf32>
    %430 = math.tanh %429 : vector<8x128xf32>
    %cst_176 = arith.constant 1.000000e+00 : f32
    %431 = vector.broadcast %cst_176 : f32 to vector<8x128xf32>
    %432 = arith.addf %430, %431 : vector<8x128xf32>
    %cst_177 = arith.constant 5.000000e-01 : f32
    %433 = vector.broadcast %cst_177 : f32 to vector<8x128xf32>
    %434 = arith.mulf %433, %432 : vector<8x128xf32>
    %435 = arith.select %8, %430, %434 : vector<8x128xi1>, vector<8x128xf32>
    %436 = vector.extract_strided_slice %435 {offsets = [0, 0], sizes = [8, 32], strides = [1, 1]} : vector<8x128xf32> to vector<8x32xf32>
    %437 = vector.extract_strided_slice %435 {offsets = [0, 32], sizes = [8, 32], strides = [1, 1]} : vector<8x128xf32> to vector<8x32xf32>
    %438 = vector.extract_strided_slice %435 {offsets = [0, 64], sizes = [8, 32], strides = [1, 1]} : vector<8x128xf32> to vector<8x32xf32>
    %439 = vector.extract_strided_slice %435 {offsets = [0, 96], sizes = [8, 32], strides = [1, 1]} : vector<8x128xf32> to vector<8x32xf32>
    %440 = arith.mulf %437, %384 : vector<8x32xf32>
    %441 = arith.mulf %436, %438 : vector<8x32xf32>
    %442 = arith.addf %440, %441 : vector<8x32xf32>
    %443 = math.tanh %442 : vector<8x32xf32>
    %444 = arith.mulf %439, %443 : vector<8x32xf32>
    %445 = tpu.concatenate %444, %9 in 1 : vector<8x32xf32>, vector<8x96xf32> -> vector<8x128xf32>
    %c7_178 = arith.constant 7 : index
    %c0_179 = arith.constant 0 : index
    %c0_180 = arith.constant 0 : index
    %446 = vector.load %arg5[%c7_178, %c0_179, %c0_180] : memref<8x8x128xf32, #tpu.memory_space<vmem>>, vector<1x8x128xf32>
    %447 = vector.shape_cast %446 : vector<1x8x128xf32> to vector<8x128xf32>
    %448 = vector.shape_cast %445 : vector<8x128xf32> to vector<1x8x128xf32>
    tpu.vector_store %arg5[%c7_178, %c0_179, %c0_180], %448 {strides = array<i32>} : memref<8x8x128xf32, #tpu.memory_space<vmem>>, vector<1x8x128xf32>,
    %c0_181 = arith.constant 0 : index
    %c0_182 = arith.constant 0 : index
    %c0_183 = arith.constant 0 : index
    %449 = vector.load %arg2[%c0_181, %c0_182, %c0_183] : memref<8x8x128xbf16, #tpu.memory_space<vmem>>, vector<1x8x128xbf16>
    %450 = vector.shape_cast %449 : vector<1x8x128xbf16> to vector<8x128xbf16>
    %451 = arith.extf %450 : vector<8x128xbf16> to vector<8x128xf32>
    %452 = arith.truncf %416 : vector<8x128xf32> to vector<8x128xbf16>
    %c0_184 = arith.constant 0 : index
    %c0_185 = arith.constant 0 : index
    %453 = vector.load %arg4[%c0_184, %c0_185] : memref<128x128xbf16, #tpu.memory_space<vmem>>, vector<128x128xbf16>
    %cst_186 = arith.constant dense<0.000000e+00> : vector<8x128xf32>
    %454 = tpu.matmul %452, %453, %cst_186 {dimension_numbers = #tpu.dot_dimension_numbers<[1], [0], [0], [1], [0, 0, 1, 1], [], []>} : vector<8x128xbf16>, vector<128x128xbf16>, vector<8x128xf32> -> vector<8x128xf32>
    %455 = arith.addf %451, %454 : vector<8x128xf32>
    %cst_187 = arith.constant 5.000000e-01 : f32
    %456 = vector.broadcast %cst_187 : f32 to vector<8x128xf32>
    %457 = arith.mulf %456, %455 : vector<8x128xf32>
    %458 = arith.select %8, %455, %457 : vector<8x128xi1>, vector<8x128xf32>
    %459 = math.tanh %458 : vector<8x128xf32>
    %cst_188 = arith.constant 1.000000e+00 : f32
    %460 = vector.broadcast %cst_188 : f32 to vector<8x128xf32>
    %461 = arith.addf %459, %460 : vector<8x128xf32>
    %cst_189 = arith.constant 5.000000e-01 : f32
    %462 = vector.broadcast %cst_189 : f32 to vector<8x128xf32>
    %463 = arith.mulf %462, %461 : vector<8x128xf32>
    %464 = arith.select %8, %459, %463 : vector<8x128xi1>, vector<8x128xf32>
    %465 = vector.extract_strided_slice %464 {offsets = [0, 0], sizes = [8, 32], strides = [1, 1]} : vector<8x128xf32> to vector<8x32xf32>
    %466 = vector.extract_strided_slice %464 {offsets = [0, 32], sizes = [8, 32], strides = [1, 1]} : vector<8x128xf32> to vector<8x32xf32>
    %467 = vector.extract_strided_slice %464 {offsets = [0, 64], sizes = [8, 32], strides = [1, 1]} : vector<8x128xf32> to vector<8x32xf32>
    %468 = vector.extract_strided_slice %464 {offsets = [0, 96], sizes = [8, 32], strides = [1, 1]} : vector<8x128xf32> to vector<8x32xf32>
    %469 = arith.mulf %466, %413 : vector<8x32xf32>
    %470 = arith.mulf %465, %467 : vector<8x32xf32>
    %471 = arith.addf %469, %470 : vector<8x32xf32>
    %472 = math.tanh %471 : vector<8x32xf32>
    %473 = arith.mulf %468, %472 : vector<8x32xf32>
    %474 = tpu.concatenate %473, %9 in 1 : vector<8x32xf32>, vector<8x96xf32> -> vector<8x128xf32>
    %c0_190 = arith.constant 0 : index
    %c0_191 = arith.constant 0 : index
    %c0_192 = arith.constant 0 : index
    %475 = vector.load %arg6[%c0_190, %c0_191, %c0_192] : memref<8x8x128xf32, #tpu.memory_space<vmem>>, vector<1x8x128xf32>
    %476 = vector.shape_cast %475 : vector<1x8x128xf32> to vector<8x128xf32>
    %477 = vector.shape_cast %474 : vector<8x128xf32> to vector<1x8x128xf32>
    tpu.vector_store %arg6[%c0_190, %c0_191, %c0_192], %477 {strides = array<i32>} : memref<8x8x128xf32, #tpu.memory_space<vmem>>, vector<1x8x128xf32>,
    %c0_193 = arith.constant 0 : index
    %c0_194 = arith.constant 0 : index
    %478 = vector.load %arg7[%c0_193, %c0_194] : memref<8x128xf32, #tpu.memory_space<vmem>>, vector<8x128xf32>
    tpu.vector_store %arg7[%c0_193, %c0_194], %445 {strides = array<i32>} : memref<8x128xf32, #tpu.memory_space<vmem>>, vector<8x128xf32>,
    %c0_195 = arith.constant 0 : index
    %c0_196 = arith.constant 0 : index
    %479 = vector.load %arg8[%c0_195, %c0_196] : memref<8x32xf32, #tpu.memory_space<vmem>>, vector<8x32xf32>
    tpu.vector_store %arg8[%c0_195, %c0_196], %442 {strides = array<i32>} : memref<8x32xf32, #tpu.memory_space<vmem>>, vector<8x32xf32>,
    %c0_197 = arith.constant 0 : index
    %c0_198 = arith.constant 0 : index
    %480 = vector.load %arg9[%c0_197, %c0_198] : memref<8x128xf32, #tpu.memory_space<vmem>>, vector<8x128xf32>
    tpu.vector_store %arg9[%c0_197, %c0_198], %474 {strides = array<i32>} : memref<8x128xf32, #tpu.memory_space<vmem>>, vector<8x128xf32>,
    %c0_199 = arith.constant 0 : index
    %c0_200 = arith.constant 0 : index
    %481 = vector.load %arg10[%c0_199, %c0_200] : memref<8x32xf32, #tpu.memory_space<vmem>>, vector<8x32xf32>
    tpu.vector_store %arg10[%c0_199, %c0_200], %471 {strides = array<i32>} : memref<8x32xf32, #tpu.memory_space<vmem>>, vector<8x32xf32>,
    return
  }
  func.func @transform_0(%arg0: i32) -> (i32, i32, i32) {
    %c0_i32 = arith.constant 0 : i32
    %c0_i32_0 = arith.constant 0 : i32
    %c0_i32_1 = arith.constant 0 : i32
    return %arg0, %c0_i32, %c0_i32_0 : i32, i32, i32
  }
  func.func @transform_1(%arg0: i32) -> (i32, i32, i32) {
    %c0_i32 = arith.constant 0 : i32
    %0 = arith.subi %c0_i32, %arg0 : i32
    %c0_i32_0 = arith.constant 0 : i32
    %c0_i32_1 = arith.constant 0 : i32
    %c0_i32_2 = arith.constant 0 : i32
    return %0, %c0_i32_0, %c0_i32_1 : i32, i32, i32
  }
  func.func @transform_2(%arg0: i32) -> (i32, i32) {
    %c0_i32 = arith.constant 0 : i32
    %c0_i32_0 = arith.constant 0 : i32
    %c0_i32_1 = arith.constant 0 : i32
    return %c0_i32, %c0_i32_0 : i32, i32
  }
  func.func @transform_3(%arg0: i32) -> (i32, i32) {
    %c0_i32 = arith.constant 0 : i32
    %c0_i32_0 = arith.constant 0 : i32
    %c0_i32_1 = arith.constant 0 : i32
    return %c0_i32, %c0_i32_0 : i32, i32
  }
  func.func @transform_4(%arg0: i32) -> (i32, i32, i32) {
    %c0_i32 = arith.constant 0 : i32
    %c0_i32_0 = arith.constant 0 : i32
    %c0_i32_1 = arith.constant 0 : i32
    return %arg0, %c0_i32, %c0_i32_0 : i32, i32, i32
  }
  func.func @transform_5(%arg0: i32) -> (i32, i32, i32) {
    %c0_i32 = arith.constant 0 : i32
    %0 = arith.subi %c0_i32, %arg0 : i32
    %c0_i32_0 = arith.constant 0 : i32
    %c0_i32_1 = arith.constant 0 : i32
    %c0_i32_2 = arith.constant 0 : i32
    return %0, %c0_i32_0, %c0_i32_1 : i32, i32, i32
  }
}

</mosaic_0001>

<llo_original>
// kernel: rnn_encoder_forward.2
$region0: #{rnn_encoder_forward.2}
  #allocation0 [shape = 'u32[]', space=smem, size = 0x4, offset = 0x4, fixed_abs, tag = 'smem constant byte address 0x4 - core index']
  #allocation1 [shape = 'u32[144,128]{1,0:T(1,128)}', space=vmem, size = 0x12000, scoped, tag = 'internal scratch']
  #allocation2 [shape = 'f32[8,128]{1,0:T(8,128)}', space=vmem, size = 0x1000, scoped, tag = 'scratch operand']
  #allocation3 [shape = 'f32[8,32]{1,0:T(8,128)}', space=vmem, size = 0x1000, scoped, tag = 'scratch operand']
  #allocation4 [shape = 'f32[8,128]{1,0:T(8,128)}', space=vmem, size = 0x1000, scoped, tag = 'scratch operand']
  #allocation5 [shape = 'f32[8,32]{1,0:T(8,128)}', space=vmem, size = 0x1000, scoped, tag = 'scratch operand']
  %s0 = inlined_call_operand.vmem [shape: bf16[8,8,128], index: 0, kind: input, shape index: {}]
  %s1 = inlined_call_operand.vmem [shape: bf16[8,8,128], index: 1, kind: input, shape index: {}]
  %s2 = inlined_call_operand.vmem [shape: bf16[128,128], index: 2, kind: input, shape index: {}]
  %s3 = inlined_call_operand.vmem [shape: bf16[128,128], index: 3, kind: input, shape index: {}]
  %s4 = inlined_call_operand.vmem [shape: f32[8,8,128], index: 4, kind: output, shape index: {0}]
  %s5 = inlined_call_operand.vmem [shape: f32[8,8,128], index: 5, kind: output, shape index: {1}]
  %6 = xla_tuple %s4, %s5
  %s7 = sld [smem:[#allocation0]]
  $region38: #{rnn_encoder_forward.2} parent=0
    _
  %s9 = ssub.s32 1, %s7
  %s10 = scalar_select 0, %s9, %s7
  // Predicated region
  $region2: #{rnn_encoder_forward.2} parent=0 // pred_check
    _
  $region3: #{rnn_encoder_forward.2} parent=0 // pred_check_branch
    %12 = sbr.rel (0) target = $region5
  $region4: #{rnn_encoder_forward.2} parent=0 // pred_region
    _
  $region5: #{rnn_encoder_forward.2} parent=0 // pred_fallthru
    _
  // Predicated region
  $region6: #{rnn_encoder_forward.2} parent=0 // pred_check
    _
  $region7: #{rnn_encoder_forward.2} parent=0 // pred_check_branch
    %14 = sbr.rel (0) target = $region9
  $region8: #{rnn_encoder_forward.2} parent=0 // pred_region
    %s15 = ssub.s32 0, 0
    %s16 = smul.u32 8, %s15
    %p17 = scmp.lt.s32.totalorder %s16, 7
    %s18 = scalar_select %p17, %s16, 7
    %s19 = smul.addr %s18, 4
    %s20 = scalar_lea.vmem %s1, %s19
    %s21 = ssub.s32 0, 0
    %s22 = smul.u32 8, %s21
  $region9: #{rnn_encoder_forward.2} parent=0 // pred_fallthru
    _
  // Predicated region
  $region10: #{rnn_encoder_forward.2} parent=0 // pred_check
    _
  $region11: #{rnn_encoder_forward.2} parent=0 // pred_check_branch
    %24 = sbr.rel (0) target = $region13
  $region12: #{rnn_encoder_forward.2} parent=0 // pred_region
    _
  $region13: #{rnn_encoder_forward.2} parent=0 // pred_fallthru
    _
  // Predicated region
  $region14: #{rnn_encoder_forward.2} parent=0 // pred_check
    _
  $region15: #{rnn_encoder_forward.2} parent=0 // pred_check_branch
    %26 = sbr.rel (0) target = $region17
  $region16: #{rnn_encoder_forward.2} parent=0 // pred_region
    _
  $region17: #{rnn_encoder_forward.2} parent=0 // pred_fallthru
    _
  %s27 = ssub.s32 0, 0
  %s28 = smul.u32 8, %s27
  %p29 = scmp.lt.s32.totalorder %s28, 7
  %s30 = scalar_select %p29, %s28, 7
  %s31 = smul.addr %s30, 4
  %s32 = scalar_lea.vmem %s1, %s31
  %s33 = ssub.s32 0, 0
  %s34 = smul.u32 8, %s33
  %p35 = scmp.lt.s32.totalorder %s34, 7
  %s36 = scalar_select %p35, %s34, 7
  %s37 = smul.addr %s36, 8
  %s38 = scalar_lea.vmem %s5, %s37
  %s39 = ssub.s32 0, 0
  %s40 = smul.u32 8, %s39
  %p41 = scmp.lt.s32.totalorder %s40, 7
  %s42 = scalar_select %p41, %s40, 7
  %s43 = smul.addr %s42, 4
  %s44 = scalar_lea.vmem %s1, %s43
  %s45 = ssub.s32 0, 0
  %s46 = smul.u32 8, %s45
  %s47 = ssub.s32 0, 0
  %s48 = smul.u32 8, %s47
  %p49 = scmp.lt.s32.totalorder %s48, 7
  %s50 = scalar_select %p49, %s48, 7
  %s51 = smul.addr %s50, 8
  %s52 = scalar_lea.vmem %s5, %s51
  %s53 = ssub.s32 0, 0
  %s54 = smul.u32 8, %s53
  %p56 = scmp.eq.s32.totalorder 0, 0
  // Predicated region
  $region18: #{rnn_encoder_forward.2} parent=0 // pred_check
    %p57 = pneg %p56
  $region19: #{rnn_encoder_forward.2} parent=0 // pred_check_branch
    %59 = sbr.rel (%p57) target = $region21
  $region20: #{rnn_encoder_forward.2} parent=0 // pred_region
    %60 = vst [vmem:[#allocation2] sm:$0xff] 0.0
    %vm61 = vcmask 261120
    %62 = vst.msk [vmem:[#allocation3] sm:$0xff] %vm61, 0.0
    %63 = vst [vmem:[#allocation4] sm:$0xff] 0.0
    %64 = vst.msk [vmem:[#allocation5] sm:$0xff] %vm61, 0.0
  $region21: #{rnn_encoder_forward.2} parent=0 // pred_fallthru
    _
  %v65 = vlaneseq
  %v66 = vand.u32 %v65, 127
  %vm67 = vcmp.ge.s32.totalorder %v66, 64
  %vm68 = vcmp.lt.s32.totalorder %v66, 96
  %vm69 = vmand %vm67, %vm68
  %v70 = vld [vmem:[#allocation2] sm:$0xff]
  %v71 = vld [vmem:[#allocation3] sm:$0xff]
  %v72 = vld [vmem:[#allocation4] sm:$0xff]
  %v73 = vld [vmem:[#allocation5] sm:$0xff]
  %v74 = vld [vmem:[%s0] sm:$0xf]
  %v75 = vunpack.c.l.bf16 %v74
  %v76 = vpack.c.bf16 %v70, %v70
  %v77 = vld [vmem:[%s2] sm:$0xf]
  %v78 = vld [vmem:[%s2 + $0x4] sm:$0xf]
  %v79 = vld [vmem:[%s2 + $0x8] sm:$0xf]
  %v80 = vld [vmem:[%s2 + $0xc] sm:$0xf]
  %v81 = vld [vmem:[%s2 + $0x10] sm:$0xf]
  %v82 = vld [vmem:[%s2 + $0x14] sm:$0xf]
  %v83 = vld [vmem:[%s2 + $0x18] sm:$0xf]
  %v84 = vld [vmem:[%s2 + $0x1c] sm:$0xf]
  %v85 = vld [vmem:[%s2 + $0x20] sm:$0xf]
  %v86 = vld [vmem:[%s2 + $0x24] sm:$0xf]
  %v87 = vld [vmem:[%s2 + $0x28] sm:$0xf]
  %v88 = vld [vmem:[%s2 + $0x2c] sm:$0xf]
  %v89 = vld [vmem:[%s2 + $0x30] sm:$0xf]
  %v90 = vld [vmem:[%s2 + $0x34] sm:$0xf]
  %v91 = vld [vmem:[%s2 + $0x38] sm:$0xf]
  %v92 = vld [vmem:[%s2 + $0x3c] sm:$0xf]
  %v109 = vunpack.c.l.b16 %v77
  %v110 = vunpack.c.l.b16 %v78
  %v111 = vunpack.c.l.b16 %v79
  %v112 = vunpack.c.l.b16 %v80
  %v113 = vunpack.c.l.b16 %v81
  %v114 = vunpack.c.l.b16 %v82
  %v115 = vunpack.c.l.b16 %v83
  %v116 = vunpack.c.l.b16 %v84
  %v117 = vunpack.c.l.b16 %v85
  %v118 = vunpack.c.l.b16 %v86
  %v119 = vunpack.c.l.b16 %v87
  %v120 = vunpack.c.l.b16 %v88
  %v121 = vunpack.c.l.b16 %v89
  %v122 = vunpack.c.l.b16 %v90
  %v123 = vunpack.c.l.b16 %v91
  %v124 = vunpack.c.l.b16 %v92
  %v125 = vpack.c.b16 %v110, %v109
  %v126 = vpack.c.b16 %v112, %v111
  %v127 = vpack.c.b16 %v114, %v113
  %v128 = vpack.c.b16 %v116, %v115
  %v129 = vpack.c.b16 %v118, %v117
  %v130 = vpack.c.b16 %v120, %v119
  %v131 = vpack.c.b16 %v122, %v121
  %v132 = vpack.c.b16 %v124, %v123
  %141 = vmatprep.subr.bf16.mxu0 0
  %142 = vmatpush1.bf16.msra.mxu0 %v125
  %143 = vmatprep.subr.bf16.mxu0 0
  %144 = vmatpush1.bf16.msra.mxu0 %v126
  %145 = vmatprep.subr.bf16.mxu0 0
  %146 = vmatpush1.bf16.msra.mxu0 %v127
  %147 = vmatprep.subr.bf16.mxu0 0
  %148 = vmatpush1.bf16.msra.mxu0 %v128
  %149 = vmatprep.subr.bf16.mxu0 0
  %150 = vmatpush1.bf16.msra.mxu0 %v129
  %151 = vmatprep.subr.bf16.mxu0 0
  %152 = vmatpush1.bf16.msra.mxu0 %v130
  %153 = vmatprep.subr.bf16.mxu0 0
  %154 = vmatpush1.bf16.msra.mxu0 %v131
  %155 = vmatprep.subr.bf16.mxu0 0
  %156 = vmatpush1.bf16.msra.mxu0 %v132
  %157 = vmatprep.subr.bf16.mxu0 0
  %158 = vmatpush1.bf16.msra.mxu0 0
  %159 = vmatprep.subr.bf16.mxu0 0
  %160 = vmatpush1.bf16.msra.mxu0 0
  %161 = vmatprep.subr.bf16.mxu0 0
  %162 = vmatpush1.bf16.msra.mxu0 0
  %163 = vmatprep.subr.bf16.mxu0 0
  %164 = vmatpush1.bf16.msra.mxu0 0
  %165 = vmatprep.subr.bf16.mxu0 0
  %166 = vmatpush1.bf16.msra.mxu0 0
  %167 = vmatprep.subr.bf16.mxu0 0
  %168 = vmatpush1.bf16.msra.mxu0 0
  %169 = vmatprep.subr.bf16.mxu0 0
  %170 = vmatpush1.bf16.msra.mxu0 0
  %171 = vmatprep.subr.bf16.mxu0 0
  %172 = vmatpush1.bf16.msra.mxu0 0
  %173 = vmatprep.mubr.bf16.mxu0 0
  %174 = vmatmul.mubr.bf16.gmra.mrb[0].mxu0 %v76
  %v175 = vpop.f32.mrb[0].mxu0
  %v176 = vadd.f32 0.0, %v175
  %v177 = vpop.f32.mrb[0].mxu0
  %v178 = vpop.f32.mrb[0].mxu0
  %v179 = vpop.f32.mrb[0].mxu0
  %180 = vdwg.mxu0
  %v181 = vadd.f32 %v75, %v176
  %v182 = vmul.f32 %v181, 0.5
  %v183 = vsel %vm69, %v181, %v182
  %v184 = vtanh.pop %v183
  %v185 = vadd.f32 %v184, 1.0
  %v186 = vmul.f32 %v185, 0.5
  %v187 = vsel %vm69, %v184, %v186
  %189 = vrot.lane.b32.xlu0 %v71, 32
  %v190 = vpop.permute.xlu0 %189
  %v192 = vmul.f32 %v187, %v190
  %194 = vrot.lane.b32.xlu0 %v187, 64
  %v195 = vpop.permute.xlu0 %194
  %v197 = vmul.f32 %v187, %v195
  %199 = vrot.lane.b32.xlu0 %v197, 32
  %v200 = vpop.permute.xlu0 %199
  %v202 = vadd.f32 %v192, %v200
  %v203 = vtanh.pop %v202
  %205 = vrot.lane.b32.xlu0 %v203, 64
  %v206 = vpop.permute.xlu0 %205
  %v208 = vmul.f32 %v187, %v206
  %210 = vrot.lane.b32.xlu0 %v208, 32
  %v211 = vpop.permute.xlu0 %210
  %vm213 = vcmask 261120
  %v214 = vsel %vm213, %v211, 0.0
  %215 = vst [vmem:[%s4] sm:$0xff] %v214
  %s216 = scalar_lea.vmem %s44, 28
  %v217 = vld [vmem:[%s216] sm:$0xf]
  %v218 = vunpack.c.l.bf16 %v217
  %v219 = vpack.c.bf16 %v72, %v72
  %v220 = vld [vmem:[%s3] sm:$0xf]
  %v221 = vld [vmem:[%s3 + $0x4] sm:$0xf]
  %v222 = vld [vmem:[%s3 + $0x8] sm:$0xf]
  %v223 = vld [vmem:[%s3 + $0xc] sm:$0xf]
  %v224 = vld [vmem:[%s3 + $0x10] sm:$0xf]
  %v225 = vld [vmem:[%s3 + $0x14] sm:$0xf]
  %v226 = vld [vmem:[%s3 + $0x18] sm:$0xf]
  %v227 = vld [vmem:[%s3 + $0x1c] sm:$0xf]
  %v228 = vld [vmem:[%s3 + $0x20] sm:$0xf]
  %v229 = vld [vmem:[%s3 + $0x24] sm:$0xf]
  %v230 = vld [vmem:[%s3 + $0x28] sm:$0xf]
  %v231 = vld [vmem:[%s3 + $0x2c] sm:$0xf]
  %v232 = vld [vmem:[%s3 + $0x30] sm:$0xf]
  %v233 = vld [vmem:[%s3 + $0x34] sm:$0xf]
  %v234 = vld [vmem:[%s3 + $0x38] sm:$0xf]
  %v235 = vld [vmem:[%s3 + $0x3c] sm:$0xf]
  %v252 = vunpack.c.l.b16 %v220
  %v253 = vunpack.c.l.b16 %v221
  %v254 = vunpack.c.l.b16 %v222
  %v255 = vunpack.c.l.b16 %v223
  %v256 = vunpack.c.l.b16 %v224
  %v257 = vunpack.c.l.b16 %v225
  %v258 = vunpack.c.l.b16 %v226
  %v259 = vunpack.c.l.b16 %v227
  %v260 = vunpack.c.l.b16 %v228
  %v261 = vunpack.c.l.b16 %v229
  %v262 = vunpack.c.l.b16 %v230
  %v263 = vunpack.c.l.b16 %v231
  %v264 = vunpack.c.l.b16 %v232
  %v265 = vunpack.c.l.b16 %v233
  %v266 = vunpack.c.l.b16 %v234
  %v267 = vunpack.c.l.b16 %v235
  %v268 = vpack.c.b16 %v253, %v252
  %v269 = vpack.c.b16 %v255, %v254
  %v270 = vpack.c.b16 %v257, %v256
  %v271 = vpack.c.b16 %v259, %v258
  %v272 = vpack.c.b16 %v261, %v260
  %v273 = vpack.c.b16 %v263, %v262
  %v274 = vpack.c.b16 %v265, %v264
  %v275 = vpack.c.b16 %v267, %v266
  %284 = vmatprep.subr.bf16.mxu0 0
  %285 = vmatpush1.bf16.msra.mxu0 %v268
  %286 = vmatprep.subr.bf16.mxu0 0
  %287 = vmatpush1.bf16.msra.mxu0 %v269
  %288 = vmatprep.subr.bf16.mxu0 0
  %289 = vmatpush1.bf16.msra.mxu0 %v270
  %290 = vmatprep.subr.bf16.mxu0 0
  %291 = vmatpush1.bf16.msra.mxu0 %v271
  %292 = vmatprep.subr.bf16.mxu0 0
  %293 = vmatpush1.bf16.msra.mxu0 %v272
  %294 = vmatprep.subr.bf16.mxu0 0
  %295 = vmatpush1.bf16.msra.mxu0 %v273
  %296 = vmatprep.subr.bf16.mxu0 0
  %297 = vmatpush1.bf16.msra.mxu0 %v274
  %298 = vmatprep.subr.bf16.mxu0 0
  %299 = vmatpush1.bf16.msra.mxu0 %v275
  %300 = vmatprep.subr.bf16.mxu0 0
  %301 = vmatpush1.bf16.msra.mxu0 0
  %302 = vmatprep.subr.bf16.mxu0 0
  %303 = vmatpush1.bf16.msra.mxu0 0
  %304 = vmatprep.subr.bf16.mxu0 0
  %305 = vmatpush1.bf16.msra.mxu0 0
  %306 = vmatprep.subr.bf16.mxu0 0
  %307 = vmatpush1.bf16.msra.mxu0 0
  %308 = vmatprep.subr.bf16.mxu0 0
  %309 = vmatpush1.bf16.msra.mxu0 0
  %310 = vmatprep.subr.bf16.mxu0 0
  %311 = vmatpush1.bf16.msra.mxu0 0
  %312 = vmatprep.subr.bf16.mxu0 0
  %313 = vmatpush1.bf16.msra.mxu0 0
  %314 = vmatprep.subr.bf16.mxu0 0
  %315 = vmatpush1.bf16.msra.mxu0 0
  %316 = vmatprep.mubr.bf16.mxu0 0
  %317 = vmatmul.mubr.bf16.gmra.mrb[0].mxu0 %v219
  %v318 = vpop.f32.mrb[0].mxu0
  %v319 = vadd.f32 0.0, %v318
  %v320 = vpop.f32.mrb[0].mxu0
  %v321 = vpop.f32.mrb[0].mxu0
  %v322 = vpop.f32.mrb[0].mxu0
  %323 = vdwg.mxu0
  %v324 = vadd.f32 %v218, %v319
  %v325 = vmul.f32 %v324, 0.5
  %v326 = vsel %vm69, %v324, %v325
  %v327 = vtanh.pop %v326
  %v328 = vadd.f32 %v327, 1.0
  %v329 = vmul.f32 %v328, 0.5
  %v330 = vsel %vm69, %v327, %v329
  %332 = vrot.lane.b32.xlu0 %v73, 32
  %v333 = vpop.permute.xlu0 %332
  %v335 = vmul.f32 %v330, %v333
  %337 = vrot.lane.b32.xlu0 %v330, 64
  %v338 = vpop.permute.xlu0 %337
  %v340 = vmul.f32 %v330, %v338
  %342 = vrot.lane.b32.xlu0 %v340, 32
  %v343 = vpop.permute.xlu0 %342
  %v345 = vadd.f32 %v335, %v343
  %v346 = vtanh.pop %v345
  %348 = vrot.lane.b32.xlu0 %v346, 64
  %v349 = vpop.permute.xlu0 %348
  %v351 = vmul.f32 %v330, %v349
  %353 = vrot.lane.b32.xlu0 %v351, 32
  %v354 = vpop.permute.xlu0 %353
  %v356 = vsel %vm213, %v354, 0.0
  %s357 = scalar_lea.vmem %s52, 56
  %358 = vst [vmem:[%s357] sm:$0xff] %v356
  %s359 = scalar_lea.vmem %s0, 4
  %v360 = vld [vmem:[%s359] sm:$0xf]
  %v361 = vunpack.c.l.bf16 %v360
  %v362 = vpack.c.bf16 %v214, %v214
  %v363 = vld [vmem:[%s2] sm:$0xf]
  %v364 = vld [vmem:[%s2 + $0x4] sm:$0xf]
  %v365 = vld [vmem:[%s2 + $0x8] sm:$0xf]
  %v366 = vld [vmem:[%s2 + $0xc] sm:$0xf]
  %v367 = vld [vmem:[%s2 + $0x10] sm:$0xf]
  %v368 = vld [vmem:[%s2 + $0x14] sm:$0xf]
  %v369 = vld [vmem:[%s2 + $0x18] sm:$0xf]
  %v370 = vld [vmem:[%s2 + $0x1c] sm:$0xf]
  %v371 = vld [vmem:[%s2 + $0x20] sm:$0xf]
  %v372 = vld [vmem:[%s2 + $0x24] sm:$0xf]
  %v373 = vld [vmem:[%s2 + $0x28] sm:$0xf]
  %v374 = vld [vmem:[%s2 + $0x2c] sm:$0xf]
  %v375 = vld [vmem:[%s2 + $0x30] sm:$0xf]
  %v376 = vld [vmem:[%s2 + $0x34] sm:$0xf]
  %v377 = vld [vmem:[%s2 + $0x38] sm:$0xf]
  %v378 = vld [vmem:[%s2 + $0x3c] sm:$0xf]
  %v395 = vunpack.c.l.b16 %v363
  %v396 = vunpack.c.l.b16 %v364
  %v397 = vunpack.c.l.b16 %v365
  %v398 = vunpack.c.l.b16 %v366
  %v399 = vunpack.c.l.b16 %v367
  %v400 = vunpack.c.l.b16 %v368
  %v401 = vunpack.c.l.b16 %v369
  %v402 = vunpack.c.l.b16 %v370
  %v403 = vunpack.c.l.b16 %v371
  %v404 = vunpack.c.l.b16 %v372
  %v405 = vunpack.c.l.b16 %v373
  %v406 = vunpack.c.l.b16 %v374
  %v407 = vunpack.c.l.b16 %v375
  %v408 = vunpack.c.l.b16 %v376
  %v409 = vunpack.c.l.b16 %v377
  %v410 = vunpack.c.l.b16 %v378
  %v411 = vpack.c.b16 %v396, %v395
  %v412 = vpack.c.b16 %v398, %v397
  %v413 = vpack.c.b16 %v400, %v399
  %v414 = vpack.c.b16 %v402, %v401
  %v415 = vpack.c.b16 %v404, %v403
  %v416 = vpack.c.b16 %v406, %v405
  %v417 = vpack.c.b16 %v408, %v407
  %v418 = vpack.c.b16 %v410, %v409
  %427 = vmatprep.subr.bf16.mxu0 0
  %428 = vmatpush1.bf16.msra.mxu0 %v411
  %429 = vmatprep.subr.bf16.mxu0 0
  %430 = vmatpush1.bf16.msra.mxu0 %v412
  %431 = vmatprep.subr.bf16.mxu0 0
  %432 = vmatpush1.bf16.msra.mxu0 %v413
  %433 = vmatprep.subr.bf16.mxu0 0
  %434 = vmatpush1.bf16.msra.mxu0 %v414
  %435 = vmatprep.subr.bf16.mxu0 0
  %436 = vmatpush1.bf16.msra.mxu0 %v415
  %437 = vmatprep.subr.bf16.mxu0 0
  %438 = vmatpush1.bf16.msra.mxu0 %v416
  %439 = vmatprep.subr.bf16.mxu0 0
  %440 = vmatpush1.bf16.msra.mxu0 %v417
  %441 = vmatprep.subr.bf16.mxu0 0
  %442 = vmatpush1.bf16.msra.mxu0 %v418
  %443 = vmatprep.subr.bf16.mxu0 0
  %444 = vmatpush1.bf16.msra.mxu0 0
  %445 = vmatprep.subr.bf16.mxu0 0
  %446 = vmatpush1.bf16.msra.mxu0 0
  %447 = vmatprep.subr.bf16.mxu0 0
  %448 = vmatpush1.bf16.msra.mxu0 0
  %449 = vmatprep.subr.bf16.mxu0 0
  %450 = vmatpush1.bf16.msra.mxu0 0
  %451 = vmatprep.subr.bf16.mxu0 0
  %452 = vmatpush1.bf16.msra.mxu0 0
  %453 = vmatprep.subr.bf16.mxu0 0
  %454 = vmatpush1.bf16.msra.mxu0 0
  %455 = vmatprep.subr.bf16.mxu0 0
  %456 = vmatpush1.bf16.msra.mxu0 0
  %457 = vmatprep.subr.bf16.mxu0 0
  %458 = vmatpush1.bf16.msra.mxu0 0
  %459 = vmatprep.mubr.bf16.mxu0 0
  %460 = vmatmul.mubr.bf16.gmra.mrb[0].mxu0 %v362
  %v461 = vpop.f32.mrb[0].mxu0
  %v462 = vadd.f32 0.0, %v461
  %v463 = vpop.f32.mrb[0].mxu0
  %v464 = vpop.f32.mrb[0].mxu0
  %v465 = vpop.f32.mrb[0].mxu0
  %466 = vdwg.mxu0
  %v467 = vadd.f32 %v361, %v462
  %v468 = vmul.f32 %v467, 0.5
  %v469 = vsel %vm69, %v467, %v468
  %v470 = vtanh.pop %v469
  %v471 = vadd.f32 %v470, 1.0
  %v472 = vmul.f32 %v471, 0.5
  %v473 = vsel %vm69, %v470, %v472
  %v474 = vmul.f32 %v473, %v202
  %476 = vrot.lane.b32.xlu0 %v473, 64
  %v477 = vpop.permute.xlu0 %476
  %v479 = vmul.f32 %v473, %v477
  %481 = vrot.lane.b32.xlu0 %v479, 32
  %v482 = vpop.permute.xlu0 %481
  %v484 = vadd.f32 %v474, %v482
  %v485 = vtanh.pop %v484
  %487 = vrot.lane.b32.xlu0 %v485, 64
  %v488 = vpop.permute.xlu0 %487
  %v490 = vmul.f32 %v473, %v488
  %492 = vrot.lane.b32.xlu0 %v490, 32
  %v493 = vpop.permute.xlu0 %492
  %v495 = vsel %vm213, %v493, 0.0
  %s496 = scalar_lea.vmem %s4, 8
  %497 = vst [vmem:[%s496] sm:$0xff] %v495
  %s498 = scalar_lea.vmem %s44, 24
  %v499 = vld [vmem:[%s498] sm:$0xf]
  %v500 = vunpack.c.l.bf16 %v499
  %v501 = vpack.c.bf16 %v356, %v356
  %v502 = vld [vmem:[%s3] sm:$0xf]
  %v503 = vld [vmem:[%s3 + $0x4] sm:$0xf]
  %v504 = vld [vmem:[%s3 + $0x8] sm:$0xf]
  %v505 = vld [vmem:[%s3 + $0xc] sm:$0xf]
  %v506 = vld [vmem:[%s3 + $0x10] sm:$0xf]
  %v507 = vld [vmem:[%s3 + $0x14] sm:$0xf]
  %v508 = vld [vmem:[%s3 + $0x18] sm:$0xf]
  %v509 = vld [vmem:[%s3 + $0x1c] sm:$0xf]
  %v510 = vld [vmem:[%s3 + $0x20] sm:$0xf]
  %v511 = vld [vmem:[%s3 + $0x24] sm:$0xf]
  %v512 = vld [vmem:[%s3 + $0x28] sm:$0xf]
  %v513 = vld [vmem:[%s3 + $0x2c] sm:$0xf]
  %v514 = vld [vmem:[%s3 + $0x30] sm:$0xf]
  %v515 = vld [vmem:[%s3 + $0x34] sm:$0xf]
  %v516 = vld [vmem:[%s3 + $0x38] sm:$0xf]
  %v517 = vld [vmem:[%s3 + $0x3c] sm:$0xf]
  %v534 = vunpack.c.l.b16 %v502
  %v535 = vunpack.c.l.b16 %v503
  %v536 = vunpack.c.l.b16 %v504
  %v537 = vunpack.c.l.b16 %v505
  %v538 = vunpack.c.l.b16 %v506
  %v539 = vunpack.c.l.b16 %v507
  %v540 = vunpack.c.l.b16 %v508
  %v541 = vunpack.c.l.b16 %v509
  %v542 = vunpack.c.l.b16 %v510
  %v543 = vunpack.c.l.b16 %v511
  %v544 = vunpack.c.l.b16 %v512
  %v545 = vunpack.c.l.b16 %v513
  %v546 = vunpack.c.l.b16 %v514
  %v547 = vunpack.c.l.b16 %v515
  %v548 = vunpack.c.l.b16 %v516
  %v549 = vunpack.c.l.b16 %v517
  %v550 = vpack.c.b16 %v535, %v534
  %v551 = vpack.c.b16 %v537, %v536
  %v552 = vpack.c.b16 %v539, %v538
  %v553 = vpack.c.b16 %v541, %v540
  %v554 = vpack.c.b16 %v543, %v542
  %v555 = vpack.c.b16 %v545, %v544
  %v556 = vpack.c.b16 %v547, %v546
  %v557 = vpack.c.b16 %v549, %v548
  %566 = vmatprep.subr.bf16.mxu0 0
  %567 = vmatpush1.bf16.msra.mxu0 %v550
  %568 = vmatprep.subr.bf16.mxu0 0
  %569 = vmatpush1.bf16.msra.mxu0 %v551
  %570 = vmatprep.subr.bf16.mxu0 0
  %571 = vmatpush1.bf16.msra.mxu0 %v552
  %572 = vmatprep.subr.bf16.mxu0 0
  %573 = vmatpush1.bf16.msra.mxu0 %v553
  %574 = vmatprep.subr.bf16.mxu0 0
  %575 = vmatpush1.bf16.msra.mxu0 %v554
  %576 = vmatprep.subr.bf16.mxu0 0
  %577 = vmatpush1.bf16.msra.mxu0 %v555
  %578 = vmatprep.subr.bf16.mxu0 0
  %579 = vmatpush1.bf16.msra.mxu0 %v556
  %580 = vmatprep.subr.bf16.mxu0 0
  %581 = vmatpush1.bf16.msra.mxu0 %v557
  %582 = vmatprep.subr.bf16.mxu0 0
  %583 = vmatpush1.bf16.msra.mxu0 0
  %584 = vmatprep.subr.bf16.mxu0 0
  %585 = vmatpush1.bf16.msra.mxu0 0
  %586 = vmatprep.subr.bf16.mxu0 0
  %587 = vmatpush1.bf16.msra.mxu0 0
  %588 = vmatprep.subr.bf16.mxu0 0
  %589 = vmatpush1.bf16.msra.mxu0 0
  %590 = vmatprep.subr.bf16.mxu0 0
  %591 = vmatpush1.bf16.msra.mxu0 0
  %592 = vmatprep.subr.bf16.mxu0 0
  %593 = vmatpush1.bf16.msra.mxu0 0
  %594 = vmatprep.subr.bf16.mxu0 0
  %595 = vmatpush1.bf16.msra.mxu0 0
  %596 = vmatprep.subr.bf16.mxu0 0
  %597 = vmatpush1.bf16.msra.mxu0 0
  %598 = vmatprep.mubr.bf16.mxu0 0
  %599 = vmatmul.mubr.bf16.gmra.mrb[0].mxu0 %v501
  %v600 = vpop.f32.mrb[0].mxu0
  %v601 = vadd.f32 0.0, %v600
  %v602 = vpop.f32.mrb[0].mxu0
  %v603 = vpop.f32.mrb[0].mxu0
  %v604 = vpop.f32.mrb[0].mxu0
  %605 = vdwg.mxu0
  %v606 = vadd.f32 %v500, %v601
  %v607 = vmul.f32 %v606, 0.5
  %v608 = vsel %vm69, %v606, %v607
  %v609 = vtanh.pop %v608
  %v610 = vadd.f32 %v609, 1.0
  %v611 = vmul.f32 %v610, 0.5
  %v612 = vsel %vm69, %v609, %v611
  %v613 = vmul.f32 %v612, %v345
  %615 = vrot.lane.b32.xlu0 %v612, 64
  %v616 = vpop.permute.xlu0 %615
  %v618 = vmul.f32 %v612, %v616
  %620 = vrot.lane.b32.xlu0 %v618, 32
  %v621 = vpop.permute.xlu0 %620
  %v623 = vadd.f32 %v613, %v621
  %v624 = vtanh.pop %v623
  %626 = vrot.lane.b32.xlu0 %v624, 64
  %v627 = vpop.permute.xlu0 %626
  %v629 = vmul.f32 %v612, %v627
  %631 = vrot.lane.b32.xlu0 %v629, 32
  %v632 = vpop.permute.xlu0 %631
  %v634 = vsel %vm213, %v632, 0.0
  %s635 = scalar_lea.vmem %s52, 48
  %636 = vst [vmem:[%s635] sm:$0xff] %v634
  %s637 = scalar_lea.vmem %s0, 8
  %v638 = vld [vmem:[%s637] sm:$0xf]
  %v639 = vunpack.c.l.bf16 %v638
  %v640 = vpack.c.bf16 %v495, %v495
  %v641 = vld [vmem:[%s2] sm:$0xf]
  %v642 = vld [vmem:[%s2 + $0x4] sm:$0xf]
  %v643 = vld [vmem:[%s2 + $0x8] sm:$0xf]
  %v644 = vld [vmem:[%s2 + $0xc] sm:$0xf]
  %v645 = vld [vmem:[%s2 + $0x10] sm:$0xf]
  %v646 = vld [vmem:[%s2 + $0x14] sm:$0xf]
  %v647 = vld [vmem:[%s2 + $0x18] sm:$0xf]
  %v648 = vld [vmem:[%s2 + $0x1c] sm:$0xf]
  %v649 = vld [vmem:[%s2 + $0x20] sm:$0xf]
  %v650 = vld [vmem:[%s2 + $0x24] sm:$0xf]
  %v651 = vld [vmem:[%s2 + $0x28] sm:$0xf]
  %v652 = vld [vmem:[%s2 + $0x2c] sm:$0xf]
  %v653 = vld [vmem:[%s2 + $0x30] sm:$0xf]
  %v654 = vld [vmem:[%s2 + $0x34] sm:$0xf]
  %v655 = vld [vmem:[%s2 + $0x38] sm:$0xf]
  %v656 = vld [vmem:[%s2 + $0x3c] sm:$0xf]
  %v673 = vunpack.c.l.b16 %v641
  %v674 = vunpack.c.l.b16 %v642
  %v675 = vunpack.c.l.b16 %v643
  %v676 = vunpack.c.l.b16 %v644
  %v677 = vunpack.c.l.b16 %v645
  %v678 = vunpack.c.l.b16 %v646
  %v679 = vunpack.c.l.b16 %v647
  %v680 = vunpack.c.l.b16 %v648
  %v681 = vunpack.c.l.b16 %v649
  %v682 = vunpack.c.l.b16 %v650
  %v683 = vunpack.c.l.b16 %v651
  %v684 = vunpack.c.l.b16 %v652
  %v685 = vunpack.c.l.b16 %v653
  %v686 = vunpack.c.l.b16 %v654
  %v687 = vunpack.c.l.b16 %v655
  %v688 = vunpack.c.l.b16 %v656
  %v689 = vpack.c.b16 %v674, %v673
  %v690 = vpack.c.b16 %v676, %v675
  %v691 = vpack.c.b16 %v678, %v677
  %v692 = vpack.c.b16 %v680, %v679
  %v693 = vpack.c.b16 %v682, %v681
  %v694 = vpack.c.b16 %v684, %v683
  %v695 = vpack.c.b16 %v686, %v685
  %v696 = vpack.c.b16 %v688, %v687
  %705 = vmatprep.subr.bf16.mxu0 0
  %706 = vmatpush1.bf16.msra.mxu0 %v689
  %707 = vmatprep.subr.bf16.mxu0 0
  %708 = vmatpush1.bf16.msra.mxu0 %v690
  %709 = vmatprep.subr.bf16.mxu0 0
  %710 = vmatpush1.bf16.msra.mxu0 %v691
  %711 = vmatprep.subr.bf16.mxu0 0
  %712 = vmatpush1.bf16.msra.mxu0 %v692
  %713 = vmatprep.subr.bf16.mxu0 0
  %714 = vmatpush1.bf16.msra.mxu0 %v693
  %715 = vmatprep.subr.bf16.mxu0 0
  %716 = vmatpush1.bf16.msra.mxu0 %v694
  %717 = vmatprep.subr.bf16.mxu0 0
  %718 = vmatpush1.bf16.msra.mxu0 %v695
  %719 = vmatprep.subr.bf16.mxu0 0
  %720 = vmatpush1.bf16.msra.mxu0 %v696
  %721 = vmatprep.subr.bf16.mxu0 0
  %722 = vmatpush1.bf16.msra.mxu0 0
  %723 = vmatprep.subr.bf16.mxu0 0
  %724 = vmatpush1.bf16.msra.mxu0 0
  %725 = vmatprep.subr.bf16.mxu0 0
  %726 = vmatpush1.bf16.msra.mxu0 0
  %727 = vmatprep.subr.bf16.mxu0 0
  %728 = vmatpush1.bf16.msra.mxu0 0
  %729 = vmatprep.subr.bf16.mxu0 0
  %730 = vmatpush1.bf16.msra.mxu0 0
  %731 = vmatprep.subr.bf16.mxu0 0
  %732 = vmatpush1.bf16.msra.mxu0 0
  %733 = vmatprep.subr.bf16.mxu0 0
  %734 = vmatpush1.bf16.msra.mxu0 0
  %735 = vmatprep.subr.bf16.mxu0 0
  %736 = vmatpush1.bf16.msra.mxu0 0
  %737 = vmatprep.mubr.bf16.mxu0 0
  %738 = vmatmul.mubr.bf16.gmra.mrb[0].mxu0 %v640
  %v739 = vpop.f32.mrb[0].mxu0
  %v740 = vadd.f32 0.0, %v739
  %v741 = vpop.f32.mrb[0].mxu0
  %v742 = vpop.f32.mrb[0].mxu0
  %v743 = vpop.f32.mrb[0].mxu0
  %744 = vdwg.mxu0
  %v745 = vadd.f32 %v639, %v740
  %v746 = vmul.f32 %v745, 0.5
  %v747 = vsel %vm69, %v745, %v746
  %v748 = vtanh.pop %v747
  %v749 = vadd.f32 %v748, 1.0
  %v750 = vmul.f32 %v749, 0.5
  %v751 = vsel %vm69, %v748, %v750
  %v752 = vmul.f32 %v751, %v484
  %754 = vrot.lane.b32.xlu0 %v751, 64
  %v755 = vpop.permute.xlu0 %754
  %v757 = vmul.f32 %v751, %v755
  %759 = vrot.lane.b32.xlu0 %v757, 32
  %v760 = vpop.permute.xlu0 %759
  %v762 = vadd.f32 %v752, %v760
  %v763 = vtanh.pop %v762
  %765 = vrot.lane.b32.xlu0 %v763, 64
  %v766 = vpop.permute.xlu0 %765
  %v768 = vmul.f32 %v751, %v766
  %770 = vrot.lane.b32.xlu0 %v768, 32
  %v771 = vpop.permute.xlu0 %770
  %v773 = vsel %vm213, %v771, 0.0
  %s774 = scalar_lea.vmem %s4, 16
  %775 = vst [vmem:[%s774] sm:$0xff] %v773
  %s776 = scalar_lea.vmem %s44, 20
  %v777 = vld [vmem:[%s776] sm:$0xf]
  %v778 = vunpack.c.l.bf16 %v777
  %v779 = vpack.c.bf16 %v634, %v634
  %v780 = vld [vmem:[%s3] sm:$0xf]
  %v781 = vld [vmem:[%s3 + $0x4] sm:$0xf]
  %v782 = vld [vmem:[%s3 + $0x8] sm:$0xf]
  %v783 = vld [vmem:[%s3 + $0xc] sm:$0xf]
  %v784 = vld [vmem:[%s3 + $0x10] sm:$0xf]
  %v785 = vld [vmem:[%s3 + $0x14] sm:$0xf]
  %v786 = vld [vmem:[%s3 + $0x18] sm:$0xf]
  %v787 = vld [vmem:[%s3 + $0x1c] sm:$0xf]
  %v788 = vld [vmem:[%s3 + $0x20] sm:$0xf]
  %v789 = vld [vmem:[%s3 + $0x24] sm:$0xf]
  %v790 = vld [vmem:[%s3 + $0x28] sm:$0xf]
  %v791 = vld [vmem:[%s3 + $0x2c] sm:$0xf]
  %v792 = vld [vmem:[%s3 + $0x30] sm:$0xf]
  %v793 = vld [vmem:[%s3 + $0x34] sm:$0xf]
  %v794 = vld [vmem:[%s3 + $0x38] sm:$0xf]
  %v795 = vld [vmem:[%s3 + $0x3c] sm:$0xf]
  %v812 = vunpack.c.l.b16 %v780
  %v813 = vunpack.c.l.b16 %v781
  %v814 = vunpack.c.l.b16 %v782
  %v815 = vunpack.c.l.b16 %v783
  %v816 = vunpack.c.l.b16 %v784
  %v817 = vunpack.c.l.b16 %v785
  %v818 = vunpack.c.l.b16 %v786
  %v819 = vunpack.c.l.b16 %v787
  %v820 = vunpack.c.l.b16 %v788
  %v821 = vunpack.c.l.b16 %v789
  %v822 = vunpack.c.l.b16 %v790
  %v823 = vunpack.c.l.b16 %v791
  %v824 = vunpack.c.l.b16 %v792
  %v825 = vunpack.c.l.b16 %v793
  %v826 = vunpack.c.l.b16 %v794
  %v827 = vunpack.c.l.b16 %v795
  %v828 = vpack.c.b16 %v813, %v812
  %v829 = vpack.c.b16 %v815, %v814
  %v830 = vpack.c.b16 %v817, %v816
  %v831 = vpack.c.b16 %v819, %v818
  %v832 = vpack.c.b16 %v821, %v820
  %v833 = vpack.c.b16 %v823, %v822
  %v834 = vpack.c.b16 %v825, %v824
  %v835 = vpack.c.b16 %v827, %v826
  %844 = vmatprep.subr.bf16.mxu0 0
  %845 = vmatpush1.bf16.msra.mxu0 %v828
  %846 = vmatprep.subr.bf16.mxu0 0
  %847 = vmatpush1.bf16.msra.mxu0 %v829
  %848 = vmatprep.subr.bf16.mxu0 0
  %849 = vmatpush1.bf16.msra.mxu0 %v830
  %850 = vmatprep.subr.bf16.mxu0 0
  %851 = vmatpush1.bf16.msra.mxu0 %v831
  %852 = vmatprep.subr.bf16.mxu0 0
  %853 = vmatpush1.bf16.msra.mxu0 %v832
  %854 = vmatprep.subr.bf16.mxu0 0
  %855 = vmatpush1.bf16.msra.mxu0 %v833
  %856 = vmatprep.subr.bf16.mxu0 0
  %857 = vmatpush1.bf16.msra.mxu0 %v834
  %858 = vmatprep.subr.bf16.mxu0 0
  %859 = vmatpush1.bf16.msra.mxu0 %v835
  %860 = vmatprep.subr.bf16.mxu0 0
  %861 = vmatpush1.bf16.msra.mxu0 0
  %862 = vmatprep.subr.bf16.mxu0 0
  %863 = vmatpush1.bf16.msra.mxu0 0
  %864 = vmatprep.subr.bf16.mxu0 0
  %865 = vmatpush1.bf16.msra.mxu0 0
  %866 = vmatprep.subr.bf16.mxu0 0
  %867 = vmatpush1.bf16.msra.mxu0 0
  %868 = vmatprep.subr.bf16.mxu0 0
  %869 = vmatpush1.bf16.msra.mxu0 0
  %870 = vmatprep.subr.bf16.mxu0 0
  %871 = vmatpush1.bf16.msra.mxu0 0
  %872 = vmatprep.subr.bf16.mxu0 0
  %873 = vmatpush1.bf16.msra.mxu0 0
  %874 = vmatprep.subr.bf16.mxu0 0
  %875 = vmatpush1.bf16.msra.mxu0 0
  %876 = vmatprep.mubr.bf16.mxu0 0
  %877 = vmatmul.mubr.bf16.gmra.mrb[0].mxu0 %v779
  %v878 = vpop.f32.mrb[0].mxu0
  %v879 = vadd.f32 0.0, %v878
  %v880 = vpop.f32.mrb[0].mxu0
  %v881 = vpop.f32.mrb[0].mxu0
  %v882 = vpop.f32.mrb[0].mxu0
  %883 = vdwg.mxu0
  %v884 = vadd.f32 %v778, %v879
  %v885 = vmul.f32 %v884, 0.5
  %v886 = vsel %vm69, %v884, %v885
  %v887 = vtanh.pop %v886
  %v888 = vadd.f32 %v887, 1.0
  %v889 = vmul.f32 %v888, 0.5
  %v890 = vsel %vm69, %v887, %v889
  %v891 = vmul.f32 %v890, %v623
  %893 = vrot.lane.b32.xlu0 %v890, 64
  %v894 = vpop.permute.xlu0 %893
  %v896 = vmul.f32 %v890, %v894
  %898 = vrot.lane.b32.xlu0 %v896, 32
  %v899 = vpop.permute.xlu0 %898
  %v901 = vadd.f32 %v891, %v899
  %v902 = vtanh.pop %v901
  %904 = vrot.lane.b32.xlu0 %v902, 64
  %v905 = vpop.permute.xlu0 %904
  %v907 = vmul.f32 %v890, %v905
  %909 = vrot.lane.b32.xlu0 %v907, 32
  %v910 = vpop.permute.xlu0 %909
  %v912 = vsel %vm213, %v910, 0.0
  %s913 = scalar_lea.vmem %s52, 40
  %914 = vst [vmem:[%s913] sm:$0xff] %v912
  %s915 = scalar_lea.vmem %s0, 12
  %v916 = vld [vmem:[%s915] sm:$0xf]
  %v917 = vunpack.c.l.bf16 %v916
  %v918 = vpack.c.bf16 %v773, %v773
  %v919 = vld [vmem:[%s2] sm:$0xf]
  %v920 = vld [vmem:[%s2 + $0x4] sm:$0xf]
  %v921 = vld [vmem:[%s2 + $0x8] sm:$0xf]
  %v922 = vld [vmem:[%s2 + $0xc] sm:$0xf]
  %v923 = vld [vmem:[%s2 + $0x10] sm:$0xf]
  %v924 = vld [vmem:[%s2 + $0x14] sm:$0xf]
  %v925 = vld [vmem:[%s2 + $0x18] sm:$0xf]
  %v926 = vld [vmem:[%s2 + $0x1c] sm:$0xf]
  %v927 = vld [vmem:[%s2 + $0x20] sm:$0xf]
  %v928 = vld [vmem:[%s2 + $0x24] sm:$0xf]
  %v929 = vld [vmem:[%s2 + $0x28] sm:$0xf]
  %v930 = vld [vmem:[%s2 + $0x2c] sm:$0xf]
  %v931 = vld [vmem:[%s2 + $0x30] sm:$0xf]
  %v932 = vld [vmem:[%s2 + $0x34] sm:$0xf]
  %v933 = vld [vmem:[%s2 + $0x38] sm:$0xf]
  %v934 = vld [vmem:[%s2 + $0x3c] sm:$0xf]
  %v951 = vunpack.c.l.b16 %v919
  %v952 = vunpack.c.l.b16 %v920
  %v953 = vunpack.c.l.b16 %v921
  %v954 = vunpack.c.l.b16 %v922
  %v955 = vunpack.c.l.b16 %v923
  %v956 = vunpack.c.l.b16 %v924
  %v957 = vunpack.c.l.b16 %v925
  %v958 = vunpack.c.l.b16 %v926
  %v959 = vunpack.c.l.b16 %v927
  %v960 = vunpack.c.l.b16 %v928
  %v961 = vunpack.c.l.b16 %v929
  %v962 = vunpack.c.l.b16 %v930
  %v963 = vunpack.c.l.b16 %v931
  %v964 = vunpack.c.l.b16 %v932
  %v965 = vunpack.c.l.b16 %v933
  %v966 = vunpack.c.l.b16 %v934
  %v967 = vpack.c.b16 %v952, %v951
  %v968 = vpack.c.b16 %v954, %v953
  %v969 = vpack.c.b16 %v956, %v955
  %v970 = vpack.c.b16 %v958, %v957
  %v971 = vpack.c.b16 %v960, %v959
  %v972 = vpack.c.b16 %v962, %v961
  %v973 = vpack.c.b16 %v964, %v963
  %v974 = vpack.c.b16 %v966, %v965
  %983 = vmatprep.subr.bf16.mxu0 0
  %984 = vmatpush1.bf16.msra.mxu0 %v967
  %985 = vmatprep.subr.bf16.mxu0 0
  %986 = vmatpush1.bf16.msra.mxu0 %v968
  %987 = vmatprep.subr.bf16.mxu0 0
  %988 = vmatpush1.bf16.msra.mxu0 %v969
  %989 = vmatprep.subr.bf16.mxu0 0
  %990 = vmatpush1.bf16.msra.mxu0 %v970
  %991 = vmatprep.subr.bf16.mxu0 0
  %992 = vmatpush1.bf16.msra.mxu0 %v971
  %993 = vmatprep.subr.bf16.mxu0 0
  %994 = vmatpush1.bf16.msra.mxu0 %v972
  %995 = vmatprep.subr.bf16.mxu0 0
  %996 = vmatpush1.bf16.msra.mxu0 %v973
  %997 = vmatprep.subr.bf16.mxu0 0
  %998 = vmatpush1.bf16.msra.mxu0 %v974
  %999 = vmatprep.subr.bf16.mxu0 0
  %1000 = vmatpush1.bf16.msra.mxu0 0
  %1001 = vmatprep.subr.bf16.mxu0 0
  %1002 = vmatpush1.bf16.msra.mxu0 0
  %1003 = vmatprep.subr.bf16.mxu0 0
  %1004 = vmatpush1.bf16.msra.mxu0 0
  %1005 = vmatprep.subr.bf16.mxu0 0
  %1006 = vmatpush1.bf16.msra.mxu0 0
  %1007 = vmatprep.subr.bf16.mxu0 0
  %1008 = vmatpush1.bf16.msra.mxu0 0
  %1009 = vmatprep.subr.bf16.mxu0 0
  %1010 = vmatpush1.bf16.msra.mxu0 0
  %1011 = vmatprep.subr.bf16.mxu0 0
  %1012 = vmatpush1.bf16.msra.mxu0 0
  %1013 = vmatprep.subr.bf16.mxu0 0
  %1014 = vmatpush1.bf16.msra.mxu0 0
  %1015 = vmatprep.mubr.bf16.mxu0 0
  %1016 = vmatmul.mubr.bf16.gmra.mrb[0].mxu0 %v918
  %v1017 = vpop.f32.mrb[0].mxu0
  %v1018 = vadd.f32 0.0, %v1017
  %v1019 = vpop.f32.mrb[0].mxu0
  %v1020 = vpop.f32.mrb[0].mxu0
  %v1021 = vpop.f32.mrb[0].mxu0
  %1022 = vdwg.mxu0
  %v1023 = vadd.f32 %v917, %v1018
  %v1024 = vmul.f32 %v1023, 0.5
  %v1025 = vsel %vm69, %v1023, %v1024
  %v1026 = vtanh.pop %v1025
  %v1027 = vadd.f32 %v1026, 1.0
  %v1028 = vmul.f32 %v1027, 0.5
  %v1029 = vsel %vm69, %v1026, %v1028
  %v1030 = vmul.f32 %v1029, %v762
  %1032 = vrot.lane.b32.xlu0 %v1029, 64
  %v1033 = vpop.permute.xlu0 %1032
  %v1035 = vmul.f32 %v1029, %v1033
  %1037 = vrot.lane.b32.xlu0 %v1035, 32
  %v1038 = vpop.permute.xlu0 %1037
  %v1040 = vadd.f32 %v1030, %v1038
  %v1041 = vtanh.pop %v1040
  %1043 = vrot.lane.b32.xlu0 %v1041, 64
  %v1044 = vpop.permute.xlu0 %1043
  %v1046 = vmul.f32 %v1029, %v1044
  %1048 = vrot.lane.b32.xlu0 %v1046, 32
  %v1049 = vpop.permute.xlu0 %1048
  %v1051 = vsel %vm213, %v1049, 0.0
  %s1052 = scalar_lea.vmem %s4, 24
  %1053 = vst [vmem:[%s1052] sm:$0xff] %v1051
  %s1054 = scalar_lea.vmem %s44, 16
  %v1055 = vld [vmem:[%s1054] sm:$0xf]
  %v1056 = vunpack.c.l.bf16 %v1055
  %v1057 = vpack.c.bf16 %v912, %v912
  %v1058 = vld [vmem:[%s3] sm:$0xf]
  %v1059 = vld [vmem:[%s3 + $0x4] sm:$0xf]
  %v1060 = vld [vmem:[%s3 + $0x8] sm:$0xf]
  %v1061 = vld [vmem:[%s3 + $0xc] sm:$0xf]
  %v1062 = vld [vmem:[%s3 + $0x10] sm:$0xf]
  %v1063 = vld [vmem:[%s3 + $0x14] sm:$0xf]
  %v1064 = vld [vmem:[%s3 + $0x18] sm:$0xf]
  %v1065 = vld [vmem:[%s3 + $0x1c] sm:$0xf]
  %v1066 = vld [vmem:[%s3 + $0x20] sm:$0xf]
  %v1067 = vld [vmem:[%s3 + $0x24] sm:$0xf]
  %v1068 = vld [vmem:[%s3 + $0x28] sm:$0xf]
  %v1069 = vld [vmem:[%s3 + $0x2c] sm:$0xf]
  %v1070 = vld [vmem:[%s3 + $0x30] sm:$0xf]
  %v1071 = vld [vmem:[%s3 + $0x34] sm:$0xf]
  %v1072 = vld [vmem:[%s3 + $0x38] sm:$0xf]
  %v1073 = vld [vmem:[%s3 + $0x3c] sm:$0xf]
  %v1090 = vunpack.c.l.b16 %v1058
  %v1091 = vunpack.c.l.b16 %v1059
  %v1092 = vunpack.c.l.b16 %v1060
  %v1093 = vunpack.c.l.b16 %v1061
  %v1094 = vunpack.c.l.b16 %v1062
  %v1095 = vunpack.c.l.b16 %v1063
  %v1096 = vunpack.c.l.b16 %v1064
  %v1097 = vunpack.c.l.b16 %v1065
  %v1098 = vunpack.c.l.b16 %v1066
  %v1099 = vunpack.c.l.b16 %v1067
  %v1100 = vunpack.c.l.b16 %v1068
  %v1101 = vunpack.c.l.b16 %v1069
  %v1102 = vunpack.c.l.b16 %v1070
  %v1103 = vunpack.c.l.b16 %v1071
  %v1104 = vunpack.c.l.b16 %v1072
  %v1105 = vunpack.c.l.b16 %v1073
  %v1106 = vpack.c.b16 %v1091, %v1090
  %v1107 = vpack.c.b16 %v1093, %v1092
  %v1108 = vpack.c.b16 %v1095, %v1094
  %v1109 = vpack.c.b16 %v1097, %v1096
  %v1110 = vpack.c.b16 %v1099, %v1098
  %v1111 = vpack.c.b16 %v1101, %v1100
  %v1112 = vpack.c.b16 %v1103, %v1102
  %v1113 = vpack.c.b16 %v1105, %v1104
  %1122 = vmatprep.subr.bf16.mxu0 0
  %1123 = vmatpush1.bf16.msra.mxu0 %v1106
  %1124 = vmatprep.subr.bf16.mxu0 0
  %1125 = vmatpush1.bf16.msra.mxu0 %v1107
  %1126 = vmatprep.subr.bf16.mxu0 0
  %1127 = vmatpush1.bf16.msra.mxu0 %v1108
  %1128 = vmatprep.subr.bf16.mxu0 0
  %1129 = vmatpush1.bf16.msra.mxu0 %v1109
  %1130 = vmatprep.subr.bf16.mxu0 0
  %1131 = vmatpush1.bf16.msra.mxu0 %v1110
  %1132 = vmatprep.subr.bf16.mxu0 0
  %1133 = vmatpush1.bf16.msra.mxu0 %v1111
  %1134 = vmatprep.subr.bf16.mxu0 0
  %1135 = vmatpush1.bf16.msra.mxu0 %v1112
  %1136 = vmatprep.subr.bf16.mxu0 0
  %1137 = vmatpush1.bf16.msra.mxu0 %v1113
  %1138 = vmatprep.subr.bf16.mxu0 0
  %1139 = vmatpush1.bf16.msra.mxu0 0
  %1140 = vmatprep.subr.bf16.mxu0 0
  %1141 = vmatpush1.bf16.msra.mxu0 0
  %1142 = vmatprep.subr.bf16.mxu0 0
  %1143 = vmatpush1.bf16.msra.mxu0 0
  %1144 = vmatprep.subr.bf16.mxu0 0
  %1145 = vmatpush1.bf16.msra.mxu0 0
  %1146 = vmatprep.subr.bf16.mxu0 0
  %1147 = vmatpush1.bf16.msra.mxu0 0
  %1148 = vmatprep.subr.bf16.mxu0 0
  %1149 = vmatpush1.bf16.msra.mxu0 0
  %1150 = vmatprep.subr.bf16.mxu0 0
  %1151 = vmatpush1.bf16.msra.mxu0 0
  %1152 = vmatprep.subr.bf16.mxu0 0
  %1153 = vmatpush1.bf16.msra.mxu0 0
  %1154 = vmatprep.mubr.bf16.mxu0 0
  %1155 = vmatmul.mubr.bf16.gmra.mrb[0].mxu0 %v1057
  %v1156 = vpop.f32.mrb[0].mxu0
  %v1157 = vadd.f32 0.0, %v1156
  %v1158 = vpop.f32.mrb[0].mxu0
  %v1159 = vpop.f32.mrb[0].mxu0
  %v1160 = vpop.f32.mrb[0].mxu0
  %1161 = vdwg.mxu0
  %v1162 = vadd.f32 %v1056, %v1157
  %v1163 = vmul.f32 %v1162, 0.5
  %v1164 = vsel %vm69, %v1162, %v1163
  %v1165 = vtanh.pop %v1164
  %v1166 = vadd.f32 %v1165, 1.0
  %v1167 = vmul.f32 %v1166, 0.5
  %v1168 = vsel %vm69, %v1165, %v1167
  %v1169 = vmul.f32 %v1168, %v901
  %1171 = vrot.lane.b32.xlu0 %v1168, 64
  %v1172 = vpop.permute.xlu0 %1171
  %v1174 = vmul.f32 %v1168, %v1172
  %1176 = vrot.lane.b32.xlu0 %v1174, 32
  %v1177 = vpop.permute.xlu0 %1176
  %v1179 = vadd.f32 %v1169, %v1177
  %v1180 = vtanh.pop %v1179
  %1182 = vrot.lane.b32.xlu0 %v1180, 64
  %v1183 = vpop.permute.xlu0 %1182
  %v1185 = vmul.f32 %v1168, %v1183
  %1187 = vrot.lane.b32.xlu0 %v1185, 32
  %v1188 = vpop.permute.xlu0 %1187
  %v1190 = vsel %vm213, %v1188, 0.0
  %s1191 = scalar_lea.vmem %s52, 32
  %1192 = vst [vmem:[%s1191] sm:$0xff] %v1190
  %s1193 = scalar_lea.vmem %s0, 16
  %v1194 = vld [vmem:[%s1193] sm:$0xf]
  %v1195 = vunpack.c.l.bf16 %v1194
  %v1196 = vpack.c.bf16 %v1051, %v1051
  %v1197 = vld [vmem:[%s2] sm:$0xf]
  %v1198 = vld [vmem:[%s2 + $0x4] sm:$0xf]
  %v1199 = vld [vmem:[%s2 + $0x8] sm:$0xf]
  %v1200 = vld [vmem:[%s2 + $0xc] sm:$0xf]
  %v1201 = vld [vmem:[%s2 + $0x10] sm:$0xf]
  %v1202 = vld [vmem:[%s2 + $0x14] sm:$0xf]
  %v1203 = vld [vmem:[%s2 + $0x18] sm:$0xf]
  %v1204 = vld [vmem:[%s2 + $0x1c] sm:$0xf]
  %v1205 = vld [vmem:[%s2 + $0x20] sm:$0xf]
  %v1206 = vld [vmem:[%s2 + $0x24] sm:$0xf]
  %v1207 = vld [vmem:[%s2 + $0x28] sm:$0xf]
  %v1208 = vld [vmem:[%s2 + $0x2c] sm:$0xf]
  %v1209 = vld [vmem:[%s2 + $0x30] sm:$0xf]
  %v1210 = vld [vmem:[%s2 + $0x34] sm:$0xf]
  %v1211 = vld [vmem:[%s2 + $0x38] sm:$0xf]
  %v1212 = vld [vmem:[%s2 + $0x3c] sm:$0xf]
  %v1229 = vunpack.c.l.b16 %v1197
  %v1230 = vunpack.c.l.b16 %v1198
  %v1231 = vunpack.c.l.b16 %v1199
  %v1232 = vunpack.c.l.b16 %v1200
  %v1233 = vunpack.c.l.b16 %v1201
  %v1234 = vunpack.c.l.b16 %v1202
  %v1235 = vunpack.c.l.b16 %v1203
  %v1236 = vunpack.c.l.b16 %v1204
  %v1237 = vunpack.c.l.b16 %v1205
  %v1238 = vunpack.c.l.b16 %v1206
  %v1239 = vunpack.c.l.b16 %v1207
  %v1240 = vunpack.c.l.b16 %v1208
  %v1241 = vunpack.c.l.b16 %v1209
  %v1242 = vunpack.c.l.b16 %v1210
  %v1243 = vunpack.c.l.b16 %v1211
  %v1244 = vunpack.c.l.b16 %v1212
  %v1245 = vpack.c.b16 %v1230, %v1229
  %v1246 = vpack.c.b16 %v1232, %v1231
  %v1247 = vpack.c.b16 %v1234, %v1233
  %v1248 = vpack.c.b16 %v1236, %v1235
  %v1249 = vpack.c.b16 %v1238, %v1237
  %v1250 = vpack.c.b16 %v1240, %v1239
  %v1251 = vpack.c.b16 %v1242, %v1241
  %v1252 = vpack.c.b16 %v1244, %v1243
  %1261 = vmatprep.subr.bf16.mxu0 0
  %1262 = vmatpush1.bf16.msra.mxu0 %v1245
  %1263 = vmatprep.subr.bf16.mxu0 0
  %1264 = vmatpush1.bf16.msra.mxu0 %v1246
  %1265 = vmatprep.subr.bf16.mxu0 0
  %1266 = vmatpush1.bf16.msra.mxu0 %v1247
  %1267 = vmatprep.subr.bf16.mxu0 0
  %1268 = vmatpush1.bf16.msra.mxu0 %v1248
  %1269 = vmatprep.subr.bf16.mxu0 0
  %1270 = vmatpush1.bf16.msra.mxu0 %v1249
  %1271 = vmatprep.subr.bf16.mxu0 0
  %1272 = vmatpush1.bf16.msra.mxu0 %v1250
  %1273 = vmatprep.subr.bf16.mxu0 0
  %1274 = vmatpush1.bf16.msra.mxu0 %v1251
  %1275 = vmatprep.subr.bf16.mxu0 0
  %1276 = vmatpush1.bf16.msra.mxu0 %v1252
  %1277 = vmatprep.subr.bf16.mxu0 0
  %1278 = vmatpush1.bf16.msra.mxu0 0
  %1279 = vmatprep.subr.bf16.mxu0 0
  %1280 = vmatpush1.bf16.msra.mxu0 0
  %1281 = vmatprep.subr.bf16.mxu0 0
  %1282 = vmatpush1.bf16.msra.mxu0 0
  %1283 = vmatprep.subr.bf16.mxu0 0
  %1284 = vmatpush1.bf16.msra.mxu0 0
  %1285 = vmatprep.subr.bf16.mxu0 0
  %1286 = vmatpush1.bf16.msra.mxu0 0
  %1287 = vmatprep.subr.bf16.mxu0 0
  %1288 = vmatpush1.bf16.msra.mxu0 0
  %1289 = vmatprep.subr.bf16.mxu0 0
  %1290 = vmatpush1.bf16.msra.mxu0 0
  %1291 = vmatprep.subr.bf16.mxu0 0
  %1292 = vmatpush1.bf16.msra.mxu0 0
  %1293 = vmatprep.mubr.bf16.mxu0 0
  %1294 = vmatmul.mubr.bf16.gmra.mrb[0].mxu0 %v1196
  %v1295 = vpop.f32.mrb[0].mxu0
  %v1296 = vadd.f32 0.0, %v1295
  %v1297 = vpop.f32.mrb[0].mxu0
  %v1298 = vpop.f32.mrb[0].mxu0
  %v1299 = vpop.f32.mrb[0].mxu0
  %1300 = vdwg.mxu0
  %v1301 = vadd.f32 %v1195, %v1296
  %v1302 = vmul.f32 %v1301, 0.5
  %v1303 = vsel %vm69, %v1301, %v1302
  %v1304 = vtanh.pop %v1303
  %v1305 = vadd.f32 %v1304, 1.0
  %v1306 = vmul.f32 %v1305, 0.5
  %v1307 = vsel %vm69, %v1304, %v1306
  %v1308 = vmul.f32 %v1307, %v1040
  %1310 = vrot.lane.b32.xlu0 %v1307, 64
  %v1311 = vpop.permute.xlu0 %1310
  %v1313 = vmul.f32 %v1307, %v1311
  %1315 = vrot.lane.b32.xlu0 %v1313, 32
  %v1316 = vpop.permute.xlu0 %1315
  %v1318 = vadd.f32 %v1308, %v1316
  %v1319 = vtanh.pop %v1318
  %1321 = vrot.lane.b32.xlu0 %v1319, 64
  %v1322 = vpop.permute.xlu0 %1321
  %v1324 = vmul.f32 %v1307, %v1322
  %1326 = vrot.lane.b32.xlu0 %v1324, 32
  %v1327 = vpop.permute.xlu0 %1326
  %v1329 = vsel %vm213, %v1327, 0.0
  %s1330 = scalar_lea.vmem %s4, 32
  %1331 = vst [vmem:[%s1330] sm:$0xff] %v1329
  %s1332 = scalar_lea.vmem %s44, 12
  %v1333 = vld [vmem:[%s1332] sm:$0xf]
  %v1334 = vunpack.c.l.bf16 %v1333
  %v1335 = vpack.c.bf16 %v1190, %v1190
  %v1336 = vld [vmem:[%s3] sm:$0xf]
  %v1337 = vld [vmem:[%s3 + $0x4] sm:$0xf]
  %v1338 = vld [vmem:[%s3 + $0x8] sm:$0xf]
  %v1339 = vld [vmem:[%s3 + $0xc] sm:$0xf]
  %v1340 = vld [vmem:[%s3 + $0x10] sm:$0xf]
  %v1341 = vld [vmem:[%s3 + $0x14] sm:$0xf]
  %v1342 = vld [vmem:[%s3 + $0x18] sm:$0xf]
  %v1343 = vld [vmem:[%s3 + $0x1c] sm:$0xf]
  %v1344 = vld [vmem:[%s3 + $0x20] sm:$0xf]
  %v1345 = vld [vmem:[%s3 + $0x24] sm:$0xf]
  %v1346 = vld [vmem:[%s3 + $0x28] sm:$0xf]
  %v1347 = vld [vmem:[%s3 + $0x2c] sm:$0xf]
  %v1348 = vld [vmem:[%s3 + $0x30] sm:$0xf]
  %v1349 = vld [vmem:[%s3 + $0x34] sm:$0xf]
  %v1350 = vld [vmem:[%s3 + $0x38] sm:$0xf]
  %v1351 = vld [vmem:[%s3 + $0x3c] sm:$0xf]
  %v1368 = vunpack.c.l.b16 %v1336
  %v1369 = vunpack.c.l.b16 %v1337
  %v1370 = vunpack.c.l.b16 %v1338
  %v1371 = vunpack.c.l.b16 %v1339
  %v1372 = vunpack.c.l.b16 %v1340
  %v1373 = vunpack.c.l.b16 %v1341
  %v1374 = vunpack.c.l.b16 %v1342
  %v1375 = vunpack.c.l.b16 %v1343
  %v1376 = vunpack.c.l.b16 %v1344
  %v1377 = vunpack.c.l.b16 %v1345
  %v1378 = vunpack.c.l.b16 %v1346
  %v1379 = vunpack.c.l.b16 %v1347
  %v1380 = vunpack.c.l.b16 %v1348
  %v1381 = vunpack.c.l.b16 %v1349
  %v1382 = vunpack.c.l.b16 %v1350
  %v1383 = vunpack.c.l.b16 %v1351
  %v1384 = vpack.c.b16 %v1369, %v1368
  %v1385 = vpack.c.b16 %v1371, %v1370
  %v1386 = vpack.c.b16 %v1373, %v1372
  %v1387 = vpack.c.b16 %v1375, %v1374
  %v1388 = vpack.c.b16 %v1377, %v1376
  %v1389 = vpack.c.b16 %v1379, %v1378
  %v1390 = vpack.c.b16 %v1381, %v1380
  %v1391 = vpack.c.b16 %v1383, %v1382
  %1400 = vmatprep.subr.bf16.mxu0 0
  %1401 = vmatpush1.bf16.msra.mxu0 %v1384
  %1402 = vmatprep.subr.bf16.mxu0 0
  %1403 = vmatpush1.bf16.msra.mxu0 %v1385
  %1404 = vmatprep.subr.bf16.mxu0 0
  %1405 = vmatpush1.bf16.msra.mxu0 %v1386
  %1406 = vmatprep.subr.bf16.mxu0 0
  %1407 = vmatpush1.bf16.msra.mxu0 %v1387
  %1408 = vmatprep.subr.bf16.mxu0 0
  %1409 = vmatpush1.bf16.msra.mxu0 %v1388
  %1410 = vmatprep.subr.bf16.mxu0 0
  %1411 = vmatpush1.bf16.msra.mxu0 %v1389
  %1412 = vmatprep.subr.bf16.mxu0 0
  %1413 = vmatpush1.bf16.msra.mxu0 %v1390
  %1414 = vmatprep.subr.bf16.mxu0 0
  %1415 = vmatpush1.bf16.msra.mxu0 %v1391
  %1416 = vmatprep.subr.bf16.mxu0 0
  %1417 = vmatpush1.bf16.msra.mxu0 0
  %1418 = vmatprep.subr.bf16.mxu0 0
  %1419 = vmatpush1.bf16.msra.mxu0 0
  %1420 = vmatprep.subr.bf16.mxu0 0
  %1421 = vmatpush1.bf16.msra.mxu0 0
  %1422 = vmatprep.subr.bf16.mxu0 0
  %1423 = vmatpush1.bf16.msra.mxu0 0
  %1424 = vmatprep.subr.bf16.mxu0 0
  %1425 = vmatpush1.bf16.msra.mxu0 0
  %1426 = vmatprep.subr.bf16.mxu0 0
  %1427 = vmatpush1.bf16.msra.mxu0 0
  %1428 = vmatprep.subr.bf16.mxu0 0
  %1429 = vmatpush1.bf16.msra.mxu0 0
  %1430 = vmatprep.subr.bf16.mxu0 0
  %1431 = vmatpush1.bf16.msra.mxu0 0
  %1432 = vmatprep.mubr.bf16.mxu0 0
  %1433 = vmatmul.mubr.bf16.gmra.mrb[0].mxu0 %v1335
  %v1434 = vpop.f32.mrb[0].mxu0
  %v1435 = vadd.f32 0.0, %v1434
  %v1436 = vpop.f32.mrb[0].mxu0
  %v1437 = vpop.f32.mrb[0].mxu0
  %v1438 = vpop.f32.mrb[0].mxu0
  %1439 = vdwg.mxu0
  %v1440 = vadd.f32 %v1334, %v1435
  %v1441 = vmul.f32 %v1440, 0.5
  %v1442 = vsel %vm69, %v1440, %v1441
  %v1443 = vtanh.pop %v1442
  %v1444 = vadd.f32 %v1443, 1.0
  %v1445 = vmul.f32 %v1444, 0.5
  %v1446 = vsel %vm69, %v1443, %v1445
  %v1447 = vmul.f32 %v1446, %v1179
  %1449 = vrot.lane.b32.xlu0 %v1446, 64
  %v1450 = vpop.permute.xlu0 %1449
  %v1452 = vmul.f32 %v1446, %v1450
  %1454 = vrot.lane.b32.xlu0 %v1452, 32
  %v1455 = vpop.permute.xlu0 %1454
  %v1457 = vadd.f32 %v1447, %v1455
  %v1458 = vtanh.pop %v1457
  %1460 = vrot.lane.b32.xlu0 %v1458, 64
  %v1461 = vpop.permute.xlu0 %1460
  %v1463 = vmul.f32 %v1446, %v1461
  %1465 = vrot.lane.b32.xlu0 %v1463, 32
  %v1466 = vpop.permute.xlu0 %1465
  %v1468 = vsel %vm213, %v1466, 0.0
  %s1469 = scalar_lea.vmem %s52, 24
  %1470 = vst [vmem:[%s1469] sm:$0xff] %v1468
  %s1471 = scalar_lea.vmem %s0, 20
  %v1472 = vld [vmem:[%s1471] sm:$0xf]
  %v1473 = vunpack.c.l.bf16 %v1472
  %v1474 = vpack.c.bf16 %v1329, %v1329
  %v1475 = vld [vmem:[%s2] sm:$0xf]
  %v1476 = vld [vmem:[%s2 + $0x4] sm:$0xf]
  %v1477 = vld [vmem:[%s2 + $0x8] sm:$0xf]
  %v1478 = vld [vmem:[%s2 + $0xc] sm:$0xf]
  %v1479 = vld [vmem:[%s2 + $0x10] sm:$0xf]
  %v1480 = vld [vmem:[%s2 + $0x14] sm:$0xf]
  %v1481 = vld [vmem:[%s2 + $0x18] sm:$0xf]
  %v1482 = vld [vmem:[%s2 + $0x1c] sm:$0xf]
  %v1483 = vld [vmem:[%s2 + $0x20] sm:$0xf]
  %v1484 = vld [vmem:[%s2 + $0x24] sm:$0xf]
  %v1485 = vld [vmem:[%s2 + $0x28] sm:$0xf]
  %v1486 = vld [vmem:[%s2 + $0x2c] sm:$0xf]
  %v1487 = vld [vmem:[%s2 + $0x30] sm:$0xf]
  %v1488 = vld [vmem:[%s2 + $0x34] sm:$0xf]
  %v1489 = vld [vmem:[%s2 + $0x38] sm:$0xf]
  %v1490 = vld [vmem:[%s2 + $0x3c] sm:$0xf]
  %v1507 = vunpack.c.l.b16 %v1475
  %v1508 = vunpack.c.l.b16 %v1476
  %v1509 = vunpack.c.l.b16 %v1477
  %v1510 = vunpack.c.l.b16 %v1478
  %v1511 = vunpack.c.l.b16 %v1479
  %v1512 = vunpack.c.l.b16 %v1480
  %v1513 = vunpack.c.l.b16 %v1481
  %v1514 = vunpack.c.l.b16 %v1482
  %v1515 = vunpack.c.l.b16 %v1483
  %v1516 = vunpack.c.l.b16 %v1484
  %v1517 = vunpack.c.l.b16 %v1485
  %v1518 = vunpack.c.l.b16 %v1486
  %v1519 = vunpack.c.l.b16 %v1487
  %v1520 = vunpack.c.l.b16 %v1488
  %v1521 = vunpack.c.l.b16 %v1489
  %v1522 = vunpack.c.l.b16 %v1490
  %v1523 = vpack.c.b16 %v1508, %v1507
  %v1524 = vpack.c.b16 %v1510, %v1509
  %v1525 = vpack.c.b16 %v1512, %v1511
  %v1526 = vpack.c.b16 %v1514, %v1513
  %v1527 = vpack.c.b16 %v1516, %v1515
  %v1528 = vpack.c.b16 %v1518, %v1517
  %v1529 = vpack.c.b16 %v1520, %v1519
  %v1530 = vpack.c.b16 %v1522, %v1521
  %1539 = vmatprep.subr.bf16.mxu0 0
  %1540 = vmatpush1.bf16.msra.mxu0 %v1523
  %1541 = vmatprep.subr.bf16.mxu0 0
  %1542 = vmatpush1.bf16.msra.mxu0 %v1524
  %1543 = vmatprep.subr.bf16.mxu0 0
  %1544 = vmatpush1.bf16.msra.mxu0 %v1525
  %1545 = vmatprep.subr.bf16.mxu0 0
  %1546 = vmatpush1.bf16.msra.mxu0 %v1526
  %1547 = vmatprep.subr.bf16.mxu0 0
  %1548 = vmatpush1.bf16.msra.mxu0 %v1527
  %1549 = vmatprep.subr.bf16.mxu0 0
  %1550 = vmatpush1.bf16.msra.mxu0 %v1528
  %1551 = vmatprep.subr.bf16.mxu0 0
  %1552 = vmatpush1.bf16.msra.mxu0 %v1529
  %1553 = vmatprep.subr.bf16.mxu0 0
  %1554 = vmatpush1.bf16.msra.mxu0 %v1530
  %1555 = vmatprep.subr.bf16.mxu0 0
  %1556 = vmatpush1.bf16.msra.mxu0 0
  %1557 = vmatprep.subr.bf16.mxu0 0
  %1558 = vmatpush1.bf16.msra.mxu0 0
  %1559 = vmatprep.subr.bf16.mxu0 0
  %1560 = vmatpush1.bf16.msra.mxu0 0
  %1561 = vmatprep.subr.bf16.mxu0 0
  %1562 = vmatpush1.bf16.msra.mxu0 0
  %1563 = vmatprep.subr.bf16.mxu0 0
  %1564 = vmatpush1.bf16.msra.mxu0 0
  %1565 = vmatprep.subr.bf16.mxu0 0
  %1566 = vmatpush1.bf16.msra.mxu0 0
  %1567 = vmatprep.subr.bf16.mxu0 0
  %1568 = vmatpush1.bf16.msra.mxu0 0
  %1569 = vmatprep.subr.bf16.mxu0 0
  %1570 = vmatpush1.bf16.msra.mxu0 0
  %1571 = vmatprep.mubr.bf16.mxu0 0
  %1572 = vmatmul.mubr.bf16.gmra.mrb[0].mxu0 %v1474
  %v1573 = vpop.f32.mrb[0].mxu0
  %v1574 = vadd.f32 0.0, %v1573
  %v1575 = vpop.f32.mrb[0].mxu0
  %v1576 = vpop.f32.mrb[0].mxu0
  %v1577 = vpop.f32.mrb[0].mxu0
  %1578 = vdwg.mxu0
  %v1579 = vadd.f32 %v1473, %v1574
  %v1580 = vmul.f32 %v1579, 0.5
  %v1581 = vsel %vm69, %v1579, %v1580
  %v1582 = vtanh.pop %v1581
  %v1583 = vadd.f32 %v1582, 1.0
  %v1584 = vmul.f32 %v1583, 0.5
  %v1585 = vsel %vm69, %v1582, %v1584
  %v1586 = vmul.f32 %v1585, %v1318
  %1588 = vrot.lane.b32.xlu0 %v1585, 64
  %v1589 = vpop.permute.xlu0 %1588
  %v1591 = vmul.f32 %v1585, %v1589
  %1593 = vrot.lane.b32.xlu0 %v1591, 32
  %v1594 = vpop.permute.xlu0 %1593
  %v1596 = vadd.f32 %v1586, %v1594
  %v1597 = vtanh.pop %v1596
  %1599 = vrot.lane.b32.xlu0 %v1597, 64
  %v1600 = vpop.permute.xlu0 %1599
  %v1602 = vmul.f32 %v1585, %v1600
  %1604 = vrot.lane.b32.xlu0 %v1602, 32
  %v1605 = vpop.permute.xlu0 %1604
  %v1607 = vsel %vm213, %v1605, 0.0
  %s1608 = scalar_lea.vmem %s4, 40
  %1609 = vst [vmem:[%s1608] sm:$0xff] %v1607
  %s1610 = scalar_lea.vmem %s44, 8
  %v1611 = vld [vmem:[%s1610] sm:$0xf]
  %v1612 = vunpack.c.l.bf16 %v1611
  %v1613 = vpack.c.bf16 %v1468, %v1468
  %v1614 = vld [vmem:[%s3] sm:$0xf]
  %v1615 = vld [vmem:[%s3 + $0x4] sm:$0xf]
  %v1616 = vld [vmem:[%s3 + $0x8] sm:$0xf]
  %v1617 = vld [vmem:[%s3 + $0xc] sm:$0xf]
  %v1618 = vld [vmem:[%s3 + $0x10] sm:$0xf]
  %v1619 = vld [vmem:[%s3 + $0x14] sm:$0xf]
  %v1620 = vld [vmem:[%s3 + $0x18] sm:$0xf]
  %v1621 = vld [vmem:[%s3 + $0x1c] sm:$0xf]
  %v1622 = vld [vmem:[%s3 + $0x20] sm:$0xf]
  %v1623 = vld [vmem:[%s3 + $0x24] sm:$0xf]
  %v1624 = vld [vmem:[%s3 + $0x28] sm:$0xf]
  %v1625 = vld [vmem:[%s3 + $0x2c] sm:$0xf]
  %v1626 = vld [vmem:[%s3 + $0x30] sm:$0xf]
  %v1627 = vld [vmem:[%s3 + $0x34] sm:$0xf]
  %v1628 = vld [vmem:[%s3 + $0x38] sm:$0xf]
  %v1629 = vld [vmem:[%s3 + $0x3c] sm:$0xf]
  %v1646 = vunpack.c.l.b16 %v1614
  %v1647 = vunpack.c.l.b16 %v1615
  %v1648 = vunpack.c.l.b16 %v1616
  %v1649 = vunpack.c.l.b16 %v1617
  %v1650 = vunpack.c.l.b16 %v1618
  %v1651 = vunpack.c.l.b16 %v1619
  %v1652 = vunpack.c.l.b16 %v1620
  %v1653 = vunpack.c.l.b16 %v1621
  %v1654 = vunpack.c.l.b16 %v1622
  %v1655 = vunpack.c.l.b16 %v1623
  %v1656 = vunpack.c.l.b16 %v1624
  %v1657 = vunpack.c.l.b16 %v1625
  %v1658 = vunpack.c.l.b16 %v1626
  %v1659 = vunpack.c.l.b16 %v1627
  %v1660 = vunpack.c.l.b16 %v1628
  %v1661 = vunpack.c.l.b16 %v1629
  %v1662 = vpack.c.b16 %v1647, %v1646
  %v1663 = vpack.c.b16 %v1649, %v1648
  %v1664 = vpack.c.b16 %v1651, %v1650
  %v1665 = vpack.c.b16 %v1653, %v1652
  %v1666 = vpack.c.b16 %v1655, %v1654
  %v1667 = vpack.c.b16 %v1657, %v1656
  %v1668 = vpack.c.b16 %v1659, %v1658
  %v1669 = vpack.c.b16 %v1661, %v1660
  %1678 = vmatprep.subr.bf16.mxu0 0
  %1679 = vmatpush1.bf16.msra.mxu0 %v1662
  %1680 = vmatprep.subr.bf16.mxu0 0
  %1681 = vmatpush1.bf16.msra.mxu0 %v1663
  %1682 = vmatprep.subr.bf16.mxu0 0
  %1683 = vmatpush1.bf16.msra.mxu0 %v1664
  %1684 = vmatprep.subr.bf16.mxu0 0
  %1685 = vmatpush1.bf16.msra.mxu0 %v1665
  %1686 = vmatprep.subr.bf16.mxu0 0
  %1687 = vmatpush1.bf16.msra.mxu0 %v1666
  %1688 = vmatprep.subr.bf16.mxu0 0
  %1689 = vmatpush1.bf16.msra.mxu0 %v1667
  %1690 = vmatprep.subr.bf16.mxu0 0
  %1691 = vmatpush1.bf16.msra.mxu0 %v1668
  %1692 = vmatprep.subr.bf16.mxu0 0
  %1693 = vmatpush1.bf16.msra.mxu0 %v1669
  %1694 = vmatprep.subr.bf16.mxu0 0
  %1695 = vmatpush1.bf16.msra.mxu0 0
  %1696 = vmatprep.subr.bf16.mxu0 0
  %1697 = vmatpush1.bf16.msra.mxu0 0
  %1698 = vmatprep.subr.bf16.mxu0 0
  %1699 = vmatpush1.bf16.msra.mxu0 0
  %1700 = vmatprep.subr.bf16.mxu0 0
  %1701 = vmatpush1.bf16.msra.mxu0 0
  %1702 = vmatprep.subr.bf16.mxu0 0
  %1703 = vmatpush1.bf16.msra.mxu0 0
  %1704 = vmatprep.subr.bf16.mxu0 0
  %1705 = vmatpush1.bf16.msra.mxu0 0
  %1706 = vmatprep.subr.bf16.mxu0 0
  %1707 = vmatpush1.bf16.msra.mxu0 0
  %1708 = vmatprep.subr.bf16.mxu0 0
  %1709 = vmatpush1.bf16.msra.mxu0 0
  %1710 = vmatprep.mubr.bf16.mxu0 0
  %1711 = vmatmul.mubr.bf16.gmra.mrb[0].mxu0 %v1613
  %v1712 = vpop.f32.mrb[0].mxu0
  %v1713 = vadd.f32 0.0, %v1712
  %v1714 = vpop.f32.mrb[0].mxu0
  %v1715 = vpop.f32.mrb[0].mxu0
  %v1716 = vpop.f32.mrb[0].mxu0
  %1717 = vdwg.mxu0
  %v1718 = vadd.f32 %v1612, %v1713
  %v1719 = vmul.f32 %v1718, 0.5
  %v1720 = vsel %vm69, %v1718, %v1719
  %v1721 = vtanh.pop %v1720
  %v1722 = vadd.f32 %v1721, 1.0
  %v1723 = vmul.f32 %v1722, 0.5
  %v1724 = vsel %vm69, %v1721, %v1723
  %v1725 = vmul.f32 %v1724, %v1457
  %1727 = vrot.lane.b32.xlu0 %v1724, 64
  %v1728 = vpop.permute.xlu0 %1727
  %v1730 = vmul.f32 %v1724, %v1728
  %1732 = vrot.lane.b32.xlu0 %v1730, 32
  %v1733 = vpop.permute.xlu0 %1732
  %v1735 = vadd.f32 %v1725, %v1733
  %v1736 = vtanh.pop %v1735
  %1738 = vrot.lane.b32.xlu0 %v1736, 64
  %v1739 = vpop.permute.xlu0 %1738
  %v1741 = vmul.f32 %v1724, %v1739
  %1743 = vrot.lane.b32.xlu0 %v1741, 32
  %v1744 = vpop.permute.xlu0 %1743
  %v1746 = vsel %vm213, %v1744, 0.0
  %s1747 = scalar_lea.vmem %s52, 16
  %1748 = vst [vmem:[%s1747] sm:$0xff] %v1746
  %s1749 = scalar_lea.vmem %s0, 24
  %v1750 = vld [vmem:[%s1749] sm:$0xf]
  %v1751 = vunpack.c.l.bf16 %v1750
  %v1752 = vpack.c.bf16 %v1607, %v1607
  %v1753 = vld [vmem:[%s2] sm:$0xf]
  %v1754 = vld [vmem:[%s2 + $0x4] sm:$0xf]
  %v1755 = vld [vmem:[%s2 + $0x8] sm:$0xf]
  %v1756 = vld [vmem:[%s2 + $0xc] sm:$0xf]
  %v1757 = vld [vmem:[%s2 + $0x10] sm:$0xf]
  %v1758 = vld [vmem:[%s2 + $0x14] sm:$0xf]
  %v1759 = vld [vmem:[%s2 + $0x18] sm:$0xf]
  %v1760 = vld [vmem:[%s2 + $0x1c] sm:$0xf]
  %v1761 = vld [vmem:[%s2 + $0x20] sm:$0xf]
  %v1762 = vld [vmem:[%s2 + $0x24] sm:$0xf]
  %v1763 = vld [vmem:[%s2 + $0x28] sm:$0xf]
  %v1764 = vld [vmem:[%s2 + $0x2c] sm:$0xf]
  %v1765 = vld [vmem:[%s2 + $0x30] sm:$0xf]
  %v1766 = vld [vmem:[%s2 + $0x34] sm:$0xf]
  %v1767 = vld [vmem:[%s2 + $0x38] sm:$0xf]
  %v1768 = vld [vmem:[%s2 + $0x3c] sm:$0xf]
  %v1785 = vunpack.c.l.b16 %v1753
  %v1786 = vunpack.c.l.b16 %v1754
  %v1787 = vunpack.c.l.b16 %v1755
  %v1788 = vunpack.c.l.b16 %v1756
  %v1789 = vunpack.c.l.b16 %v1757
  %v1790 = vunpack.c.l.b16 %v1758
  %v1791 = vunpack.c.l.b16 %v1759
  %v1792 = vunpack.c.l.b16 %v1760
  %v1793 = vunpack.c.l.b16 %v1761
  %v1794 = vunpack.c.l.b16 %v1762
  %v1795 = vunpack.c.l.b16 %v1763
  %v1796 = vunpack.c.l.b16 %v1764
  %v1797 = vunpack.c.l.b16 %v1765
  %v1798 = vunpack.c.l.b16 %v1766
  %v1799 = vunpack.c.l.b16 %v1767
  %v1800 = vunpack.c.l.b16 %v1768
  %v1801 = vpack.c.b16 %v1786, %v1785
  %v1802 = vpack.c.b16 %v1788, %v1787
  %v1803 = vpack.c.b16 %v1790, %v1789
  %v1804 = vpack.c.b16 %v1792, %v1791
  %v1805 = vpack.c.b16 %v1794, %v1793
  %v1806 = vpack.c.b16 %v1796, %v1795
  %v1807 = vpack.c.b16 %v1798, %v1797
  %v1808 = vpack.c.b16 %v1800, %v1799
  %1817 = vmatprep.subr.bf16.mxu0 0
  %1818 = vmatpush1.bf16.msra.mxu0 %v1801
  %1819 = vmatprep.subr.bf16.mxu0 0
  %1820 = vmatpush1.bf16.msra.mxu0 %v1802
  %1821 = vmatprep.subr.bf16.mxu0 0
  %1822 = vmatpush1.bf16.msra.mxu0 %v1803
  %1823 = vmatprep.subr.bf16.mxu0 0
  %1824 = vmatpush1.bf16.msra.mxu0 %v1804
  %1825 = vmatprep.subr.bf16.mxu0 0
  %1826 = vmatpush1.bf16.msra.mxu0 %v1805
  %1827 = vmatprep.subr.bf16.mxu0 0
  %1828 = vmatpush1.bf16.msra.mxu0 %v1806
  %1829 = vmatprep.subr.bf16.mxu0 0
  %1830 = vmatpush1.bf16.msra.mxu0 %v1807
  %1831 = vmatprep.subr.bf16.mxu0 0
  %1832 = vmatpush1.bf16.msra.mxu0 %v1808
  %1833 = vmatprep.subr.bf16.mxu0 0
  %1834 = vmatpush1.bf16.msra.mxu0 0
  %1835 = vmatprep.subr.bf16.mxu0 0
  %1836 = vmatpush1.bf16.msra.mxu0 0
  %1837 = vmatprep.subr.bf16.mxu0 0
  %1838 = vmatpush1.bf16.msra.mxu0 0
  %1839 = vmatprep.subr.bf16.mxu0 0
  %1840 = vmatpush1.bf16.msra.mxu0 0
  %1841 = vmatprep.subr.bf16.mxu0 0
  %1842 = vmatpush1.bf16.msra.mxu0 0
  %1843 = vmatprep.subr.bf16.mxu0 0
  %1844 = vmatpush1.bf16.msra.mxu0 0
  %1845 = vmatprep.subr.bf16.mxu0 0
  %1846 = vmatpush1.bf16.msra.mxu0 0
  %1847 = vmatprep.subr.bf16.mxu0 0
  %1848 = vmatpush1.bf16.msra.mxu0 0
  %1849 = vmatprep.mubr.bf16.mxu0 0
  %1850 = vmatmul.mubr.bf16.gmra.mrb[0].mxu0 %v1752
  %v1851 = vpop.f32.mrb[0].mxu0
  %v1852 = vadd.f32 0.0, %v1851
  %v1853 = vpop.f32.mrb[0].mxu0
  %v1854 = vpop.f32.mrb[0].mxu0
  %v1855 = vpop.f32.mrb[0].mxu0
  %1856 = vdwg.mxu0
  %v1857 = vadd.f32 %v1751, %v1852
  %v1858 = vmul.f32 %v1857, 0.5
  %v1859 = vsel %vm69, %v1857, %v1858
  %v1860 = vtanh.pop %v1859
  %v1861 = vadd.f32 %v1860, 1.0
  %v1862 = vmul.f32 %v1861, 0.5
  %v1863 = vsel %vm69, %v1860, %v1862
  %v1864 = vmul.f32 %v1863, %v1596
  %1866 = vrot.lane.b32.xlu0 %v1863, 64
  %v1867 = vpop.permute.xlu0 %1866
  %v1869 = vmul.f32 %v1863, %v1867
  %1871 = vrot.lane.b32.xlu0 %v1869, 32
  %v1872 = vpop.permute.xlu0 %1871
  %v1874 = vadd.f32 %v1864, %v1872
  %v1875 = vtanh.pop %v1874
  %1877 = vrot.lane.b32.xlu0 %v1875, 64
  %v1878 = vpop.permute.xlu0 %1877
  %v1880 = vmul.f32 %v1863, %v1878
  %1882 = vrot.lane.b32.xlu0 %v1880, 32
  %v1883 = vpop.permute.xlu0 %1882
  %v1885 = vsel %vm213, %v1883, 0.0
  %s1886 = scalar_lea.vmem %s4, 48
  %1887 = vst [vmem:[%s1886] sm:$0xff] %v1885
  %s1888 = scalar_lea.vmem %s44, 4
  %v1889 = vld [vmem:[%s1888] sm:$0xf]
  %v1890 = vunpack.c.l.bf16 %v1889
  %v1891 = vpack.c.bf16 %v1746, %v1746
  %v1892 = vld [vmem:[%s3] sm:$0xf]
  %v1893 = vld [vmem:[%s3 + $0x4] sm:$0xf]
  %v1894 = vld [vmem:[%s3 + $0x8] sm:$0xf]
  %v1895 = vld [vmem:[%s3 + $0xc] sm:$0xf]
  %v1896 = vld [vmem:[%s3 + $0x10] sm:$0xf]
  %v1897 = vld [vmem:[%s3 + $0x14] sm:$0xf]
  %v1898 = vld [vmem:[%s3 + $0x18] sm:$0xf]
  %v1899 = vld [vmem:[%s3 + $0x1c] sm:$0xf]
  %v1900 = vld [vmem:[%s3 + $0x20] sm:$0xf]
  %v1901 = vld [vmem:[%s3 + $0x24] sm:$0xf]
  %v1902 = vld [vmem:[%s3 + $0x28] sm:$0xf]
  %v1903 = vld [vmem:[%s3 + $0x2c] sm:$0xf]
  %v1904 = vld [vmem:[%s3 + $0x30] sm:$0xf]
  %v1905 = vld [vmem:[%s3 + $0x34] sm:$0xf]
  %v1906 = vld [vmem:[%s3 + $0x38] sm:$0xf]
  %v1907 = vld [vmem:[%s3 + $0x3c] sm:$0xf]
  %v1924 = vunpack.c.l.b16 %v1892
  %v1925 = vunpack.c.l.b16 %v1893
  %v1926 = vunpack.c.l.b16 %v1894
  %v1927 = vunpack.c.l.b16 %v1895
  %v1928 = vunpack.c.l.b16 %v1896
  %v1929 = vunpack.c.l.b16 %v1897
  %v1930 = vunpack.c.l.b16 %v1898
  %v1931 = vunpack.c.l.b16 %v1899
  %v1932 = vunpack.c.l.b16 %v1900
  %v1933 = vunpack.c.l.b16 %v1901
  %v1934 = vunpack.c.l.b16 %v1902
  %v1935 = vunpack.c.l.b16 %v1903
  %v1936 = vunpack.c.l.b16 %v1904
  %v1937 = vunpack.c.l.b16 %v1905
  %v1938 = vunpack.c.l.b16 %v1906
  %v1939 = vunpack.c.l.b16 %v1907
  %v1940 = vpack.c.b16 %v1925, %v1924
  %v1941 = vpack.c.b16 %v1927, %v1926
  %v1942 = vpack.c.b16 %v1929, %v1928
  %v1943 = vpack.c.b16 %v1931, %v1930
  %v1944 = vpack.c.b16 %v1933, %v1932
  %v1945 = vpack.c.b16 %v1935, %v1934
  %v1946 = vpack.c.b16 %v1937, %v1936
  %v1947 = vpack.c.b16 %v1939, %v1938
  %1956 = vmatprep.subr.bf16.mxu0 0
  %1957 = vmatpush1.bf16.msra.mxu0 %v1940
  %1958 = vmatprep.subr.bf16.mxu0 0
  %1959 = vmatpush1.bf16.msra.mxu0 %v1941
  %1960 = vmatprep.subr.bf16.mxu0 0
  %1961 = vmatpush1.bf16.msra.mxu0 %v1942
  %1962 = vmatprep.subr.bf16.mxu0 0
  %1963 = vmatpush1.bf16.msra.mxu0 %v1943
  %1964 = vmatprep.subr.bf16.mxu0 0
  %1965 = vmatpush1.bf16.msra.mxu0 %v1944
  %1966 = vmatprep.subr.bf16.mxu0 0
  %1967 = vmatpush1.bf16.msra.mxu0 %v1945
  %1968 = vmatprep.subr.bf16.mxu0 0
  %1969 = vmatpush1.bf16.msra.mxu0 %v1946
  %1970 = vmatprep.subr.bf16.mxu0 0
  %1971 = vmatpush1.bf16.msra.mxu0 %v1947
  %1972 = vmatprep.subr.bf16.mxu0 0
  %1973 = vmatpush1.bf16.msra.mxu0 0
  %1974 = vmatprep.subr.bf16.mxu0 0
  %1975 = vmatpush1.bf16.msra.mxu0 0
  %1976 = vmatprep.subr.bf16.mxu0 0
  %1977 = vmatpush1.bf16.msra.mxu0 0
  %1978 = vmatprep.subr.bf16.mxu0 0
  %1979 = vmatpush1.bf16.msra.mxu0 0
  %1980 = vmatprep.subr.bf16.mxu0 0
  %1981 = vmatpush1.bf16.msra.mxu0 0
  %1982 = vmatprep.subr.bf16.mxu0 0
  %1983 = vmatpush1.bf16.msra.mxu0 0
  %1984 = vmatprep.subr.bf16.mxu0 0
  %1985 = vmatpush1.bf16.msra.mxu0 0
  %1986 = vmatprep.subr.bf16.mxu0 0
  %1987 = vmatpush1.bf16.msra.mxu0 0
  %1988 = vmatprep.mubr.bf16.mxu0 0
  %1989 = vmatmul.mubr.bf16.gmra.mrb[0].mxu0 %v1891
  %v1990 = vpop.f32.mrb[0].mxu0
  %v1991 = vadd.f32 0.0, %v1990
  %v1992 = vpop.f32.mrb[0].mxu0
  %v1993 = vpop.f32.mrb[0].mxu0
  %v1994 = vpop.f32.mrb[0].mxu0
  %1995 = vdwg.mxu0
  %v1996 = vadd.f32 %v1890, %v1991
  %v1997 = vmul.f32 %v1996, 0.5
  %v1998 = vsel %vm69, %v1996, %v1997
  %v1999 = vtanh.pop %v1998
  %v2000 = vadd.f32 %v1999, 1.0
  %v2001 = vmul.f32 %v2000, 0.5
  %v2002 = vsel %vm69, %v1999, %v2001
  %v2003 = vmul.f32 %v2002, %v1735
  %2005 = vrot.lane.b32.xlu0 %v2002, 64
  %v2006 = vpop.permute.xlu0 %2005
  %v2008 = vmul.f32 %v2002, %v2006
  %2010 = vrot.lane.b32.xlu0 %v2008, 32
  %v2011 = vpop.permute.xlu0 %2010
  %v2013 = vadd.f32 %v2003, %v2011
  %v2014 = vtanh.pop %v2013
  %2016 = vrot.lane.b32.xlu0 %v2014, 64
  %v2017 = vpop.permute.xlu0 %2016
  %v2019 = vmul.f32 %v2002, %v2017
  %2021 = vrot.lane.b32.xlu0 %v2019, 32
  %v2022 = vpop.permute.xlu0 %2021
  %v2024 = vsel %vm213, %v2022, 0.0
  %s2025 = scalar_lea.vmem %s52, 8
  %2026 = vst [vmem:[%s2025] sm:$0xff] %v2024
  %s2027 = scalar_lea.vmem %s0, 28
  %v2028 = vld [vmem:[%s2027] sm:$0xf]
  %v2029 = vunpack.c.l.bf16 %v2028
  %v2030 = vpack.c.bf16 %v1885, %v1885
  %v2031 = vld [vmem:[%s2] sm:$0xf]
  %v2032 = vld [vmem:[%s2 + $0x4] sm:$0xf]
  %v2033 = vld [vmem:[%s2 + $0x8] sm:$0xf]
  %v2034 = vld [vmem:[%s2 + $0xc] sm:$0xf]
  %v2035 = vld [vmem:[%s2 + $0x10] sm:$0xf]
  %v2036 = vld [vmem:[%s2 + $0x14] sm:$0xf]
  %v2037 = vld [vmem:[%s2 + $0x18] sm:$0xf]
  %v2038 = vld [vmem:[%s2 + $0x1c] sm:$0xf]
  %v2039 = vld [vmem:[%s2 + $0x20] sm:$0xf]
  %v2040 = vld [vmem:[%s2 + $0x24] sm:$0xf]
  %v2041 = vld [vmem:[%s2 + $0x28] sm:$0xf]
  %v2042 = vld [vmem:[%s2 + $0x2c] sm:$0xf]
  %v2043 = vld [vmem:[%s2 + $0x30] sm:$0xf]
  %v2044 = vld [vmem:[%s2 + $0x34] sm:$0xf]
  %v2045 = vld [vmem:[%s2 + $0x38] sm:$0xf]
  %v2046 = vld [vmem:[%s2 + $0x3c] sm:$0xf]
  %v2063 = vunpack.c.l.b16 %v2031
  %v2064 = vunpack.c.l.b16 %v2032
  %v2065 = vunpack.c.l.b16 %v2033
  %v2066 = vunpack.c.l.b16 %v2034
  %v2067 = vunpack.c.l.b16 %v2035
  %v2068 = vunpack.c.l.b16 %v2036
  %v2069 = vunpack.c.l.b16 %v2037
  %v2070 = vunpack.c.l.b16 %v2038
  %v2071 = vunpack.c.l.b16 %v2039
  %v2072 = vunpack.c.l.b16 %v2040
  %v2073 = vunpack.c.l.b16 %v2041
  %v2074 = vunpack.c.l.b16 %v2042
  %v2075 = vunpack.c.l.b16 %v2043
  %v2076 = vunpack.c.l.b16 %v2044
  %v2077 = vunpack.c.l.b16 %v2045
  %v2078 = vunpack.c.l.b16 %v2046
  %v2079 = vpack.c.b16 %v2064, %v2063
  %v2080 = vpack.c.b16 %v2066, %v2065
  %v2081 = vpack.c.b16 %v2068, %v2067
  %v2082 = vpack.c.b16 %v2070, %v2069
  %v2083 = vpack.c.b16 %v2072, %v2071
  %v2084 = vpack.c.b16 %v2074, %v2073
  %v2085 = vpack.c.b16 %v2076, %v2075
  %v2086 = vpack.c.b16 %v2078, %v2077
  %2095 = vmatprep.subr.bf16.mxu0 0
  %2096 = vmatpush1.bf16.msra.mxu0 %v2079
  %2097 = vmatprep.subr.bf16.mxu0 0
  %2098 = vmatpush1.bf16.msra.mxu0 %v2080
  %2099 = vmatprep.subr.bf16.mxu0 0
  %2100 = vmatpush1.bf16.msra.mxu0 %v2081
  %2101 = vmatprep.subr.bf16.mxu0 0
  %2102 = vmatpush1.bf16.msra.mxu0 %v2082
  %2103 = vmatprep.subr.bf16.mxu0 0
  %2104 = vmatpush1.bf16.msra.mxu0 %v2083
  %2105 = vmatprep.subr.bf16.mxu0 0
  %2106 = vmatpush1.bf16.msra.mxu0 %v2084
  %2107 = vmatprep.subr.bf16.mxu0 0
  %2108 = vmatpush1.bf16.msra.mxu0 %v2085
  %2109 = vmatprep.subr.bf16.mxu0 0
  %2110 = vmatpush1.bf16.msra.mxu0 %v2086
  %2111 = vmatprep.subr.bf16.mxu0 0
  %2112 = vmatpush1.bf16.msra.mxu0 0
  %2113 = vmatprep.subr.bf16.mxu0 0
  %2114 = vmatpush1.bf16.msra.mxu0 0
  %2115 = vmatprep.subr.bf16.mxu0 0
  %2116 = vmatpush1.bf16.msra.mxu0 0
  %2117 = vmatprep.subr.bf16.mxu0 0
  %2118 = vmatpush1.bf16.msra.mxu0 0
  %2119 = vmatprep.subr.bf16.mxu0 0
  %2120 = vmatpush1.bf16.msra.mxu0 0
  %2121 = vmatprep.subr.bf16.mxu0 0
  %2122 = vmatpush1.bf16.msra.mxu0 0
  %2123 = vmatprep.subr.bf16.mxu0 0
  %2124 = vmatpush1.bf16.msra.mxu0 0
  %2125 = vmatprep.subr.bf16.mxu0 0
  %2126 = vmatpush1.bf16.msra.mxu0 0
  %2127 = vmatprep.mubr.bf16.mxu0 0
  %2128 = vmatmul.mubr.bf16.gmra.mrb[0].mxu0 %v2030
  %v2129 = vpop.f32.mrb[0].mxu0
  %v2130 = vadd.f32 0.0, %v2129
  %v2131 = vpop.f32.mrb[0].mxu0
  %v2132 = vpop.f32.mrb[0].mxu0
  %v2133 = vpop.f32.mrb[0].mxu0
  %2134 = vdwg.mxu0
  %v2135 = vadd.f32 %v2029, %v2130
  %v2136 = vmul.f32 %v2135, 0.5
  %v2137 = vsel %vm69, %v2135, %v2136
  %v2138 = vtanh.pop %v2137
  %v2139 = vadd.f32 %v2138, 1.0
  %v2140 = vmul.f32 %v2139, 0.5
  %v2141 = vsel %vm69, %v2138, %v2140
  %v2142 = vmul.f32 %v2141, %v1874
  %2144 = vrot.lane.b32.xlu0 %v2141, 64
  %v2145 = vpop.permute.xlu0 %2144
  %v2147 = vmul.f32 %v2141, %v2145
  %2149 = vrot.lane.b32.xlu0 %v2147, 32
  %v2150 = vpop.permute.xlu0 %2149
  %v2152 = vadd.f32 %v2142, %v2150
  %v2153 = vtanh.pop %v2152
  %2155 = vrot.lane.b32.xlu0 %v2153, 64
  %v2156 = vpop.permute.xlu0 %2155
  %v2158 = vmul.f32 %v2141, %v2156
  %2160 = vrot.lane.b32.xlu0 %v2158, 32
  %v2161 = vpop.permute.xlu0 %2160
  %v2163 = vsel %vm213, %v2161, 0.0
  %s2164 = scalar_lea.vmem %s4, 56
  %2165 = vst [vmem:[%s2164] sm:$0xff] %v2163
  %v2166 = vld [vmem:[%s44] sm:$0xf]
  %v2167 = vunpack.c.l.bf16 %v2166
  %v2168 = vpack.c.bf16 %v2024, %v2024
  %v2169 = vld [vmem:[%s3] sm:$0xf]
  %v2170 = vld [vmem:[%s3 + $0x4] sm:$0xf]
  %v2171 = vld [vmem:[%s3 + $0x8] sm:$0xf]
  %v2172 = vld [vmem:[%s3 + $0xc] sm:$0xf]
  %v2173 = vld [vmem:[%s3 + $0x10] sm:$0xf]
  %v2174 = vld [vmem:[%s3 + $0x14] sm:$0xf]
  %v2175 = vld [vmem:[%s3 + $0x18] sm:$0xf]
  %v2176 = vld [vmem:[%s3 + $0x1c] sm:$0xf]
  %v2177 = vld [vmem:[%s3 + $0x20] sm:$0xf]
  %v2178 = vld [vmem:[%s3 + $0x24] sm:$0xf]
  %v2179 = vld [vmem:[%s3 + $0x28] sm:$0xf]
  %v2180 = vld [vmem:[%s3 + $0x2c] sm:$0xf]
  %v2181 = vld [vmem:[%s3 + $0x30] sm:$0xf]
  %v2182 = vld [vmem:[%s3 + $0x34] sm:$0xf]
  %v2183 = vld [vmem:[%s3 + $0x38] sm:$0xf]
  %v2184 = vld [vmem:[%s3 + $0x3c] sm:$0xf]
  %v2201 = vunpack.c.l.b16 %v2169
  %v2202 = vunpack.c.l.b16 %v2170
  %v2203 = vunpack.c.l.b16 %v2171
  %v2204 = vunpack.c.l.b16 %v2172
  %v2205 = vunpack.c.l.b16 %v2173
  %v2206 = vunpack.c.l.b16 %v2174
  %v2207 = vunpack.c.l.b16 %v2175
  %v2208 = vunpack.c.l.b16 %v2176
  %v2209 = vunpack.c.l.b16 %v2177
  %v2210 = vunpack.c.l.b16 %v2178
  %v2211 = vunpack.c.l.b16 %v2179
  %v2212 = vunpack.c.l.b16 %v2180
  %v2213 = vunpack.c.l.b16 %v2181
  %v2214 = vunpack.c.l.b16 %v2182
  %v2215 = vunpack.c.l.b16 %v2183
  %v2216 = vunpack.c.l.b16 %v2184
  %v2217 = vpack.c.b16 %v2202, %v2201
  %v2218 = vpack.c.b16 %v2204, %v2203
  %v2219 = vpack.c.b16 %v2206, %v2205
  %v2220 = vpack.c.b16 %v2208, %v2207
  %v2221 = vpack.c.b16 %v2210, %v2209
  %v2222 = vpack.c.b16 %v2212, %v2211
  %v2223 = vpack.c.b16 %v2214, %v2213
  %v2224 = vpack.c.b16 %v2216, %v2215
  %2233 = vmatprep.subr.bf16.mxu0 0
  %2234 = vmatpush1.bf16.msra.mxu0 %v2217
  %2235 = vmatprep.subr.bf16.mxu0 0
  %2236 = vmatpush1.bf16.msra.mxu0 %v2218
  %2237 = vmatprep.subr.bf16.mxu0 0
  %2238 = vmatpush1.bf16.msra.mxu0 %v2219
  %2239 = vmatprep.subr.bf16.mxu0 0
  %2240 = vmatpush1.bf16.msra.mxu0 %v2220
  %2241 = vmatprep.subr.bf16.mxu0 0
  %2242 = vmatpush1.bf16.msra.mxu0 %v2221
  %2243 = vmatprep.subr.bf16.mxu0 0
  %2244 = vmatpush1.bf16.msra.mxu0 %v2222
  %2245 = vmatprep.subr.bf16.mxu0 0
  %2246 = vmatpush1.bf16.msra.mxu0 %v2223
  %2247 = vmatprep.subr.bf16.mxu0 0
  %2248 = vmatpush1.bf16.msra.mxu0 %v2224
  %2249 = vmatprep.subr.bf16.mxu0 0
  %2250 = vmatpush1.bf16.msra.mxu0 0
  %2251 = vmatprep.subr.bf16.mxu0 0
  %2252 = vmatpush1.bf16.msra.mxu0 0
  %2253 = vmatprep.subr.bf16.mxu0 0
  %2254 = vmatpush1.bf16.msra.mxu0 0
  %2255 = vmatprep.subr.bf16.mxu0 0
  %2256 = vmatpush1.bf16.msra.mxu0 0
  %2257 = vmatprep.subr.bf16.mxu0 0
  %2258 = vmatpush1.bf16.msra.mxu0 0
  %2259 = vmatprep.subr.bf16.mxu0 0
  %2260 = vmatpush1.bf16.msra.mxu0 0
  %2261 = vmatprep.subr.bf16.mxu0 0
  %2262 = vmatpush1.bf16.msra.mxu0 0
  %2263 = vmatprep.subr.bf16.mxu0 0
  %2264 = vmatpush1.bf16.msra.mxu0 0
  %2265 = vmatprep.mubr.bf16.mxu0 0
  %2266 = vmatmul.mubr.bf16.gmra.mrb[0].mxu0 %v2168
  %v2267 = vpop.f32.mrb[0].mxu0
  %v2268 = vadd.f32 0.0, %v2267
  %v2269 = vpop.f32.mrb[0].mxu0
  %v2270 = vpop.f32.mrb[0].mxu0
  %v2271 = vpop.f32.mrb[0].mxu0
  %2272 = vdwg.mxu0
  %v2273 = vadd.f32 %v2167, %v2268
  %v2274 = vmul.f32 %v2273, 0.5
  %v2275 = vsel %vm69, %v2273, %v2274
  %v2276 = vtanh.pop %v2275
  %v2277 = vadd.f32 %v2276, 1.0
  %v2278 = vmul.f32 %v2277, 0.5
  %v2279 = vsel %vm69, %v2276, %v2278
  %v2280 = vmul.f32 %v2279, %v2013
  %2282 = vrot.lane.b32.xlu0 %v2279, 64
  %v2283 = vpop.permute.xlu0 %2282
  %v2285 = vmul.f32 %v2279, %v2283
  %2287 = vrot.lane.b32.xlu0 %v2285, 32
  %v2288 = vpop.permute.xlu0 %2287
  %v2290 = vadd.f32 %v2280, %v2288
  %v2291 = vtanh.pop %v2290
  %2293 = vrot.lane.b32.xlu0 %v2291, 64
  %v2294 = vpop.permute.xlu0 %2293
  %v2296 = vmul.f32 %v2279, %v2294
  %2298 = vrot.lane.b32.xlu0 %v2296, 32
  %v2299 = vpop.permute.xlu0 %2298
  %v2301 = vsel %vm213, %v2299, 0.0
  %2302 = vst [vmem:[%s52] sm:$0xff] %v2301
  %2303 = vst [vmem:[#allocation2] sm:$0xff] %v2163
  %2305 = vrot.lane.b32.xlu0 %v2152, 96
  %v2306 = vpop.permute.xlu0 %2305
  %2308 = vst.msk [vmem:[#allocation3] sm:$0xff] %vm213, %v2306
  %2309 = vst [vmem:[#allocation4] sm:$0xff] %v2301
  %2311 = vrot.lane.b32.xlu0 %v2290, 96
  %v2312 = vpop.permute.xlu0 %2311
  %2314 = vst.msk [vmem:[#allocation5] sm:$0xff] %vm213, %v2312
  %s2315 = ssub.s32 0, 0
  %s2316 = smul.u32 8, %s2315
  %p2317 = scmp.lt.s32.totalorder %s2316, 7
  %s2318 = scalar_select %p2317, %s2316, 7
  %s2319 = smul.addr %s2318, 8
  %s2320 = scalar_lea.vmem %s5, %s2319
  // Predicated region
  $region22: #{rnn_encoder_forward.2} parent=0 // pred_check
    _
  $region23: #{rnn_encoder_forward.2} parent=0 // pred_check_branch
    %2322 = sbr.rel (0) target = $region25
  $region24: #{rnn_encoder_forward.2} parent=0 // pred_region
    _
  $region25: #{rnn_encoder_forward.2} parent=0 // pred_fallthru
    _
  // Predicated region
  $region26: #{rnn_encoder_forward.2} parent=0 // pred_check
    _
  $region27: #{rnn_encoder_forward.2} parent=0 // pred_check_branch
    %2324 = sbr.rel (0) target = $region29
  $region28: #{rnn_encoder_forward.2} parent=0 // pred_region
    %s2325 = ssub.s32 0, 0
    %s2326 = smul.u32 8, %s2325
  $region29: #{rnn_encoder_forward.2} parent=0 // pred_fallthru
    _
  // Predicated region
  $region30: #{rnn_encoder_forward.2} parent=0 // pred_check
    _
  $region31: #{rnn_encoder_forward.2} parent=0 // pred_check_branch
    %2328 = sbr.rel (0) target = $region33
  $region32: #{rnn_encoder_forward.2} parent=0 // pred_region
    _
  $region33: #{rnn_encoder_forward.2} parent=0 // pred_fallthru
    _
  // Predicated region
  $region34: #{rnn_encoder_forward.2} parent=0 // pred_check
    _
  $region35: #{rnn_encoder_forward.2} parent=0 // pred_check_branch
    %2330 = sbr.rel (0) target = $region37
  $region36: #{rnn_encoder_forward.2} parent=0 // pred_region
    %s2331 = ssub.s32 0, 0
    %s2332 = smul.u32 8, %s2331
    %p2333 = scmp.lt.s32.totalorder %s2332, 7
    %s2334 = scalar_select %p2333, %s2332, 7
    %s2335 = smul.addr %s2334, 8
    %s2336 = scalar_lea.vmem %s5, %s2335
  $region37: #{rnn_encoder_forward.2} parent=0 // pred_fallthru
    _

</llo_original>
